<compile_context>
chip_gen: v7x
topology: tpu7x:2x2x1
jax: 0.10.0
libtpu: 0.0.40
codegen_flags: <defaults>
</compile_context>

<pallas_src>
import math
import functools

import jax
import jax.numpy as jnp
from jax.experimental import pallas as pl
from jax.experimental.pallas import tpu as pltpu

NEG_INF = -1.0e9


def _round_up(x, m):
    return ((x + m - 1) // m) * m


def _phys_vmem_bytes():
    try:
        info = pltpu.get_tpu_info()
        return int(getattr(info, "vmem_capacity_bytes", 64 * 1024 * 1024))
    except Exception:
        return 64 * 1024 * 1024          # conservative fallback (v7x per-TC VMEM)


_PHYS_VMEM = _phys_vmem_bytes()
_VMEM_CAP = int(0.8 * _PHYS_VMEM)        # leave headroom for internal scratch


def _vmem_limit(nbytes):
    want = max(16 * 1024 * 1024, 3 * int(nbytes))
    return int(min(_VMEM_CAP, want))


def _pick_tl(L, Bp, D):
    # L-chunk for kernel 1: gx chunk (f32) + all_memory chunk (bf16), double buffered.
    per_step = 3 * Bp * D * 4 + Bp * D * 2
    tl = int(max(1, (_VMEM_CAP // 6) // max(1, per_step)))
    tl = min(L, tl)
    while L % tl != 0:
        tl -= 1
    return max(1, tl)


def _pick_tb(Bp, L, D):
    # batch tile for kernel 2 (am + 3 projections + temps, double buffered).
    per_row = 48 * L * D + 128 * D + 32 * L + 64
    tb = int((_VMEM_CAP // 2) // max(1, per_row))
    tb = max(8, (tb // 8) * 8)
    tb = min(tb, Bp)
    while Bp % tb != 0:
        tb -= 8
    return max(8, tb)


# --------------------------- kernel 1: GRU recurrence ---------------------------
def gru_kernel(gx_ref, whh_ref, bhn_ref, am_ref, hlast_ref, h_carry):
    # gx_ref : [TL, 3, B, D] f32  x@[W_ir|W_iz|W_in]^T + b_ih (+ b_hr/b_hz folded)
    # whh_ref: [3, D, D]    bf16  gate-major hidden weights (gh_g = h @ whh[g])
    # bhn_ref: [1, D]       f32   b_hn (must stay inside the r* term)
    # am_ref : [TL, B, D]   bf16  all_memory chunk (bf16 storage halves HBM traffic)
    # hlast_ref: [B, D]     f32   final hidden state (resident output block)
    # h_carry: [B, D]       f32   VMEM scratch carrying h across L-chunks
    @pl.when(pl.program_id(0) == 0)
    def _():
        h_carry[...] = jnp.zeros_like(h_carry)

    TL = gx_ref.shape[0]
    whh_r = whh_ref[0]
    whh_z = whh_ref[1]
    whh_n = whh_ref[2]
    bhn = bhn_ref[...]

    def step(t, h_prev):                        # h carried in vregs inside the chunk
        h_b = h_prev.astype(jnp.bfloat16)       # bf16 MXU pass, f32 accumulate
        gr = jnp.dot(h_b, whh_r, preferred_element_type=jnp.float32)
        gz = jnp.dot(h_b, whh_z, preferred_element_type=jnp.float32)
        gn = jnp.dot(h_b, whh_n, preferred_element_type=jnp.float32) + bhn
        gxt = gx_ref[t]                         # [3, B, D] (leading-axis view)
        # sigmoid(x) = 0.5*tanh(0.5*x) + 0.5  -> one EUP push per gate instead of two
        r = 0.5 * jnp.tanh(0.5 * (gxt[0] + gr)) + 0.5
        z = 0.5 * jnp.tanh(0.5 * (gxt[1] + gz)) + 0.5
        n = jnp.tanh(gxt[2] + r * gn)
        h_new = (1.0 - z) * n + z * h_prev
        am_ref[t] = h_new.astype(am_ref.dtype)  # all_memory[t] (bf16)
        return h_new

    if TL <= 16:
        unroll = True
    elif TL % 4 == 0:
        unroll = 4
    elif TL % 2 == 0:
        unroll = 2
    else:
        unroll = 1
    h_last = jax.lax.fori_loop(0, TL, step, h_carry[...], unroll=unroll)
    h_carry[...] = h_last
    hlast_ref[...] = h_last


# ----------------------- kernel 2: attentive decoder heads ----------------------
def attention_kernel(am_ref, mask_ref, proj_ref, last_ref, v_ref, wcre_ref,
                     re_out_ref, alphar_out_ref, ctxe_out_ref):
    # am_ref   : [L, TB, D]    bf16  all_memory (batch tile)
    # mask_ref : [TB, L]       f32   1.0 = valid
    # proj_ref : [3, L, TB, D] f32   (Ure|Ur|Ue)(all_memory)  -- heads on axis 0
    # last_ref : [3, TB, D]    f32   (Wre|Wr|We)(last_memory)
    # v_ref    : [3, 1, D]     f32   (Vre|Vr|Ve) score vectors (Linear biases cancel)
    # wcre_ref : [D, 2]        f32   Wcre^T
    f32 = jnp.float32
    am = am_ref[...].astype(f32)
    mask = mask_ref[...]

    def scores_bl(g):
        t = jnp.tanh(proj_ref[g] + last_ref[g][None, :, :])       # [L, TB, D]
        s_lb = jnp.sum(t * v_ref[g], axis=-1)                     # [L, TB]
        return jnp.transpose(s_lb)                                 # [TB, L] lane-dense

    def softmax_lanes(s_bl, masked):
        if masked:
            s_bl = jnp.where(mask > 0.5, s_bl, NEG_INF)            # masked_fill(~mask)
        m = jnp.max(s_bl, axis=-1, keepdims=True)
        e = jnp.exp(s_bl - m)
        return e * pl.reciprocal(jnp.sum(e, axis=-1, keepdims=True), approx=True)

    def context(alpha_bl):
        a_lb = jnp.transpose(alpha_bl)                             # [L, TB]
        return jnp.sum(a_lb[:, :, None] * am, axis=0)              # [TB, D]

    # --- RepeatExploreMechanism (reference applies no mask here) ---
    a_re = softmax_lanes(scores_bl(0), masked=False)
    ctx_re = context(a_re)
    lg2 = jnp.dot(ctx_re, wcre_ref[...], preferred_element_type=f32)   # [TB, 2]
    m2 = jnp.max(lg2, axis=-1, keepdims=True)
    e2 = jnp.exp(lg2 - m2)
    re_out_ref[...] = e2 / jnp.sum(e2, axis=-1, keepdims=True)     # exact divide (tiny)

    # --- RepeatRecommendationDecoder: masked softmax over the sequence ---
    alphar_out_ref[...] = softmax_lanes(scores_bl(1), masked=True)

    # --- ExploreRecommendationDecoder: masked softmax + context vector ---
    a_e = softmax_lanes(scores_bl(2), masked=True)
    ctxe_out_ref[...] = context(a_e)


# ------------------- kernel 3: item-dimension (N-tiled) decoders -----------------
def item_decoder_kernel(item_ref, alpha_ref, feat_ref, mexp_ref, rr_ref, elog_ref):
    # item_ref : [B, L]    int32  session items (0 = pad)
    # alpha_ref: [B, L]    f32    repeat-decoder attention weights
    # feat_ref : [B, 2D]   bf16   concat(ctx_e, h_last)
    # mexp_ref : [2D, TN]  bf16   matrix_for_explore^T tile
    B, L = alpha_ref.shape
    TN = mexp_ref.shape[1]
    base = pl.program_id(0) * TN
    col = jax.lax.broadcasted_iota(jnp.int32, (B, TN), 1) + base      # tile-local ids

    # one fused [B,2D]x[2D,TN] MXU pass (bf16 operands, f32 accumulate)
    logits = jnp.dot(feat_ref[...], mexp_ref[...], preferred_element_type=jnp.float32)

    item = item_ref[...]
    alpha = alpha_ref[...]
    rr = jnp.zeros((B, TN), jnp.float32)
    seen = jnp.zeros((B, TN), jnp.bool_)
    for t in range(L):                       # static; only [B,TN] accumulators stay live
        eq = item[:, t:t + 1] == col                                  # [B, TN]
        rr = rr + jnp.where(eq, alpha[:, t:t + 1], 0.0)               # scatter_add(alpha)
        seen = jnp.logical_or(seen, eq)
    rr_ref[...] = rr
    # hard mask at every item_seq occurrence (incl. pad item 0); identical to torch's
    # additive -1e9 scatter_add after the downstream softmax.
    elog_ref[...] = jnp.where(seen, NEG_INF, logits)


# --------------------------------- parameters ------------------------------------
def init_params(key, num_item, hidden):
    """Mirrors RepeatNet.reset_parameters: uniform(-1/sqrt(D), 1/sqrt(D)) everywhere,
    zeros only for parameters whose torch name ends with 'bias' (Linear biases)."""
    D = hidden
    stdv = 1.0 / math.sqrt(D)
    ks = jax.random.split(key, 16)
    u = lambda k, shape: jax.random.uniform(k, shape, jnp.float32, minval=-stdv, maxval=stdv)
    p = {}
    p["emb"] = u(ks[0], (num_item, D))
    p["w_ih"] = u(ks[1], (3 * D, D))
    p["w_hh"] = u(ks[2], (3 * D, D))
    p["b_ih"] = u(ks[3], (3 * D,))
    p["b_hh"] = u(ks[4], (3 * D,))
    p["Ure"] = u(ks[5], (D, D))
    p["Wre"] = u(ks[6], (D, D))
    p["Vre"] = u(ks[7], (1, D))
    p["Wcre"] = u(ks[8], (2, D))
    p["Ur"] = u(ks[9], (D, D))
    p["Wr"] = u(ks[10], (D, D))
    p["Vr_w"] = u(ks[11], (1, D))
    p["Vr_b"] = jnp.zeros((1, 1), jnp.float32)     # cancels in softmax
    p["Ue"] = u(ks[12], (D, D))
    p["Ue_b"] = jnp.zeros((1, D), jnp.float32)
    p["We"] = u(ks[13], (D, D))
    p["We_b"] = jnp.zeros((1, D), jnp.float32)
    p["Ve_w"] = u(ks[14], (1, D))
    p["Ve_b"] = jnp.zeros((1, 1), jnp.float32)     # cancels in softmax
    p["Mexp"] = u(ks[15], (num_item, 2 * D))
    return p


# ----------------------------------- wrapper -------------------------------------
@functools.partial(jax.jit, static_argnames=("tile_n",))
def repeatnet_forward(params, item_seq, mask, *, tile_n=2048):
    """item_seq: [B, L] int32, mask: [B, L] bool (True = valid).
    Returns (repeat_explore [B,2], repeat_rec [B,N], explore_rec [B,N])."""
    f32, bf16 = jnp.float32, jnp.bfloat16
    B, L = item_seq.shape
    D = params["Ure"].shape[0]
    N = params["emb"].shape[0]

    # pad batch to a multiple of 8 (sublane density); padded rows sliced off at the end
    Bp = max(8, _round_up(B, 8))
    pad_b = Bp - B
    item_p = jnp.pad(item_seq.astype(jnp.int32), ((0, pad_b), (0, 0)))
    mask_p = jnp.pad(mask.astype(f32), ((0, pad_b), (0, 0)))

    # --- stage 0: embedding + hoisted GRU input-gate projection (gate-major layout)
    x_lb = jnp.transpose(params["emb"][item_p], (1, 0, 2))            # [L, Bp, D]
    w_ih_g = params["w_ih"].reshape(3, D, D)                          # [gate, out, in]
    gx = jnp.einsum("lbd,gkd->lgbk", x_lb.astype(bf16), w_ih_g.astype(bf16),
                    preferred_element_type=f32)                       # [L, 3, Bp, D]
    b_ih_g = params["b_ih"].reshape(3, D)
    b_hh_g = params["b_hh"].reshape(3, D)
    gate_bias = b_ih_g + jnp.concatenate(                             # fold b_hr, b_hz
        [b_hh_g[0:2], jnp.zeros((1, D), f32)], axis=0)
    gx = gx + gate_bias.reshape(1, 3, 1, D)
    b_hn = b_hh_g[2:3]                                                # [1, D]
    whh = jnp.transpose(params["w_hh"].reshape(3, D, D), (0, 2, 1)).astype(bf16)

    # --- kernel 1: sequential GRU, chunked over L (fits 64 MiB VMEM, overlaps DMA)
    TL = _pick_tl(L, Bp, D)
    k1_bytes = (2 * TL * 3 * Bp * D * 4 + 2 * TL * Bp * D * 2
                + 3 * D * D * 2 + 3 * Bp * D * 4)
    all_mem, h_last = pl.pallas_call(
        gru_kernel,
        grid=(L // TL,),
        in_specs=[
            pl.BlockSpec((TL, 3, Bp, D), lambda c: (c, 0, 0, 0)),
            pl.BlockSpec((3, D, D), lambda c: (0, 0, 0)),
            pl.BlockSpec((1, D), lambda c: (0, 0)),
        ],
        out_specs=(
            pl.BlockSpec((TL, Bp, D), lambda c: (c, 0, 0)),
            pl.BlockSpec((Bp, D), lambda c: (0, 0)),
        ),
        out_shape=(jax.ShapeDtypeStruct((L, Bp, D), bf16),   # all_memory (bf16 storage)
                   jax.ShapeDtypeStruct((Bp, D), f32)),
        scratch_shapes=[pltpu.VMEM((Bp, D), f32)],
        compiler_params=pltpu.CompilerParams(
            dimension_semantics=("arbitrary",),
            vmem_limit_bytes=_vmem_limit(k1_bytes)),
    )(gx, whh, b_hn)

    # --- stage 1: hoisted decoder projections, kept head-major (no wrapper slicing)
    u_cat = jnp.stack([params["Ure"].T, params["Ur"].T, params["Ue"].T]).astype(bf16)
    u_bias = jnp.stack([jnp.zeros((D,), f32), jnp.zeros((D,), f32),
                        params["Ue_b"].reshape(D)])
    proj = (jnp.einsum("lbd,gde->glbe", all_mem, u_cat, preferred_element_type=f32)
            + u_bias.reshape(3, 1, 1, D))                             # [3, L, Bp, D]

    w_cat = jnp.stack([params["Wre"].T, params["Wr"].T, params["We"].T]).astype(bf16)
    w_bias = jnp.stack([jnp.zeros((D,), f32), jnp.zeros((D,), f32),
                        params["We_b"].reshape(D)])
    lastp = (jnp.einsum("bd,gde->gbe", h_last.astype(bf16), w_cat,
                        preferred_element_type=f32)
             + w_bias.reshape(3, 1, D))                               # [3, Bp, D]

    v_cat = jnp.stack([params["Vre"], params["Vr_w"], params["Ve_w"]])  # [3, 1, D]
    wcre_t = jnp.transpose(params["Wcre"])                            # [D, 2]

    # --- kernel 2: attention heads, batch-tiled ("parallel" -> megacore on v7x)
    TB = _pick_tb(Bp, L, D)
    k2_bytes = TB * (40 * L * D + 64 * D + 32 * L) + 3 * D * D
    repeat_explore, alpha_r_bl, ctx_e = pl.pallas_call(
        attention_kernel,
        grid=(Bp // TB,),
        in_specs=[
            pl.BlockSpec((L, TB, D), lambda i: (0, i, 0)),
            pl.BlockSpec((TB, L), lambda i: (i, 0)),
            pl.BlockSpec((3, L, TB, D), lambda i: (0, 0, i, 0)),
            pl.BlockSpec((3, TB, D), lambda i: (0, i, 0)),
            pl.BlockSpec((3, 1, D), lambda i: (0, 0, 0)),
            pl.BlockSpec((D, 2), lambda i: (0, 0)),
        ],
        out_specs=(
            pl.BlockSpec((TB, 2), lambda i: (i, 0)),
            pl.BlockSpec((TB, L), lambda i: (i, 0)),
            pl.BlockSpec((TB, D), lambda i: (i, 0)),
        ),
        out_shape=(jax.ShapeDtypeStruct((Bp, 2), f32),
                   jax.ShapeDtypeStruct((Bp, L), f32),
                   jax.ShapeDtypeStruct((Bp, D), f32)),
        compiler_params=pltpu.CompilerParams(
            dimension_semantics=("parallel",),
            vmem_limit_bytes=_vmem_limit(k2_bytes)),
    )(all_mem, mask_p, proj, lastp, v_cat, wcre_t)

    # --- kernel 3: item-dimension decoders, streamed over N in lane-dense tiles
    TN = _round_up(min(int(tile_n), _round_up(N, 128)), 128)
    Npad = _round_up(N, TN)
    feat = jnp.concatenate([ctx_e, h_last], axis=1).astype(bf16)      # [Bp, 2D]
    mexp_t = jnp.pad(jnp.transpose(params["Mexp"]),
                     ((0, 0), (0, Npad - N))).astype(bf16)            # [2D, Npad]
    k3_bytes = (2 * 2 * D * TN * 2 + 4 * Bp * TN * 4
                + Bp * (2 * L * 4 + 2 * D * 2) + 8 * Bp * TN)
    repeat_rec_p, explore_logits_p = pl.pallas_call(
        item_decoder_kernel,
        grid=(Npad // TN,),
        in_specs=[
            pl.BlockSpec((Bp, L), lambda j: (0, 0)),
            pl.BlockSpec((Bp, L), lambda j: (0, 0)),
            pl.BlockSpec((Bp, 2 * D), lambda j: (0, 0)),
            pl.BlockSpec((2 * D, TN), lambda j: (0, j)),
        ],
        out_specs=(pl.BlockSpec((Bp, TN), lambda j: (0, j)),
                   pl.BlockSpec((Bp, TN), lambda j: (0, j))),
        out_shape=(jax.ShapeDtypeStruct((Bp, Npad), f32),
                   jax.ShapeDtypeStruct((Bp, Npad), f32)),
        compiler_params=pltpu.CompilerParams(
            dimension_semantics=("parallel",),    # shard N tiles across TCs (v7x)
            vmem_limit_bytes=_vmem_limit(k3_bytes)),
    )(item_p, alpha_r_bl, feat, mexp_t)

    repeat_rec = repeat_rec_p[:B, :N]
    explore_logits = explore_logits_p[:B, :N]
    # final explore softmax over the full (unpadded) item axis in the wrapper
    # TODO(synk): could be fused into kernel 3 via per-tile max/sum partials for huge N.
    m = jnp.max(explore_logits, axis=-1, keepdims=True)
    e = jnp.exp(explore_logits - m)
    explore_rec = e / jnp.sum(e, axis=-1, keepdims=True)

    return repeat_explore[:B], repeat_rec, explore_rec


if __name__ == "__main__":
    B, L, D, N = 2, 8, 32, 128   # batch, max_len, hidden_dim, n_nodes (num_item)

    key = jax.random.PRNGKey(0)
    pkey, ikey = jax.random.split(key)
    params = init_params(pkey, num_item=N, hidden=D)

    lengths = jnp.array([5, 8], dtype=jnp.int32)
    pos = jnp.arange(L, dtype=jnp.int32)[None, :]
    mask = pos < lengths[:, None]                                    # [B, L] bool
    items = jax.random.randint(ikey, (B, L), 1, N, dtype=jnp.int32)
    item_seq = jnp.where(mask, items, 0)                             # pad with item 0

    re, rr, er = jax.block_until_ready(repeatnet_forward(params, item_seq, mask))

    assert re.shape == (B, 2) and rr.shape == (B, N) and er.shape == (B, N)
    for a in (re, rr, er):
        assert bool(jnp.all(jnp.isfinite(a)))
    assert bool(jnp.allclose(jnp.sum(re, axis=-1), 1.0, atol=3e-3))
    assert bool(jnp.allclose(jnp.sum(rr, axis=-1), 1.0, atol=3e-3))
    assert bool(jnp.allclose(jnp.sum(er, axis=-1), 1.0, atol=3e-3))

    # RepeatNet.compute_scores (glue)
    scores = rr * re[:, 0:1] + er * re[:, 1:2]
    jax.block_until_ready(scores)

    print("KERNEL_OK")
</pallas_src>

<mosaic_0001>
module attributes {stable_mosaic.version = 11 : i64} {
  func.func @gru_kernel(%arg0: i32, %arg1: memref<8x3x8x32xf32, #tpu.memory_space<vmem>>, %arg2: memref<3x32x32xbf16, #tpu.memory_space<vmem>>, %arg3: memref<1x32xf32, #tpu.memory_space<vmem>>, %arg4: memref<8x8x32xbf16, #tpu.memory_space<vmem>>, %arg5: memref<8x32xf32, #tpu.memory_space<vmem>>, %arg6: memref<8x32xf32, #tpu.memory_space<vmem>>) attributes {dimension_semantics = [#tpu.dimension_semantics<arbitrary>], iteration_bounds = array<i64: 1>, scalar_prefetch = 0 : i64, scratch_operands = 1 : i64, tpu.core_type = #tpu.core_type<tc>, window_params = [{transform_indices = @transform_0, window_bounds = array<i64: 8, 3, 8, 32>}, {pipeline_mode = #tpu.pipeline_mode<synchronous>, transform_indices = @transform_1, window_bounds = array<i64: 3, 32, 32>}, {pipeline_mode = #tpu.pipeline_mode<synchronous>, transform_indices = @transform_2, window_bounds = array<i64: 1, 32>}, {transform_indices = @transform_3, window_bounds = array<i64: 8, 8, 32>}, {pipeline_mode = #tpu.pipeline_mode<synchronous>, transform_indices = @transform_4, window_bounds = array<i64: 8, 32>}]} {
    %c0_i32 = arith.constant 0 : i32
    %0 = arith.cmpi eq, %arg0, %c0_i32 : i32
    %1 = arith.extui %0 : i1 to i32
    %c0_i32_0 = arith.constant 0 : i32
    %2 = arith.cmpi ne, %1, %c0_i32_0 : i32
    scf.if %2 {
      %cst_135 = arith.constant 0.000000e+00 : f32
      %365 = vector.broadcast %cst_135 : f32 to vector<8x32xf32>
      %c0_136 = arith.constant 0 : index
      %c0_137 = arith.constant 0 : index
      %366 = vector.load %arg6[%c0_136, %c0_137] : memref<8x32xf32, #tpu.memory_space<vmem>>, vector<8x32xf32>
      tpu.vector_store %arg6[%c0_136, %c0_137], %365 {strides = array<i32>} : memref<8x32xf32, #tpu.memory_space<vmem>>, vector<8x32xf32>,
    } else {
    }
    %c0 = arith.constant 0 : index
    %c0_1 = arith.constant 0 : index
    %c0_2 = arith.constant 0 : index
    %3 = vector.load %arg2[%c0, %c0_1, %c0_2] : memref<3x32x32xbf16, #tpu.memory_space<vmem>>, vector<1x32x32xbf16>
    %4 = vector.shape_cast %3 : vector<1x32x32xbf16> to vector<32x32xbf16>
    %c1 = arith.constant 1 : index
    %c0_3 = arith.constant 0 : index
    %c0_4 = arith.constant 0 : index
    %5 = vector.load %arg2[%c1, %c0_3, %c0_4] : memref<3x32x32xbf16, #tpu.memory_space<vmem>>, vector<1x32x32xbf16>
    %6 = vector.shape_cast %5 : vector<1x32x32xbf16> to vector<32x32xbf16>
    %c2 = arith.constant 2 : index
    %c0_5 = arith.constant 0 : index
    %c0_6 = arith.constant 0 : index
    %7 = vector.load %arg2[%c2, %c0_5, %c0_6] : memref<3x32x32xbf16, #tpu.memory_space<vmem>>, vector<1x32x32xbf16>
    %8 = vector.shape_cast %7 : vector<1x32x32xbf16> to vector<32x32xbf16>
    %c0_7 = arith.constant 0 : index
    %c0_8 = arith.constant 0 : index
    %9 = vector.load %arg3[%c0_7, %c0_8] : memref<1x32xf32, #tpu.memory_space<vmem>>, vector<1x32xf32>
    %c0_9 = arith.constant 0 : index
    %c0_10 = arith.constant 0 : index
    %10 = vector.load %arg6[%c0_9, %c0_10] : memref<8x32xf32, #tpu.memory_space<vmem>>, vector<8x32xf32>
    %c0_i32_11 = arith.constant 0 : i32
    %11 = arith.truncf %10 : vector<8x32xf32> to vector<8x32xbf16>
    %cst = arith.constant dense<0.000000e+00> : vector<8x32xf32>
    %12 = tpu.matmul %11, %4, %cst {dimension_numbers = #tpu.dot_dimension_numbers<[1], [0], [0], [1], [0, 0, 1, 1], [], []>} : vector<8x32xbf16>, vector<32x32xbf16>, vector<8x32xf32> -> vector<8x32xf32>
    %cst_12 = arith.constant dense<0.000000e+00> : vector<8x32xf32>
    %13 = tpu.matmul %11, %6, %cst_12 {dimension_numbers = #tpu.dot_dimension_numbers<[1], [0], [0], [1], [0, 0, 1, 1], [], []>} : vector<8x32xbf16>, vector<32x32xbf16>, vector<8x32xf32> -> vector<8x32xf32>
    %cst_13 = arith.constant dense<0.000000e+00> : vector<8x32xf32>
    %14 = tpu.matmul %11, %8, %cst_13 {dimension_numbers = #tpu.dot_dimension_numbers<[1], [0], [0], [1], [0, 0, 1, 1], [], []>} : vector<8x32xbf16>, vector<32x32xbf16>, vector<8x32xf32> -> vector<8x32xf32>
    %15 = vector.broadcast %9 : vector<1x32xf32> to vector<8x32xf32>
    %16 = arith.addf %14, %15 : vector<8x32xf32>
    %17 = arith.index_cast %c0_i32_11 : i32 to index
    %c0_14 = arith.constant 0 : index
    %c0_15 = arith.constant 0 : index
    %c0_16 = arith.constant 0 : index
    %18 = vector.load %arg1[%17, %c0_14, %c0_15, %c0_16] : memref<8x3x8x32xf32, #tpu.memory_space<vmem>>, vector<1x3x8x32xf32>
    %19 = vector.shape_cast %18 : vector<1x3x8x32xf32> to vector<3x8x32xf32>
    %20 = vector.extract_strided_slice %19 {offsets = [0, 0, 0], sizes = [1, 8, 32], strides = [1, 1, 1]} : vector<3x8x32xf32> to vector<1x8x32xf32>
    %21 = vector.shape_cast %20 : vector<1x8x32xf32> to vector<8x32xf32>
    %22 = arith.addf %21, %12 : vector<8x32xf32>
    %cst_17 = arith.constant 5.000000e-01 : f32
    %23 = vector.broadcast %cst_17 : f32 to vector<8x32xf32>
    %24 = arith.mulf %23, %22 : vector<8x32xf32>
    %25 = math.tanh %24 : vector<8x32xf32>
    %cst_18 = arith.constant 5.000000e-01 : f32
    %26 = vector.broadcast %cst_18 : f32 to vector<8x32xf32>
    %27 = arith.mulf %26, %25 : vector<8x32xf32>
    %cst_19 = arith.constant 5.000000e-01 : f32
    %28 = vector.broadcast %cst_19 : f32 to vector<8x32xf32>
    %29 = arith.addf %27, %28 : vector<8x32xf32>
    %30 = vector.extract_strided_slice %19 {offsets = [1, 0, 0], sizes = [1, 8, 32], strides = [1, 1, 1]} : vector<3x8x32xf32> to vector<1x8x32xf32>
    %31 = vector.shape_cast %30 : vector<1x8x32xf32> to vector<8x32xf32>
    %32 = arith.addf %31, %13 : vector<8x32xf32>
    %cst_20 = arith.constant 5.000000e-01 : f32
    %33 = vector.broadcast %cst_20 : f32 to vector<8x32xf32>
    %34 = arith.mulf %33, %32 : vector<8x32xf32>
    %35 = math.tanh %34 : vector<8x32xf32>
    %cst_21 = arith.constant 5.000000e-01 : f32
    %36 = vector.broadcast %cst_21 : f32 to vector<8x32xf32>
    %37 = arith.mulf %36, %35 : vector<8x32xf32>
    %cst_22 = arith.constant 5.000000e-01 : f32
    %38 = vector.broadcast %cst_22 : f32 to vector<8x32xf32>
    %39 = arith.addf %37, %38 : vector<8x32xf32>
    %40 = vector.extract_strided_slice %19 {offsets = [2, 0, 0], sizes = [1, 8, 32], strides = [1, 1, 1]} : vector<3x8x32xf32> to vector<1x8x32xf32>
    %41 = vector.shape_cast %40 : vector<1x8x32xf32> to vector<8x32xf32>
    %42 = arith.mulf %29, %16 : vector<8x32xf32>
    %43 = arith.addf %41, %42 : vector<8x32xf32>
    %44 = math.tanh %43 : vector<8x32xf32>
    %cst_23 = arith.constant 1.000000e+00 : f32
    %45 = vector.broadcast %cst_23 : f32 to vector<8x32xf32>
    %46 = arith.subf %45, %39 : vector<8x32xf32>
    %47 = arith.mulf %46, %44 : vector<8x32xf32>
    %48 = arith.mulf %39, %10 : vector<8x32xf32>
    %49 = arith.addf %47, %48 : vector<8x32xf32>
    %50 = arith.truncf %49 : vector<8x32xf32> to vector<8x32xbf16>
    %51 = arith.index_cast %c0_i32_11 : i32 to index
    %c0_24 = arith.constant 0 : index
    %c0_25 = arith.constant 0 : index
    %52 = vector.load %arg4[%51, %c0_24, %c0_25] : memref<8x8x32xbf16, #tpu.memory_space<vmem>>, vector<1x8x32xbf16>
    %53 = vector.shape_cast %52 : vector<1x8x32xbf16> to vector<8x32xbf16>
    %54 = vector.shape_cast %50 : vector<8x32xbf16> to vector<1x8x32xbf16>
    tpu.vector_store %arg4[%51, %c0_24, %c0_25], %54 {strides = array<i32>} : memref<8x8x32xbf16, #tpu.memory_space<vmem>>, vector<1x8x32xbf16>,
    %c1_i32 = arith.constant 1 : i32
    %55 = arith.truncf %49 : vector<8x32xf32> to vector<8x32xbf16>
    %cst_26 = arith.constant dense<0.000000e+00> : vector<8x32xf32>
    %56 = tpu.matmul %55, %4, %cst_26 {dimension_numbers = #tpu.dot_dimension_numbers<[1], [0], [0], [1], [0, 0, 1, 1], [], []>} : vector<8x32xbf16>, vector<32x32xbf16>, vector<8x32xf32> -> vector<8x32xf32>
    %cst_27 = arith.constant dense<0.000000e+00> : vector<8x32xf32>
    %57 = tpu.matmul %55, %6, %cst_27 {dimension_numbers = #tpu.dot_dimension_numbers<[1], [0], [0], [1], [0, 0, 1, 1], [], []>} : vector<8x32xbf16>, vector<32x32xbf16>, vector<8x32xf32> -> vector<8x32xf32>
    %cst_28 = arith.constant dense<0.000000e+00> : vector<8x32xf32>
    %58 = tpu.matmul %55, %8, %cst_28 {dimension_numbers = #tpu.dot_dimension_numbers<[1], [0], [0], [1], [0, 0, 1, 1], [], []>} : vector<8x32xbf16>, vector<32x32xbf16>, vector<8x32xf32> -> vector<8x32xf32>
    %59 = vector.broadcast %9 : vector<1x32xf32> to vector<8x32xf32>
    %60 = arith.addf %58, %59 : vector<8x32xf32>
    %61 = arith.index_cast %c1_i32 : i32 to index
    %c0_29 = arith.constant 0 : index
    %c0_30 = arith.constant 0 : index
    %c0_31 = arith.constant 0 : index
    %62 = vector.load %arg1[%61, %c0_29, %c0_30, %c0_31] : memref<8x3x8x32xf32, #tpu.memory_space<vmem>>, vector<1x3x8x32xf32>
    %63 = vector.shape_cast %62 : vector<1x3x8x32xf32> to vector<3x8x32xf32>
    %64 = vector.extract_strided_slice %63 {offsets = [0, 0, 0], sizes = [1, 8, 32], strides = [1, 1, 1]} : vector<3x8x32xf32> to vector<1x8x32xf32>
    %65 = vector.shape_cast %64 : vector<1x8x32xf32> to vector<8x32xf32>
    %66 = arith.addf %65, %56 : vector<8x32xf32>
    %cst_32 = arith.constant 5.000000e-01 : f32
    %67 = vector.broadcast %cst_32 : f32 to vector<8x32xf32>
    %68 = arith.mulf %67, %66 : vector<8x32xf32>
    %69 = math.tanh %68 : vector<8x32xf32>
    %cst_33 = arith.constant 5.000000e-01 : f32
    %70 = vector.broadcast %cst_33 : f32 to vector<8x32xf32>
    %71 = arith.mulf %70, %69 : vector<8x32xf32>
    %cst_34 = arith.constant 5.000000e-01 : f32
    %72 = vector.broadcast %cst_34 : f32 to vector<8x32xf32>
    %73 = arith.addf %71, %72 : vector<8x32xf32>
    %74 = vector.extract_strided_slice %63 {offsets = [1, 0, 0], sizes = [1, 8, 32], strides = [1, 1, 1]} : vector<3x8x32xf32> to vector<1x8x32xf32>
    %75 = vector.shape_cast %74 : vector<1x8x32xf32> to vector<8x32xf32>
    %76 = arith.addf %75, %57 : vector<8x32xf32>
    %cst_35 = arith.constant 5.000000e-01 : f32
    %77 = vector.broadcast %cst_35 : f32 to vector<8x32xf32>
    %78 = arith.mulf %77, %76 : vector<8x32xf32>
    %79 = math.tanh %78 : vector<8x32xf32>
    %cst_36 = arith.constant 5.000000e-01 : f32
    %80 = vector.broadcast %cst_36 : f32 to vector<8x32xf32>
    %81 = arith.mulf %80, %79 : vector<8x32xf32>
    %cst_37 = arith.constant 5.000000e-01 : f32
    %82 = vector.broadcast %cst_37 : f32 to vector<8x32xf32>
    %83 = arith.addf %81, %82 : vector<8x32xf32>
    %84 = vector.extract_strided_slice %63 {offsets = [2, 0, 0], sizes = [1, 8, 32], strides = [1, 1, 1]} : vector<3x8x32xf32> to vector<1x8x32xf32>
    %85 = vector.shape_cast %84 : vector<1x8x32xf32> to vector<8x32xf32>
    %86 = arith.mulf %73, %60 : vector<8x32xf32>
    %87 = arith.addf %85, %86 : vector<8x32xf32>
    %88 = math.tanh %87 : vector<8x32xf32>
    %cst_38 = arith.constant 1.000000e+00 : f32
    %89 = vector.broadcast %cst_38 : f32 to vector<8x32xf32>
    %90 = arith.subf %89, %83 : vector<8x32xf32>
    %91 = arith.mulf %90, %88 : vector<8x32xf32>
    %92 = arith.mulf %83, %49 : vector<8x32xf32>
    %93 = arith.addf %91, %92 : vector<8x32xf32>
    %94 = arith.truncf %93 : vector<8x32xf32> to vector<8x32xbf16>
    %95 = arith.index_cast %c1_i32 : i32 to index
    %c0_39 = arith.constant 0 : index
    %c0_40 = arith.constant 0 : index
    %96 = vector.load %arg4[%95, %c0_39, %c0_40] : memref<8x8x32xbf16, #tpu.memory_space<vmem>>, vector<1x8x32xbf16>
    %97 = vector.shape_cast %96 : vector<1x8x32xbf16> to vector<8x32xbf16>
    %98 = vector.shape_cast %94 : vector<8x32xbf16> to vector<1x8x32xbf16>
    tpu.vector_store %arg4[%95, %c0_39, %c0_40], %98 {strides = array<i32>} : memref<8x8x32xbf16, #tpu.memory_space<vmem>>, vector<1x8x32xbf16>,
    %c2_i32 = arith.constant 2 : i32
    %99 = arith.truncf %93 : vector<8x32xf32> to vector<8x32xbf16>
    %cst_41 = arith.constant dense<0.000000e+00> : vector<8x32xf32>
    %100 = tpu.matmul %99, %4, %cst_41 {dimension_numbers = #tpu.dot_dimension_numbers<[1], [0], [0], [1], [0, 0, 1, 1], [], []>} : vector<8x32xbf16>, vector<32x32xbf16>, vector<8x32xf32> -> vector<8x32xf32>
    %cst_42 = arith.constant dense<0.000000e+00> : vector<8x32xf32>
    %101 = tpu.matmul %99, %6, %cst_42 {dimension_numbers = #tpu.dot_dimension_numbers<[1], [0], [0], [1], [0, 0, 1, 1], [], []>} : vector<8x32xbf16>, vector<32x32xbf16>, vector<8x32xf32> -> vector<8x32xf32>
    %cst_43 = arith.constant dense<0.000000e+00> : vector<8x32xf32>
    %102 = tpu.matmul %99, %8, %cst_43 {dimension_numbers = #tpu.dot_dimension_numbers<[1], [0], [0], [1], [0, 0, 1, 1], [], []>} : vector<8x32xbf16>, vector<32x32xbf16>, vector<8x32xf32> -> vector<8x32xf32>
    %103 = vector.broadcast %9 : vector<1x32xf32> to vector<8x32xf32>
    %104 = arith.addf %102, %103 : vector<8x32xf32>
    %105 = arith.index_cast %c2_i32 : i32 to index
    %c0_44 = arith.constant 0 : index
    %c0_45 = arith.constant 0 : index
    %c0_46 = arith.constant 0 : index
    %106 = vector.load %arg1[%105, %c0_44, %c0_45, %c0_46] : memref<8x3x8x32xf32, #tpu.memory_space<vmem>>, vector<1x3x8x32xf32>
    %107 = vector.shape_cast %106 : vector<1x3x8x32xf32> to vector<3x8x32xf32>
    %108 = vector.extract_strided_slice %107 {offsets = [0, 0, 0], sizes = [1, 8, 32], strides = [1, 1, 1]} : vector<3x8x32xf32> to vector<1x8x32xf32>
    %109 = vector.shape_cast %108 : vector<1x8x32xf32> to vector<8x32xf32>
    %110 = arith.addf %109, %100 : vector<8x32xf32>
    %cst_47 = arith.constant 5.000000e-01 : f32
    %111 = vector.broadcast %cst_47 : f32 to vector<8x32xf32>
    %112 = arith.mulf %111, %110 : vector<8x32xf32>
    %113 = math.tanh %112 : vector<8x32xf32>
    %cst_48 = arith.constant 5.000000e-01 : f32
    %114 = vector.broadcast %cst_48 : f32 to vector<8x32xf32>
    %115 = arith.mulf %114, %113 : vector<8x32xf32>
    %cst_49 = arith.constant 5.000000e-01 : f32
    %116 = vector.broadcast %cst_49 : f32 to vector<8x32xf32>
    %117 = arith.addf %115, %116 : vector<8x32xf32>
    %118 = vector.extract_strided_slice %107 {offsets = [1, 0, 0], sizes = [1, 8, 32], strides = [1, 1, 1]} : vector<3x8x32xf32> to vector<1x8x32xf32>
    %119 = vector.shape_cast %118 : vector<1x8x32xf32> to vector<8x32xf32>
    %120 = arith.addf %119, %101 : vector<8x32xf32>
    %cst_50 = arith.constant 5.000000e-01 : f32
    %121 = vector.broadcast %cst_50 : f32 to vector<8x32xf32>
    %122 = arith.mulf %121, %120 : vector<8x32xf32>
    %123 = math.tanh %122 : vector<8x32xf32>
    %cst_51 = arith.constant 5.000000e-01 : f32
    %124 = vector.broadcast %cst_51 : f32 to vector<8x32xf32>
    %125 = arith.mulf %124, %123 : vector<8x32xf32>
    %cst_52 = arith.constant 5.000000e-01 : f32
    %126 = vector.broadcast %cst_52 : f32 to vector<8x32xf32>
    %127 = arith.addf %125, %126 : vector<8x32xf32>
    %128 = vector.extract_strided_slice %107 {offsets = [2, 0, 0], sizes = [1, 8, 32], strides = [1, 1, 1]} : vector<3x8x32xf32> to vector<1x8x32xf32>
    %129 = vector.shape_cast %128 : vector<1x8x32xf32> to vector<8x32xf32>
    %130 = arith.mulf %117, %104 : vector<8x32xf32>
    %131 = arith.addf %129, %130 : vector<8x32xf32>
    %132 = math.tanh %131 : vector<8x32xf32>
    %cst_53 = arith.constant 1.000000e+00 : f32
    %133 = vector.broadcast %cst_53 : f32 to vector<8x32xf32>
    %134 = arith.subf %133, %127 : vector<8x32xf32>
    %135 = arith.mulf %134, %132 : vector<8x32xf32>
    %136 = arith.mulf %127, %93 : vector<8x32xf32>
    %137 = arith.addf %135, %136 : vector<8x32xf32>
    %138 = arith.truncf %137 : vector<8x32xf32> to vector<8x32xbf16>
    %139 = arith.index_cast %c2_i32 : i32 to index
    %c0_54 = arith.constant 0 : index
    %c0_55 = arith.constant 0 : index
    %140 = vector.load %arg4[%139, %c0_54, %c0_55] : memref<8x8x32xbf16, #tpu.memory_space<vmem>>, vector<1x8x32xbf16>
    %141 = vector.shape_cast %140 : vector<1x8x32xbf16> to vector<8x32xbf16>
    %142 = vector.shape_cast %138 : vector<8x32xbf16> to vector<1x8x32xbf16>
    tpu.vector_store %arg4[%139, %c0_54, %c0_55], %142 {strides = array<i32>} : memref<8x8x32xbf16, #tpu.memory_space<vmem>>, vector<1x8x32xbf16>,
    %c3_i32 = arith.constant 3 : i32
    %143 = arith.truncf %137 : vector<8x32xf32> to vector<8x32xbf16>
    %cst_56 = arith.constant dense<0.000000e+00> : vector<8x32xf32>
    %144 = tpu.matmul %143, %4, %cst_56 {dimension_numbers = #tpu.dot_dimension_numbers<[1], [0], [0], [1], [0, 0, 1, 1], [], []>} : vector<8x32xbf16>, vector<32x32xbf16>, vector<8x32xf32> -> vector<8x32xf32>
    %cst_57 = arith.constant dense<0.000000e+00> : vector<8x32xf32>
    %145 = tpu.matmul %143, %6, %cst_57 {dimension_numbers = #tpu.dot_dimension_numbers<[1], [0], [0], [1], [0, 0, 1, 1], [], []>} : vector<8x32xbf16>, vector<32x32xbf16>, vector<8x32xf32> -> vector<8x32xf32>
    %cst_58 = arith.constant dense<0.000000e+00> : vector<8x32xf32>
    %146 = tpu.matmul %143, %8, %cst_58 {dimension_numbers = #tpu.dot_dimension_numbers<[1], [0], [0], [1], [0, 0, 1, 1], [], []>} : vector<8x32xbf16>, vector<32x32xbf16>, vector<8x32xf32> -> vector<8x32xf32>
    %147 = vector.broadcast %9 : vector<1x32xf32> to vector<8x32xf32>
    %148 = arith.addf %146, %147 : vector<8x32xf32>
    %149 = arith.index_cast %c3_i32 : i32 to index
    %c0_59 = arith.constant 0 : index
    %c0_60 = arith.constant 0 : index
    %c0_61 = arith.constant 0 : index
    %150 = vector.load %arg1[%149, %c0_59, %c0_60, %c0_61] : memref<8x3x8x32xf32, #tpu.memory_space<vmem>>, vector<1x3x8x32xf32>
    %151 = vector.shape_cast %150 : vector<1x3x8x32xf32> to vector<3x8x32xf32>
    %152 = vector.extract_strided_slice %151 {offsets = [0, 0, 0], sizes = [1, 8, 32], strides = [1, 1, 1]} : vector<3x8x32xf32> to vector<1x8x32xf32>
    %153 = vector.shape_cast %152 : vector<1x8x32xf32> to vector<8x32xf32>
    %154 = arith.addf %153, %144 : vector<8x32xf32>
    %cst_62 = arith.constant 5.000000e-01 : f32
    %155 = vector.broadcast %cst_62 : f32 to vector<8x32xf32>
    %156 = arith.mulf %155, %154 : vector<8x32xf32>
    %157 = math.tanh %156 : vector<8x32xf32>
    %cst_63 = arith.constant 5.000000e-01 : f32
    %158 = vector.broadcast %cst_63 : f32 to vector<8x32xf32>
    %159 = arith.mulf %158, %157 : vector<8x32xf32>
    %cst_64 = arith.constant 5.000000e-01 : f32
    %160 = vector.broadcast %cst_64 : f32 to vector<8x32xf32>
    %161 = arith.addf %159, %160 : vector<8x32xf32>
    %162 = vector.extract_strided_slice %151 {offsets = [1, 0, 0], sizes = [1, 8, 32], strides = [1, 1, 1]} : vector<3x8x32xf32> to vector<1x8x32xf32>
    %163 = vector.shape_cast %162 : vector<1x8x32xf32> to vector<8x32xf32>
    %164 = arith.addf %163, %145 : vector<8x32xf32>
    %cst_65 = arith.constant 5.000000e-01 : f32
    %165 = vector.broadcast %cst_65 : f32 to vector<8x32xf32>
    %166 = arith.mulf %165, %164 : vector<8x32xf32>
    %167 = math.tanh %166 : vector<8x32xf32>
    %cst_66 = arith.constant 5.000000e-01 : f32
    %168 = vector.broadcast %cst_66 : f32 to vector<8x32xf32>
    %169 = arith.mulf %168, %167 : vector<8x32xf32>
    %cst_67 = arith.constant 5.000000e-01 : f32
    %170 = vector.broadcast %cst_67 : f32 to vector<8x32xf32>
    %171 = arith.addf %169, %170 : vector<8x32xf32>
    %172 = vector.extract_strided_slice %151 {offsets = [2, 0, 0], sizes = [1, 8, 32], strides = [1, 1, 1]} : vector<3x8x32xf32> to vector<1x8x32xf32>
    %173 = vector.shape_cast %172 : vector<1x8x32xf32> to vector<8x32xf32>
    %174 = arith.mulf %161, %148 : vector<8x32xf32>
    %175 = arith.addf %173, %174 : vector<8x32xf32>
    %176 = math.tanh %175 : vector<8x32xf32>
    %cst_68 = arith.constant 1.000000e+00 : f32
    %177 = vector.broadcast %cst_68 : f32 to vector<8x32xf32>
    %178 = arith.subf %177, %171 : vector<8x32xf32>
    %179 = arith.mulf %178, %176 : vector<8x32xf32>
    %180 = arith.mulf %171, %137 : vector<8x32xf32>
    %181 = arith.addf %179, %180 : vector<8x32xf32>
    %182 = arith.truncf %181 : vector<8x32xf32> to vector<8x32xbf16>
    %183 = arith.index_cast %c3_i32 : i32 to index
    %c0_69 = arith.constant 0 : index
    %c0_70 = arith.constant 0 : index
    %184 = vector.load %arg4[%183, %c0_69, %c0_70] : memref<8x8x32xbf16, #tpu.memory_space<vmem>>, vector<1x8x32xbf16>
    %185 = vector.shape_cast %184 : vector<1x8x32xbf16> to vector<8x32xbf16>
    %186 = vector.shape_cast %182 : vector<8x32xbf16> to vector<1x8x32xbf16>
    tpu.vector_store %arg4[%183, %c0_69, %c0_70], %186 {strides = array<i32>} : memref<8x8x32xbf16, #tpu.memory_space<vmem>>, vector<1x8x32xbf16>,
    %c4_i32 = arith.constant 4 : i32
    %187 = arith.truncf %181 : vector<8x32xf32> to vector<8x32xbf16>
    %cst_71 = arith.constant dense<0.000000e+00> : vector<8x32xf32>
    %188 = tpu.matmul %187, %4, %cst_71 {dimension_numbers = #tpu.dot_dimension_numbers<[1], [0], [0], [1], [0, 0, 1, 1], [], []>} : vector<8x32xbf16>, vector<32x32xbf16>, vector<8x32xf32> -> vector<8x32xf32>
    %cst_72 = arith.constant dense<0.000000e+00> : vector<8x32xf32>
    %189 = tpu.matmul %187, %6, %cst_72 {dimension_numbers = #tpu.dot_dimension_numbers<[1], [0], [0], [1], [0, 0, 1, 1], [], []>} : vector<8x32xbf16>, vector<32x32xbf16>, vector<8x32xf32> -> vector<8x32xf32>
    %cst_73 = arith.constant dense<0.000000e+00> : vector<8x32xf32>
    %190 = tpu.matmul %187, %8, %cst_73 {dimension_numbers = #tpu.dot_dimension_numbers<[1], [0], [0], [1], [0, 0, 1, 1], [], []>} : vector<8x32xbf16>, vector<32x32xbf16>, vector<8x32xf32> -> vector<8x32xf32>
    %191 = vector.broadcast %9 : vector<1x32xf32> to vector<8x32xf32>
    %192 = arith.addf %190, %191 : vector<8x32xf32>
    %193 = arith.index_cast %c4_i32 : i32 to index
    %c0_74 = arith.constant 0 : index
    %c0_75 = arith.constant 0 : index
    %c0_76 = arith.constant 0 : index
    %194 = vector.load %arg1[%193, %c0_74, %c0_75, %c0_76] : memref<8x3x8x32xf32, #tpu.memory_space<vmem>>, vector<1x3x8x32xf32>
    %195 = vector.shape_cast %194 : vector<1x3x8x32xf32> to vector<3x8x32xf32>
    %196 = vector.extract_strided_slice %195 {offsets = [0, 0, 0], sizes = [1, 8, 32], strides = [1, 1, 1]} : vector<3x8x32xf32> to vector<1x8x32xf32>
    %197 = vector.shape_cast %196 : vector<1x8x32xf32> to vector<8x32xf32>
    %198 = arith.addf %197, %188 : vector<8x32xf32>
    %cst_77 = arith.constant 5.000000e-01 : f32
    %199 = vector.broadcast %cst_77 : f32 to vector<8x32xf32>
    %200 = arith.mulf %199, %198 : vector<8x32xf32>
    %201 = math.tanh %200 : vector<8x32xf32>
    %cst_78 = arith.constant 5.000000e-01 : f32
    %202 = vector.broadcast %cst_78 : f32 to vector<8x32xf32>
    %203 = arith.mulf %202, %201 : vector<8x32xf32>
    %cst_79 = arith.constant 5.000000e-01 : f32
    %204 = vector.broadcast %cst_79 : f32 to vector<8x32xf32>
    %205 = arith.addf %203, %204 : vector<8x32xf32>
    %206 = vector.extract_strided_slice %195 {offsets = [1, 0, 0], sizes = [1, 8, 32], strides = [1, 1, 1]} : vector<3x8x32xf32> to vector<1x8x32xf32>
    %207 = vector.shape_cast %206 : vector<1x8x32xf32> to vector<8x32xf32>
    %208 = arith.addf %207, %189 : vector<8x32xf32>
    %cst_80 = arith.constant 5.000000e-01 : f32
    %209 = vector.broadcast %cst_80 : f32 to vector<8x32xf32>
    %210 = arith.mulf %209, %208 : vector<8x32xf32>
    %211 = math.tanh %210 : vector<8x32xf32>
    %cst_81 = arith.constant 5.000000e-01 : f32
    %212 = vector.broadcast %cst_81 : f32 to vector<8x32xf32>
    %213 = arith.mulf %212, %211 : vector<8x32xf32>
    %cst_82 = arith.constant 5.000000e-01 : f32
    %214 = vector.broadcast %cst_82 : f32 to vector<8x32xf32>
    %215 = arith.addf %213, %214 : vector<8x32xf32>
    %216 = vector.extract_strided_slice %195 {offsets = [2, 0, 0], sizes = [1, 8, 32], strides = [1, 1, 1]} : vector<3x8x32xf32> to vector<1x8x32xf32>
    %217 = vector.shape_cast %216 : vector<1x8x32xf32> to vector<8x32xf32>
    %218 = arith.mulf %205, %192 : vector<8x32xf32>
    %219 = arith.addf %217, %218 : vector<8x32xf32>
    %220 = math.tanh %219 : vector<8x32xf32>
    %cst_83 = arith.constant 1.000000e+00 : f32
    %221 = vector.broadcast %cst_83 : f32 to vector<8x32xf32>
    %222 = arith.subf %221, %215 : vector<8x32xf32>
    %223 = arith.mulf %222, %220 : vector<8x32xf32>
    %224 = arith.mulf %215, %181 : vector<8x32xf32>
    %225 = arith.addf %223, %224 : vector<8x32xf32>
    %226 = arith.truncf %225 : vector<8x32xf32> to vector<8x32xbf16>
    %227 = arith.index_cast %c4_i32 : i32 to index
    %c0_84 = arith.constant 0 : index
    %c0_85 = arith.constant 0 : index
    %228 = vector.load %arg4[%227, %c0_84, %c0_85] : memref<8x8x32xbf16, #tpu.memory_space<vmem>>, vector<1x8x32xbf16>
    %229 = vector.shape_cast %228 : vector<1x8x32xbf16> to vector<8x32xbf16>
    %230 = vector.shape_cast %226 : vector<8x32xbf16> to vector<1x8x32xbf16>
    tpu.vector_store %arg4[%227, %c0_84, %c0_85], %230 {strides = array<i32>} : memref<8x8x32xbf16, #tpu.memory_space<vmem>>, vector<1x8x32xbf16>,
    %c5_i32 = arith.constant 5 : i32
    %231 = arith.truncf %225 : vector<8x32xf32> to vector<8x32xbf16>
    %cst_86 = arith.constant dense<0.000000e+00> : vector<8x32xf32>
    %232 = tpu.matmul %231, %4, %cst_86 {dimension_numbers = #tpu.dot_dimension_numbers<[1], [0], [0], [1], [0, 0, 1, 1], [], []>} : vector<8x32xbf16>, vector<32x32xbf16>, vector<8x32xf32> -> vector<8x32xf32>
    %cst_87 = arith.constant dense<0.000000e+00> : vector<8x32xf32>
    %233 = tpu.matmul %231, %6, %cst_87 {dimension_numbers = #tpu.dot_dimension_numbers<[1], [0], [0], [1], [0, 0, 1, 1], [], []>} : vector<8x32xbf16>, vector<32x32xbf16>, vector<8x32xf32> -> vector<8x32xf32>
    %cst_88 = arith.constant dense<0.000000e+00> : vector<8x32xf32>
    %234 = tpu.matmul %231, %8, %cst_88 {dimension_numbers = #tpu.dot_dimension_numbers<[1], [0], [0], [1], [0, 0, 1, 1], [], []>} : vector<8x32xbf16>, vector<32x32xbf16>, vector<8x32xf32> -> vector<8x32xf32>
    %235 = vector.broadcast %9 : vector<1x32xf32> to vector<8x32xf32>
    %236 = arith.addf %234, %235 : vector<8x32xf32>
    %237 = arith.index_cast %c5_i32 : i32 to index
    %c0_89 = arith.constant 0 : index
    %c0_90 = arith.constant 0 : index
    %c0_91 = arith.constant 0 : index
    %238 = vector.load %arg1[%237, %c0_89, %c0_90, %c0_91] : memref<8x3x8x32xf32, #tpu.memory_space<vmem>>, vector<1x3x8x32xf32>
    %239 = vector.shape_cast %238 : vector<1x3x8x32xf32> to vector<3x8x32xf32>
    %240 = vector.extract_strided_slice %239 {offsets = [0, 0, 0], sizes = [1, 8, 32], strides = [1, 1, 1]} : vector<3x8x32xf32> to vector<1x8x32xf32>
    %241 = vector.shape_cast %240 : vector<1x8x32xf32> to vector<8x32xf32>
    %242 = arith.addf %241, %232 : vector<8x32xf32>
    %cst_92 = arith.constant 5.000000e-01 : f32
    %243 = vector.broadcast %cst_92 : f32 to vector<8x32xf32>
    %244 = arith.mulf %243, %242 : vector<8x32xf32>
    %245 = math.tanh %244 : vector<8x32xf32>
    %cst_93 = arith.constant 5.000000e-01 : f32
    %246 = vector.broadcast %cst_93 : f32 to vector<8x32xf32>
    %247 = arith.mulf %246, %245 : vector<8x32xf32>
    %cst_94 = arith.constant 5.000000e-01 : f32
    %248 = vector.broadcast %cst_94 : f32 to vector<8x32xf32>
    %249 = arith.addf %247, %248 : vector<8x32xf32>
    %250 = vector.extract_strided_slice %239 {offsets = [1, 0, 0], sizes = [1, 8, 32], strides = [1, 1, 1]} : vector<3x8x32xf32> to vector<1x8x32xf32>
    %251 = vector.shape_cast %250 : vector<1x8x32xf32> to vector<8x32xf32>
    %252 = arith.addf %251, %233 : vector<8x32xf32>
    %cst_95 = arith.constant 5.000000e-01 : f32
    %253 = vector.broadcast %cst_95 : f32 to vector<8x32xf32>
    %254 = arith.mulf %253, %252 : vector<8x32xf32>
    %255 = math.tanh %254 : vector<8x32xf32>
    %cst_96 = arith.constant 5.000000e-01 : f32
    %256 = vector.broadcast %cst_96 : f32 to vector<8x32xf32>
    %257 = arith.mulf %256, %255 : vector<8x32xf32>
    %cst_97 = arith.constant 5.000000e-01 : f32
    %258 = vector.broadcast %cst_97 : f32 to vector<8x32xf32>
    %259 = arith.addf %257, %258 : vector<8x32xf32>
    %260 = vector.extract_strided_slice %239 {offsets = [2, 0, 0], sizes = [1, 8, 32], strides = [1, 1, 1]} : vector<3x8x32xf32> to vector<1x8x32xf32>
    %261 = vector.shape_cast %260 : vector<1x8x32xf32> to vector<8x32xf32>
    %262 = arith.mulf %249, %236 : vector<8x32xf32>
    %263 = arith.addf %261, %262 : vector<8x32xf32>
    %264 = math.tanh %263 : vector<8x32xf32>
    %cst_98 = arith.constant 1.000000e+00 : f32
    %265 = vector.broadcast %cst_98 : f32 to vector<8x32xf32>
    %266 = arith.subf %265, %259 : vector<8x32xf32>
    %267 = arith.mulf %266, %264 : vector<8x32xf32>
    %268 = arith.mulf %259, %225 : vector<8x32xf32>
    %269 = arith.addf %267, %268 : vector<8x32xf32>
    %270 = arith.truncf %269 : vector<8x32xf32> to vector<8x32xbf16>
    %271 = arith.index_cast %c5_i32 : i32 to index
    %c0_99 = arith.constant 0 : index
    %c0_100 = arith.constant 0 : index
    %272 = vector.load %arg4[%271, %c0_99, %c0_100] : memref<8x8x32xbf16, #tpu.memory_space<vmem>>, vector<1x8x32xbf16>
    %273 = vector.shape_cast %272 : vector<1x8x32xbf16> to vector<8x32xbf16>
    %274 = vector.shape_cast %270 : vector<8x32xbf16> to vector<1x8x32xbf16>
    tpu.vector_store %arg4[%271, %c0_99, %c0_100], %274 {strides = array<i32>} : memref<8x8x32xbf16, #tpu.memory_space<vmem>>, vector<1x8x32xbf16>,
    %c6_i32 = arith.constant 6 : i32
    %275 = arith.truncf %269 : vector<8x32xf32> to vector<8x32xbf16>
    %cst_101 = arith.constant dense<0.000000e+00> : vector<8x32xf32>
    %276 = tpu.matmul %275, %4, %cst_101 {dimension_numbers = #tpu.dot_dimension_numbers<[1], [0], [0], [1], [0, 0, 1, 1], [], []>} : vector<8x32xbf16>, vector<32x32xbf16>, vector<8x32xf32> -> vector<8x32xf32>
    %cst_102 = arith.constant dense<0.000000e+00> : vector<8x32xf32>
    %277 = tpu.matmul %275, %6, %cst_102 {dimension_numbers = #tpu.dot_dimension_numbers<[1], [0], [0], [1], [0, 0, 1, 1], [], []>} : vector<8x32xbf16>, vector<32x32xbf16>, vector<8x32xf32> -> vector<8x32xf32>
    %cst_103 = arith.constant dense<0.000000e+00> : vector<8x32xf32>
    %278 = tpu.matmul %275, %8, %cst_103 {dimension_numbers = #tpu.dot_dimension_numbers<[1], [0], [0], [1], [0, 0, 1, 1], [], []>} : vector<8x32xbf16>, vector<32x32xbf16>, vector<8x32xf32> -> vector<8x32xf32>
    %279 = vector.broadcast %9 : vector<1x32xf32> to vector<8x32xf32>
    %280 = arith.addf %278, %279 : vector<8x32xf32>
    %281 = arith.index_cast %c6_i32 : i32 to index
    %c0_104 = arith.constant 0 : index
    %c0_105 = arith.constant 0 : index
    %c0_106 = arith.constant 0 : index
    %282 = vector.load %arg1[%281, %c0_104, %c0_105, %c0_106] : memref<8x3x8x32xf32, #tpu.memory_space<vmem>>, vector<1x3x8x32xf32>
    %283 = vector.shape_cast %282 : vector<1x3x8x32xf32> to vector<3x8x32xf32>
    %284 = vector.extract_strided_slice %283 {offsets = [0, 0, 0], sizes = [1, 8, 32], strides = [1, 1, 1]} : vector<3x8x32xf32> to vector<1x8x32xf32>
    %285 = vector.shape_cast %284 : vector<1x8x32xf32> to vector<8x32xf32>
    %286 = arith.addf %285, %276 : vector<8x32xf32>
    %cst_107 = arith.constant 5.000000e-01 : f32
    %287 = vector.broadcast %cst_107 : f32 to vector<8x32xf32>
    %288 = arith.mulf %287, %286 : vector<8x32xf32>
    %289 = math.tanh %288 : vector<8x32xf32>
    %cst_108 = arith.constant 5.000000e-01 : f32
    %290 = vector.broadcast %cst_108 : f32 to vector<8x32xf32>
    %291 = arith.mulf %290, %289 : vector<8x32xf32>
    %cst_109 = arith.constant 5.000000e-01 : f32
    %292 = vector.broadcast %cst_109 : f32 to vector<8x32xf32>
    %293 = arith.addf %291, %292 : vector<8x32xf32>
    %294 = vector.extract_strided_slice %283 {offsets = [1, 0, 0], sizes = [1, 8, 32], strides = [1, 1, 1]} : vector<3x8x32xf32> to vector<1x8x32xf32>
    %295 = vector.shape_cast %294 : vector<1x8x32xf32> to vector<8x32xf32>
    %296 = arith.addf %295, %277 : vector<8x32xf32>
    %cst_110 = arith.constant 5.000000e-01 : f32
    %297 = vector.broadcast %cst_110 : f32 to vector<8x32xf32>
    %298 = arith.mulf %297, %296 : vector<8x32xf32>
    %299 = math.tanh %298 : vector<8x32xf32>
    %cst_111 = arith.constant 5.000000e-01 : f32
    %300 = vector.broadcast %cst_111 : f32 to vector<8x32xf32>
    %301 = arith.mulf %300, %299 : vector<8x32xf32>
    %cst_112 = arith.constant 5.000000e-01 : f32
    %302 = vector.broadcast %cst_112 : f32 to vector<8x32xf32>
    %303 = arith.addf %301, %302 : vector<8x32xf32>
    %304 = vector.extract_strided_slice %283 {offsets = [2, 0, 0], sizes = [1, 8, 32], strides = [1, 1, 1]} : vector<3x8x32xf32> to vector<1x8x32xf32>
    %305 = vector.shape_cast %304 : vector<1x8x32xf32> to vector<8x32xf32>
    %306 = arith.mulf %293, %280 : vector<8x32xf32>
    %307 = arith.addf %305, %306 : vector<8x32xf32>
    %308 = math.tanh %307 : vector<8x32xf32>
    %cst_113 = arith.constant 1.000000e+00 : f32
    %309 = vector.broadcast %cst_113 : f32 to vector<8x32xf32>
    %310 = arith.subf %309, %303 : vector<8x32xf32>
    %311 = arith.mulf %310, %308 : vector<8x32xf32>
    %312 = arith.mulf %303, %269 : vector<8x32xf32>
    %313 = arith.addf %311, %312 : vector<8x32xf32>
    %314 = arith.truncf %313 : vector<8x32xf32> to vector<8x32xbf16>
    %315 = arith.index_cast %c6_i32 : i32 to index
    %c0_114 = arith.constant 0 : index
    %c0_115 = arith.constant 0 : index
    %316 = vector.load %arg4[%315, %c0_114, %c0_115] : memref<8x8x32xbf16, #tpu.memory_space<vmem>>, vector<1x8x32xbf16>
    %317 = vector.shape_cast %316 : vector<1x8x32xbf16> to vector<8x32xbf16>
    %318 = vector.shape_cast %314 : vector<8x32xbf16> to vector<1x8x32xbf16>
    tpu.vector_store %arg4[%315, %c0_114, %c0_115], %318 {strides = array<i32>} : memref<8x8x32xbf16, #tpu.memory_space<vmem>>, vector<1x8x32xbf16>,
    %c7_i32 = arith.constant 7 : i32
    %319 = arith.truncf %313 : vector<8x32xf32> to vector<8x32xbf16>
    %cst_116 = arith.constant dense<0.000000e+00> : vector<8x32xf32>
    %320 = tpu.matmul %319, %4, %cst_116 {dimension_numbers = #tpu.dot_dimension_numbers<[1], [0], [0], [1], [0, 0, 1, 1], [], []>} : vector<8x32xbf16>, vector<32x32xbf16>, vector<8x32xf32> -> vector<8x32xf32>
    %cst_117 = arith.constant dense<0.000000e+00> : vector<8x32xf32>
    %321 = tpu.matmul %319, %6, %cst_117 {dimension_numbers = #tpu.dot_dimension_numbers<[1], [0], [0], [1], [0, 0, 1, 1], [], []>} : vector<8x32xbf16>, vector<32x32xbf16>, vector<8x32xf32> -> vector<8x32xf32>
    %cst_118 = arith.constant dense<0.000000e+00> : vector<8x32xf32>
    %322 = tpu.matmul %319, %8, %cst_118 {dimension_numbers = #tpu.dot_dimension_numbers<[1], [0], [0], [1], [0, 0, 1, 1], [], []>} : vector<8x32xbf16>, vector<32x32xbf16>, vector<8x32xf32> -> vector<8x32xf32>
    %323 = vector.broadcast %9 : vector<1x32xf32> to vector<8x32xf32>
    %324 = arith.addf %322, %323 : vector<8x32xf32>
    %325 = arith.index_cast %c7_i32 : i32 to index
    %c0_119 = arith.constant 0 : index
    %c0_120 = arith.constant 0 : index
    %c0_121 = arith.constant 0 : index
    %326 = vector.load %arg1[%325, %c0_119, %c0_120, %c0_121] : memref<8x3x8x32xf32, #tpu.memory_space<vmem>>, vector<1x3x8x32xf32>
    %327 = vector.shape_cast %326 : vector<1x3x8x32xf32> to vector<3x8x32xf32>
    %328 = vector.extract_strided_slice %327 {offsets = [0, 0, 0], sizes = [1, 8, 32], strides = [1, 1, 1]} : vector<3x8x32xf32> to vector<1x8x32xf32>
    %329 = vector.shape_cast %328 : vector<1x8x32xf32> to vector<8x32xf32>
    %330 = arith.addf %329, %320 : vector<8x32xf32>
    %cst_122 = arith.constant 5.000000e-01 : f32
    %331 = vector.broadcast %cst_122 : f32 to vector<8x32xf32>
    %332 = arith.mulf %331, %330 : vector<8x32xf32>
    %333 = math.tanh %332 : vector<8x32xf32>
    %cst_123 = arith.constant 5.000000e-01 : f32
    %334 = vector.broadcast %cst_123 : f32 to vector<8x32xf32>
    %335 = arith.mulf %334, %333 : vector<8x32xf32>
    %cst_124 = arith.constant 5.000000e-01 : f32
    %336 = vector.broadcast %cst_124 : f32 to vector<8x32xf32>
    %337 = arith.addf %335, %336 : vector<8x32xf32>
    %338 = vector.extract_strided_slice %327 {offsets = [1, 0, 0], sizes = [1, 8, 32], strides = [1, 1, 1]} : vector<3x8x32xf32> to vector<1x8x32xf32>
    %339 = vector.shape_cast %338 : vector<1x8x32xf32> to vector<8x32xf32>
    %340 = arith.addf %339, %321 : vector<8x32xf32>
    %cst_125 = arith.constant 5.000000e-01 : f32
    %341 = vector.broadcast %cst_125 : f32 to vector<8x32xf32>
    %342 = arith.mulf %341, %340 : vector<8x32xf32>
    %343 = math.tanh %342 : vector<8x32xf32>
    %cst_126 = arith.constant 5.000000e-01 : f32
    %344 = vector.broadcast %cst_126 : f32 to vector<8x32xf32>
    %345 = arith.mulf %344, %343 : vector<8x32xf32>
    %cst_127 = arith.constant 5.000000e-01 : f32
    %346 = vector.broadcast %cst_127 : f32 to vector<8x32xf32>
    %347 = arith.addf %345, %346 : vector<8x32xf32>
    %348 = vector.extract_strided_slice %327 {offsets = [2, 0, 0], sizes = [1, 8, 32], strides = [1, 1, 1]} : vector<3x8x32xf32> to vector<1x8x32xf32>
    %349 = vector.shape_cast %348 : vector<1x8x32xf32> to vector<8x32xf32>
    %350 = arith.mulf %337, %324 : vector<8x32xf32>
    %351 = arith.addf %349, %350 : vector<8x32xf32>
    %352 = math.tanh %351 : vector<8x32xf32>
    %cst_128 = arith.constant 1.000000e+00 : f32
    %353 = vector.broadcast %cst_128 : f32 to vector<8x32xf32>
    %354 = arith.subf %353, %347 : vector<8x32xf32>
    %355 = arith.mulf %354, %352 : vector<8x32xf32>
    %356 = arith.mulf %347, %313 : vector<8x32xf32>
    %357 = arith.addf %355, %356 : vector<8x32xf32>
    %358 = arith.truncf %357 : vector<8x32xf32> to vector<8x32xbf16>
    %359 = arith.index_cast %c7_i32 : i32 to index
    %c0_129 = arith.constant 0 : index
    %c0_130 = arith.constant 0 : index
    %360 = vector.load %arg4[%359, %c0_129, %c0_130] : memref<8x8x32xbf16, #tpu.memory_space<vmem>>, vector<1x8x32xbf16>
    %361 = vector.shape_cast %360 : vector<1x8x32xbf16> to vector<8x32xbf16>
    %362 = vector.shape_cast %358 : vector<8x32xbf16> to vector<1x8x32xbf16>
    tpu.vector_store %arg4[%359, %c0_129, %c0_130], %362 {strides = array<i32>} : memref<8x8x32xbf16, #tpu.memory_space<vmem>>, vector<1x8x32xbf16>,
    %c8_i32 = arith.constant 8 : i32
    %c0_131 = arith.constant 0 : index
    %c0_132 = arith.constant 0 : index
    %363 = vector.load %arg6[%c0_131, %c0_132] : memref<8x32xf32, #tpu.memory_space<vmem>>, vector<8x32xf32>
    tpu.vector_store %arg6[%c0_131, %c0_132], %357 {strides = array<i32>} : memref<8x32xf32, #tpu.memory_space<vmem>>, vector<8x32xf32>,
    %c0_133 = arith.constant 0 : index
    %c0_134 = arith.constant 0 : index
    %364 = vector.load %arg5[%c0_133, %c0_134] : memref<8x32xf32, #tpu.memory_space<vmem>>, vector<8x32xf32>
    tpu.vector_store %arg5[%c0_133, %c0_134], %357 {strides = array<i32>} : memref<8x32xf32, #tpu.memory_space<vmem>>, vector<8x32xf32>,
    return
  }
  func.func @transform_0(%arg0: i32) -> (i32, i32, i32, i32) {
    %c0_i32 = arith.constant 0 : i32
    %c0_i32_0 = arith.constant 0 : i32
    %c0_i32_1 = arith.constant 0 : i32
    %c0_i32_2 = arith.constant 0 : i32
    return %arg0, %c0_i32, %c0_i32_0, %c0_i32_1 : i32, i32, i32, i32
  }
  func.func @transform_1(%arg0: i32) -> (i32, i32, i32) {
    %c0_i32 = arith.constant 0 : i32
    %c0_i32_0 = arith.constant 0 : i32
    %c0_i32_1 = arith.constant 0 : i32
    %c0_i32_2 = arith.constant 0 : i32
    return %c0_i32, %c0_i32_0, %c0_i32_1 : i32, i32, i32
  }
  func.func @transform_2(%arg0: i32) -> (i32, i32) {
    %c0_i32 = arith.constant 0 : i32
    %c0_i32_0 = arith.constant 0 : i32
    %c0_i32_1 = arith.constant 0 : i32
    return %c0_i32, %c0_i32_0 : i32, i32
  }
  func.func @transform_3(%arg0: i32) -> (i32, i32, i32) {
    %c0_i32 = arith.constant 0 : i32
    %c0_i32_0 = arith.constant 0 : i32
    %c0_i32_1 = arith.constant 0 : i32
    return %arg0, %c0_i32, %c0_i32_0 : i32, i32, i32
  }
  func.func @transform_4(%arg0: i32) -> (i32, i32) {
    %c0_i32 = arith.constant 0 : i32
    %c0_i32_0 = arith.constant 0 : i32
    %c0_i32_1 = arith.constant 0 : i32
    return %c0_i32, %c0_i32_0 : i32, i32
  }
}

module attributes {stable_mosaic.version = 11 : i64} {
  func.func @item_decoder_kernel(%arg0: i32, %arg1: memref<8x8xi32, #tpu.memory_space<vmem>>, %arg2: memref<8x8xf32, #tpu.memory_space<vmem>>, %arg3: memref<8x64xbf16, #tpu.memory_space<vmem>>, %arg4: memref<64x128xbf16, #tpu.memory_space<vmem>>, %arg5: memref<8x128xf32, #tpu.memory_space<vmem>>, %arg6: memref<8x128xf32, #tpu.memory_space<vmem>>) attributes {dimension_semantics = [#tpu.dimension_semantics<parallel>], iteration_bounds = array<i64: 1>, scalar_prefetch = 0 : i64, scratch_operands = 0 : i64, tpu.core_type = #tpu.core_type<tc>, window_params = [{pipeline_mode = #tpu.pipeline_mode<synchronous>, transform_indices = @transform_0, window_bounds = array<i64: 8, 8>}, {pipeline_mode = #tpu.pipeline_mode<synchronous>, transform_indices = @transform_1, window_bounds = array<i64: 8, 8>}, {pipeline_mode = #tpu.pipeline_mode<synchronous>, transform_indices = @transform_2, window_bounds = array<i64: 8, 64>}, {transform_indices = @transform_3, window_bounds = array<i64: 64, 128>}, {transform_indices = @transform_4, window_bounds = array<i64: 8, 128>}, {transform_indices = @transform_5, window_bounds = array<i64: 8, 128>}]} {
    %c128_i32 = arith.constant 128 : i32
    %0 = arith.muli %arg0, %c128_i32 : i32
    %1 = tpu.iota {dimensions = array<i32: 1>} : vector<8x128xi32>
    %2 = vector.broadcast %0 : i32 to vector<8x128xi32>
    %3 = arith.addi %1, %2 : vector<8x128xi32>
    %c0 = arith.constant 0 : index
    %c0_0 = arith.constant 0 : index
    %4 = vector.load %arg3[%c0, %c0_0] : memref<8x64xbf16, #tpu.memory_space<vmem>>, vector<8x64xbf16>
    %c0_1 = arith.constant 0 : index
    %c0_2 = arith.constant 0 : index
    %5 = vector.load %arg4[%c0_1, %c0_2] : memref<64x128xbf16, #tpu.memory_space<vmem>>, vector<64x128xbf16>
    %cst = arith.constant dense<0.000000e+00> : vector<8x128xf32>
    %6 = tpu.matmul %4, %5, %cst {dimension_numbers = #tpu.dot_dimension_numbers<[1], [0], [0], [1], [0, 0, 1, 1], [], []>} : vector<8x64xbf16>, vector<64x128xbf16>, vector<8x128xf32> -> vector<8x128xf32>
    %c0_3 = arith.constant 0 : index
    %c0_4 = arith.constant 0 : index
    %7 = vector.load %arg1[%c0_3, %c0_4] : memref<8x8xi32, #tpu.memory_space<vmem>>, vector<8x8xi32>
    %c0_5 = arith.constant 0 : index
    %c0_6 = arith.constant 0 : index
    %8 = vector.load %arg2[%c0_5, %c0_6] : memref<8x8xf32, #tpu.memory_space<vmem>>, vector<8x8xf32>
    %cst_7 = arith.constant 0.000000e+00 : f32
    %9 = vector.broadcast %cst_7 : f32 to vector<8x128xf32>
    %false = arith.constant false
    %10 = vector.broadcast %false : i1 to vector<8x128xi1>
    %11 = vector.extract_strided_slice %7 {offsets = [0, 0], sizes = [8, 1], strides = [1, 1]} : vector<8x8xi32> to vector<8x1xi32>
    %12 = vector.broadcast %11 : vector<8x1xi32> to vector<8x128xi32>
    %13 = arith.cmpi eq, %12, %3 : vector<8x128xi32>
    %14 = vector.extract_strided_slice %8 {offsets = [0, 0], sizes = [8, 1], strides = [1, 1]} : vector<8x8xf32> to vector<8x1xf32>
    %cst_8 = arith.constant 0.000000e+00 : f32
    %15 = vector.shape_cast %14 : vector<8x1xf32> to vector<8x1xf32>
    %16 = vector.broadcast %15 : vector<8x1xf32> to vector<8x128xf32>
    %17 = vector.broadcast %cst_8 : f32 to vector<8x128xf32>
    %18 = arith.select %13, %16, %17 : vector<8x128xi1>, vector<8x128xf32>
    %19 = arith.addf %9, %18 : vector<8x128xf32>
    %20 = arith.ori %10, %13 : vector<8x128xi1>
    %21 = vector.extract_strided_slice %7 {offsets = [0, 1], sizes = [8, 1], strides = [1, 1]} : vector<8x8xi32> to vector<8x1xi32>
    %22 = vector.broadcast %21 : vector<8x1xi32> to vector<8x128xi32>
    %23 = arith.cmpi eq, %22, %3 : vector<8x128xi32>
    %24 = vector.extract_strided_slice %8 {offsets = [0, 1], sizes = [8, 1], strides = [1, 1]} : vector<8x8xf32> to vector<8x1xf32>
    %cst_9 = arith.constant 0.000000e+00 : f32
    %25 = vector.shape_cast %24 : vector<8x1xf32> to vector<8x1xf32>
    %26 = vector.broadcast %25 : vector<8x1xf32> to vector<8x128xf32>
    %27 = vector.broadcast %cst_9 : f32 to vector<8x128xf32>
    %28 = arith.select %23, %26, %27 : vector<8x128xi1>, vector<8x128xf32>
    %29 = arith.addf %19, %28 : vector<8x128xf32>
    %30 = arith.ori %20, %23 : vector<8x128xi1>
    %31 = vector.extract_strided_slice %7 {offsets = [0, 2], sizes = [8, 1], strides = [1, 1]} : vector<8x8xi32> to vector<8x1xi32>
    %32 = vector.broadcast %31 : vector<8x1xi32> to vector<8x128xi32>
    %33 = arith.cmpi eq, %32, %3 : vector<8x128xi32>
    %34 = vector.extract_strided_slice %8 {offsets = [0, 2], sizes = [8, 1], strides = [1, 1]} : vector<8x8xf32> to vector<8x1xf32>
    %cst_10 = arith.constant 0.000000e+00 : f32
    %35 = vector.shape_cast %34 : vector<8x1xf32> to vector<8x1xf32>
    %36 = vector.broadcast %35 : vector<8x1xf32> to vector<8x128xf32>
    %37 = vector.broadcast %cst_10 : f32 to vector<8x128xf32>
    %38 = arith.select %33, %36, %37 : vector<8x128xi1>, vector<8x128xf32>
    %39 = arith.addf %29, %38 : vector<8x128xf32>
    %40 = arith.ori %30, %33 : vector<8x128xi1>
    %41 = vector.extract_strided_slice %7 {offsets = [0, 3], sizes = [8, 1], strides = [1, 1]} : vector<8x8xi32> to vector<8x1xi32>
    %42 = vector.broadcast %41 : vector<8x1xi32> to vector<8x128xi32>
    %43 = arith.cmpi eq, %42, %3 : vector<8x128xi32>
    %44 = vector.extract_strided_slice %8 {offsets = [0, 3], sizes = [8, 1], strides = [1, 1]} : vector<8x8xf32> to vector<8x1xf32>
    %cst_11 = arith.constant 0.000000e+00 : f32
    %45 = vector.shape_cast %44 : vector<8x1xf32> to vector<8x1xf32>
    %46 = vector.broadcast %45 : vector<8x1xf32> to vector<8x128xf32>
    %47 = vector.broadcast %cst_11 : f32 to vector<8x128xf32>
    %48 = arith.select %43, %46, %47 : vector<8x128xi1>, vector<8x128xf32>
    %49 = arith.addf %39, %48 : vector<8x128xf32>
    %50 = arith.ori %40, %43 : vector<8x128xi1>
    %51 = vector.extract_strided_slice %7 {offsets = [0, 4], sizes = [8, 1], strides = [1, 1]} : vector<8x8xi32> to vector<8x1xi32>
    %52 = vector.broadcast %51 : vector<8x1xi32> to vector<8x128xi32>
    %53 = arith.cmpi eq, %52, %3 : vector<8x128xi32>
    %54 = vector.extract_strided_slice %8 {offsets = [0, 4], sizes = [8, 1], strides = [1, 1]} : vector<8x8xf32> to vector<8x1xf32>
    %cst_12 = arith.constant 0.000000e+00 : f32
    %55 = vector.shape_cast %54 : vector<8x1xf32> to vector<8x1xf32>
    %56 = vector.broadcast %55 : vector<8x1xf32> to vector<8x128xf32>
    %57 = vector.broadcast %cst_12 : f32 to vector<8x128xf32>
    %58 = arith.select %53, %56, %57 : vector<8x128xi1>, vector<8x128xf32>
    %59 = arith.addf %49, %58 : vector<8x128xf32>
    %60 = arith.ori %50, %53 : vector<8x128xi1>
    %61 = vector.extract_strided_slice %7 {offsets = [0, 5], sizes = [8, 1], strides = [1, 1]} : vector<8x8xi32> to vector<8x1xi32>
    %62 = vector.broadcast %61 : vector<8x1xi32> to vector<8x128xi32>
    %63 = arith.cmpi eq, %62, %3 : vector<8x128xi32>
    %64 = vector.extract_strided_slice %8 {offsets = [0, 5], sizes = [8, 1], strides = [1, 1]} : vector<8x8xf32> to vector<8x1xf32>
    %cst_13 = arith.constant 0.000000e+00 : f32
    %65 = vector.shape_cast %64 : vector<8x1xf32> to vector<8x1xf32>
    %66 = vector.broadcast %65 : vector<8x1xf32> to vector<8x128xf32>
    %67 = vector.broadcast %cst_13 : f32 to vector<8x128xf32>
    %68 = arith.select %63, %66, %67 : vector<8x128xi1>, vector<8x128xf32>
    %69 = arith.addf %59, %68 : vector<8x128xf32>
    %70 = arith.ori %60, %63 : vector<8x128xi1>
    %71 = vector.extract_strided_slice %7 {offsets = [0, 6], sizes = [8, 1], strides = [1, 1]} : vector<8x8xi32> to vector<8x1xi32>
    %72 = vector.broadcast %71 : vector<8x1xi32> to vector<8x128xi32>
    %73 = arith.cmpi eq, %72, %3 : vector<8x128xi32>
    %74 = vector.extract_strided_slice %8 {offsets = [0, 6], sizes = [8, 1], strides = [1, 1]} : vector<8x8xf32> to vector<8x1xf32>
    %cst_14 = arith.constant 0.000000e+00 : f32
    %75 = vector.shape_cast %74 : vector<8x1xf32> to vector<8x1xf32>
    %76 = vector.broadcast %75 : vector<8x1xf32> to vector<8x128xf32>
    %77 = vector.broadcast %cst_14 : f32 to vector<8x128xf32>
    %78 = arith.select %73, %76, %77 : vector<8x128xi1>, vector<8x128xf32>
    %79 = arith.addf %69, %78 : vector<8x128xf32>
    %80 = arith.ori %70, %73 : vector<8x128xi1>
    %81 = vector.extract_strided_slice %7 {offsets = [0, 7], sizes = [8, 1], strides = [1, 1]} : vector<8x8xi32> to vector<8x1xi32>
    %82 = vector.broadcast %81 : vector<8x1xi32> to vector<8x128xi32>
    %83 = arith.cmpi eq, %82, %3 : vector<8x128xi32>
    %84 = vector.extract_strided_slice %8 {offsets = [0, 7], sizes = [8, 1], strides = [1, 1]} : vector<8x8xf32> to vector<8x1xf32>
    %cst_15 = arith.constant 0.000000e+00 : f32
    %85 = vector.shape_cast %84 : vector<8x1xf32> to vector<8x1xf32>
    %86 = vector.broadcast %85 : vector<8x1xf32> to vector<8x128xf32>
    %87 = vector.broadcast %cst_15 : f32 to vector<8x128xf32>
    %88 = arith.select %83, %86, %87 : vector<8x128xi1>, vector<8x128xf32>
    %89 = arith.addf %79, %88 : vector<8x128xf32>
    %90 = arith.ori %80, %83 : vector<8x128xi1>
    %c0_16 = arith.constant 0 : index
    %c0_17 = arith.constant 0 : index
    %91 = vector.load %arg5[%c0_16, %c0_17] : memref<8x128xf32, #tpu.memory_space<vmem>>, vector<8x128xf32>
    tpu.vector_store %arg5[%c0_16, %c0_17], %89 {strides = array<i32>} : memref<8x128xf32, #tpu.memory_space<vmem>>, vector<8x128xf32>,
    %cst_18 = arith.constant -1.000000e+09 : f32
    %92 = vector.broadcast %cst_18 : f32 to vector<8x128xf32>
    %93 = arith.select %90, %92, %6 : vector<8x128xi1>, vector<8x128xf32>
    %c0_19 = arith.constant 0 : index
    %c0_20 = arith.constant 0 : index
    %94 = vector.load %arg6[%c0_19, %c0_20] : memref<8x128xf32, #tpu.memory_space<vmem>>, vector<8x128xf32>
    tpu.vector_store %arg6[%c0_19, %c0_20], %93 {strides = array<i32>} : memref<8x128xf32, #tpu.memory_space<vmem>>, vector<8x128xf32>,
    return
  }
  func.func @transform_0(%arg0: i32) -> (i32, i32) {
    %c0_i32 = arith.constant 0 : i32
    %c0_i32_0 = arith.constant 0 : i32
    %c0_i32_1 = arith.constant 0 : i32
    return %c0_i32, %c0_i32_0 : i32, i32
  }
  func.func @transform_1(%arg0: i32) -> (i32, i32) {
    %c0_i32 = arith.constant 0 : i32
    %c0_i32_0 = arith.constant 0 : i32
    %c0_i32_1 = arith.constant 0 : i32
    return %c0_i32, %c0_i32_0 : i32, i32
  }
  func.func @transform_2(%arg0: i32) -> (i32, i32) {
    %c0_i32 = arith.constant 0 : i32
    %c0_i32_0 = arith.constant 0 : i32
    %c0_i32_1 = arith.constant 0 : i32
    return %c0_i32, %c0_i32_0 : i32, i32
  }
  func.func @transform_3(%arg0: i32) -> (i32, i32) {
    %c0_i32 = arith.constant 0 : i32
    %c0_i32_0 = arith.constant 0 : i32
    return %c0_i32, %arg0 : i32, i32
  }
  func.func @transform_4(%arg0: i32) -> (i32, i32) {
    %c0_i32 = arith.constant 0 : i32
    %c0_i32_0 = arith.constant 0 : i32
    return %c0_i32, %arg0 : i32, i32
  }
  func.func @transform_5(%arg0: i32) -> (i32, i32) {
    %c0_i32 = arith.constant 0 : i32
    %c0_i32_0 = arith.constant 0 : i32
    return %c0_i32, %arg0 : i32, i32
  }
}

module attributes {stable_mosaic.version = 11 : i64} {
  func.func @attention_kernel(%arg0: i32, %arg1: memref<8x8x32xbf16, #tpu.memory_space<vmem>>, %arg2: memref<8x8xf32, #tpu.memory_space<vmem>>, %arg3: memref<3x8x8x32xf32, #tpu.memory_space<vmem>>, %arg4: memref<3x8x32xf32, #tpu.memory_space<vmem>>, %arg5: memref<3x1x32xf32, #tpu.memory_space<vmem>>, %arg6: memref<32x2xf32, #tpu.memory_space<vmem>>, %arg7: memref<8x2xf32, #tpu.memory_space<vmem>>, %arg8: memref<8x8xf32, #tpu.memory_space<vmem>>, %arg9: memref<8x32xf32, #tpu.memory_space<vmem>>) attributes {dimension_semantics = [#tpu.dimension_semantics<parallel>], iteration_bounds = array<i64: 1>, scalar_prefetch = 0 : i64, scratch_operands = 0 : i64, tpu.core_type = #tpu.core_type<tc>, window_params = [{transform_indices = @transform_0, window_bounds = array<i64: 8, 8, 32>}, {transform_indices = @transform_1, window_bounds = array<i64: 8, 8>}, {transform_indices = @transform_2, window_bounds = array<i64: 3, 8, 8, 32>}, {transform_indices = @transform_3, window_bounds = array<i64: 3, 8, 32>}, {pipeline_mode = #tpu.pipeline_mode<synchronous>, transform_indices = @transform_4, window_bounds = array<i64: 3, 1, 32>}, {pipeline_mode = #tpu.pipeline_mode<synchronous>, transform_indices = @transform_5, window_bounds = array<i64: 32, 2>}, {transform_indices = @transform_6, window_bounds = array<i64: 8, 2>}, {transform_indices = @transform_7, window_bounds = array<i64: 8, 8>}, {transform_indices = @transform_8, window_bounds = array<i64: 8, 32>}]} {
    %c0 = arith.constant 0 : index
    %c0_0 = arith.constant 0 : index
    %c0_1 = arith.constant 0 : index
    %0 = vector.load %arg1[%c0, %c0_0, %c0_1] : memref<8x8x32xbf16, #tpu.memory_space<vmem>>, vector<8x8x32xbf16>
    %1 = arith.extf %0 : vector<8x8x32xbf16> to vector<8x8x32xf32>
    %c0_2 = arith.constant 0 : index
    %c0_3 = arith.constant 0 : index
    %2 = vector.load %arg2[%c0_2, %c0_3] : memref<8x8xf32, #tpu.memory_space<vmem>>, vector<8x8xf32>
    %c0_4 = arith.constant 0 : index
    %c0_5 = arith.constant 0 : index
    %c0_6 = arith.constant 0 : index
    %c0_7 = arith.constant 0 : index
    %3 = vector.load %arg3[%c0_4, %c0_5, %c0_6, %c0_7] : memref<3x8x8x32xf32, #tpu.memory_space<vmem>>, vector<1x8x8x32xf32>
    %4 = vector.shape_cast %3 : vector<1x8x8x32xf32> to vector<8x8x32xf32>
    %c0_8 = arith.constant 0 : index
    %c0_9 = arith.constant 0 : index
    %c0_10 = arith.constant 0 : index
    %5 = vector.load %arg4[%c0_8, %c0_9, %c0_10] : memref<3x8x32xf32, #tpu.memory_space<vmem>>, vector<1x8x32xf32>
    %6 = vector.shape_cast %5 : vector<1x8x32xf32> to vector<8x32xf32>
    %7 = vector.shape_cast %6 : vector<8x32xf32> to vector<1x8x32xf32>
    %8 = vector.broadcast %7 : vector<1x8x32xf32> to vector<8x8x32xf32>
    %9 = arith.addf %4, %8 : vector<8x8x32xf32>
    %10 = math.tanh %9 : vector<8x8x32xf32>
    %c0_11 = arith.constant 0 : index
    %c0_12 = arith.constant 0 : index
    %c0_13 = arith.constant 0 : index
    %11 = vector.load %arg5[%c0_11, %c0_12, %c0_13] : memref<3x1x32xf32, #tpu.memory_space<vmem>>, vector<1x1x32xf32>
    %12 = vector.shape_cast %11 : vector<1x1x32xf32> to vector<1x32xf32>
    %13 = vector.shape_cast %12 : vector<1x32xf32> to vector<1x1x32xf32>
    %14 = vector.broadcast %13 : vector<1x1x32xf32> to vector<8x8x32xf32>
    %15 = arith.mulf %10, %14 : vector<8x8x32xf32>
    %cst = arith.constant dense<0.000000e+00> : vector<8x8xf32>
    %16 = vector.multi_reduction <add>, %15, %cst [2] : vector<8x8x32xf32> to vector<8x8xf32>
    %17 = tpu.transpose %16, [1, 0] : vector<8x8xf32> -> vector<8x8xf32>
    %cst_14 = arith.constant dense<0xFF800000> : vector<8xf32>
    %18 = vector.multi_reduction <maximumf>, %17, %cst_14 [1] : vector<8x8xf32> to vector<8xf32>
    %19 = vector.shape_cast %18 : vector<8xf32> to vector<8x1xf32>
    %20 = vector.broadcast %19 : vector<8x1xf32> to vector<8x8xf32>
    %21 = arith.subf %17, %20 : vector<8x8xf32>
    %22 = math.exp %21 : vector<8x8xf32>
    %cst_15 = arith.constant dense<0.000000e+00> : vector<8xf32>
    %23 = vector.multi_reduction <add>, %22, %cst_15 [1] : vector<8x8xf32> to vector<8xf32>
    %24 = vector.shape_cast %23 : vector<8xf32> to vector<8x1xf32>
    %25 = tpu.reciprocal %24 {approx = true} : vector<8x1xf32> -> vector<8x1xf32>
    %26 = vector.broadcast %25 : vector<8x1xf32> to vector<8x8xf32>
    %27 = arith.mulf %22, %26 : vector<8x8xf32>
    %28 = tpu.transpose %27, [1, 0] : vector<8x8xf32> -> vector<8x8xf32>
    %29 = vector.shape_cast %28 : vector<8x8xf32> to vector<8x8x1xf32>
    %30 = vector.broadcast %29 : vector<8x8x1xf32> to vector<8x8x32xf32>
    %31 = arith.mulf %30, %1 : vector<8x8x32xf32>
    %cst_16 = arith.constant dense<0.000000e+00> : vector<8x32xf32>
    %32 = vector.multi_reduction <add>, %31, %cst_16 [0] : vector<8x8x32xf32> to vector<8x32xf32>
    %c0_17 = arith.constant 0 : index
    %c0_18 = arith.constant 0 : index
    %33 = vector.load %arg6[%c0_17, %c0_18] : memref<32x2xf32, #tpu.memory_space<vmem>>, vector<32x2xf32>
    %cst_19 = arith.constant dense<0.000000e+00> : vector<8x2xf32>
    %34 = tpu.matmul %32, %33, %cst_19 {dimension_numbers = #tpu.dot_dimension_numbers<[1], [0], [0], [1], [0, 0, 1, 1], [], []>} : vector<8x32xf32>, vector<32x2xf32>, vector<8x2xf32> -> vector<8x2xf32>
    %cst_20 = arith.constant dense<0xFF800000> : vector<8xf32>
    %35 = vector.multi_reduction <maximumf>, %34, %cst_20 [1] : vector<8x2xf32> to vector<8xf32>
    %36 = vector.shape_cast %35 : vector<8xf32> to vector<8x1xf32>
    %37 = vector.broadcast %36 : vector<8x1xf32> to vector<8x2xf32>
    %38 = arith.subf %34, %37 : vector<8x2xf32>
    %39 = math.exp %38 : vector<8x2xf32>
    %cst_21 = arith.constant dense<0.000000e+00> : vector<8xf32>
    %40 = vector.multi_reduction <add>, %39, %cst_21 [1] : vector<8x2xf32> to vector<8xf32>
    %41 = vector.shape_cast %40 : vector<8xf32> to vector<8x1xf32>
    %42 = vector.broadcast %41 : vector<8x1xf32> to vector<8x2xf32>
    %43 = arith.divf %39, %42 : vector<8x2xf32>
    %c0_22 = arith.constant 0 : index
    %c0_23 = arith.constant 0 : index
    %44 = vector.load %arg7[%c0_22, %c0_23] : memref<8x2xf32, #tpu.memory_space<vmem>>, vector<8x2xf32>
    tpu.vector_store %arg7[%c0_22, %c0_23], %43 {strides = array<i32>} : memref<8x2xf32, #tpu.memory_space<vmem>>, vector<8x2xf32>,
    %c1 = arith.constant 1 : index
    %c0_24 = arith.constant 0 : index
    %c0_25 = arith.constant 0 : index
    %c0_26 = arith.constant 0 : index
    %45 = vector.load %arg3[%c1, %c0_24, %c0_25, %c0_26] : memref<3x8x8x32xf32, #tpu.memory_space<vmem>>, vector<1x8x8x32xf32>
    %46 = vector.shape_cast %45 : vector<1x8x8x32xf32> to vector<8x8x32xf32>
    %c1_27 = arith.constant 1 : index
    %c0_28 = arith.constant 0 : index
    %c0_29 = arith.constant 0 : index
    %47 = vector.load %arg4[%c1_27, %c0_28, %c0_29] : memref<3x8x32xf32, #tpu.memory_space<vmem>>, vector<1x8x32xf32>
    %48 = vector.shape_cast %47 : vector<1x8x32xf32> to vector<8x32xf32>
    %49 = vector.shape_cast %48 : vector<8x32xf32> to vector<1x8x32xf32>
    %50 = vector.broadcast %49 : vector<1x8x32xf32> to vector<8x8x32xf32>
    %51 = arith.addf %46, %50 : vector<8x8x32xf32>
    %52 = math.tanh %51 : vector<8x8x32xf32>
    %c1_30 = arith.constant 1 : index
    %c0_31 = arith.constant 0 : index
    %c0_32 = arith.constant 0 : index
    %53 = vector.load %arg5[%c1_30, %c0_31, %c0_32] : memref<3x1x32xf32, #tpu.memory_space<vmem>>, vector<1x1x32xf32>
    %54 = vector.shape_cast %53 : vector<1x1x32xf32> to vector<1x32xf32>
    %55 = vector.shape_cast %54 : vector<1x32xf32> to vector<1x1x32xf32>
    %56 = vector.broadcast %55 : vector<1x1x32xf32> to vector<8x8x32xf32>
    %57 = arith.mulf %52, %56 : vector<8x8x32xf32>
    %cst_33 = arith.constant dense<0.000000e+00> : vector<8x8xf32>
    %58 = vector.multi_reduction <add>, %57, %cst_33 [2] : vector<8x8x32xf32> to vector<8x8xf32>
    %59 = tpu.transpose %58, [1, 0] : vector<8x8xf32> -> vector<8x8xf32>
    %cst_34 = arith.constant 5.000000e-01 : f32
    %60 = vector.broadcast %cst_34 : f32 to vector<8x8xf32>
    %61 = arith.cmpf ogt, %2, %60 : vector<8x8xf32>
    %cst_35 = arith.constant -1.000000e+09 : f32
    %62 = vector.broadcast %cst_35 : f32 to vector<8x8xf32>
    %63 = arith.select %61, %59, %62 : vector<8x8xi1>, vector<8x8xf32>
    %cst_36 = arith.constant dense<0xFF800000> : vector<8xf32>
    %64 = vector.multi_reduction <maximumf>, %63, %cst_36 [1] : vector<8x8xf32> to vector<8xf32>
    %65 = vector.shape_cast %64 : vector<8xf32> to vector<8x1xf32>
    %66 = vector.broadcast %65 : vector<8x1xf32> to vector<8x8xf32>
    %67 = arith.subf %63, %66 : vector<8x8xf32>
    %68 = math.exp %67 : vector<8x8xf32>
    %cst_37 = arith.constant dense<0.000000e+00> : vector<8xf32>
    %69 = vector.multi_reduction <add>, %68, %cst_37 [1] : vector<8x8xf32> to vector<8xf32>
    %70 = vector.shape_cast %69 : vector<8xf32> to vector<8x1xf32>
    %71 = tpu.reciprocal %70 {approx = true} : vector<8x1xf32> -> vector<8x1xf32>
    %72 = vector.broadcast %71 : vector<8x1xf32> to vector<8x8xf32>
    %73 = arith.mulf %68, %72 : vector<8x8xf32>
    %c0_38 = arith.constant 0 : index
    %c0_39 = arith.constant 0 : index
    %74 = vector.load %arg8[%c0_38, %c0_39] : memref<8x8xf32, #tpu.memory_space<vmem>>, vector<8x8xf32>
    tpu.vector_store %arg8[%c0_38, %c0_39], %73 {strides = array<i32>} : memref<8x8xf32, #tpu.memory_space<vmem>>, vector<8x8xf32>,
    %c2 = arith.constant 2 : index
    %c0_40 = arith.constant 0 : index
    %c0_41 = arith.constant 0 : index
    %c0_42 = arith.constant 0 : index
    %75 = vector.load %arg3[%c2, %c0_40, %c0_41, %c0_42] : memref<3x8x8x32xf32, #tpu.memory_space<vmem>>, vector<1x8x8x32xf32>
    %76 = vector.shape_cast %75 : vector<1x8x8x32xf32> to vector<8x8x32xf32>
    %c2_43 = arith.constant 2 : index
    %c0_44 = arith.constant 0 : index
    %c0_45 = arith.constant 0 : index
    %77 = vector.load %arg4[%c2_43, %c0_44, %c0_45] : memref<3x8x32xf32, #tpu.memory_space<vmem>>, vector<1x8x32xf32>
    %78 = vector.shape_cast %77 : vector<1x8x32xf32> to vector<8x32xf32>
    %79 = vector.shape_cast %78 : vector<8x32xf32> to vector<1x8x32xf32>
    %80 = vector.broadcast %79 : vector<1x8x32xf32> to vector<8x8x32xf32>
    %81 = arith.addf %76, %80 : vector<8x8x32xf32>
    %82 = math.tanh %81 : vector<8x8x32xf32>
    %c2_46 = arith.constant 2 : index
    %c0_47 = arith.constant 0 : index
    %c0_48 = arith.constant 0 : index
    %83 = vector.load %arg5[%c2_46, %c0_47, %c0_48] : memref<3x1x32xf32, #tpu.memory_space<vmem>>, vector<1x1x32xf32>
    %84 = vector.shape_cast %83 : vector<1x1x32xf32> to vector<1x32xf32>
    %85 = vector.shape_cast %84 : vector<1x32xf32> to vector<1x1x32xf32>
    %86 = vector.broadcast %85 : vector<1x1x32xf32> to vector<8x8x32xf32>
    %87 = arith.mulf %82, %86 : vector<8x8x32xf32>
    %cst_49 = arith.constant dense<0.000000e+00> : vector<8x8xf32>
    %88 = vector.multi_reduction <add>, %87, %cst_49 [2] : vector<8x8x32xf32> to vector<8x8xf32>
    %89 = tpu.transpose %88, [1, 0] : vector<8x8xf32> -> vector<8x8xf32>
    %cst_50 = arith.constant 5.000000e-01 : f32
    %90 = vector.broadcast %cst_50 : f32 to vector<8x8xf32>
    %91 = arith.cmpf ogt, %2, %90 : vector<8x8xf32>
    %cst_51 = arith.constant -1.000000e+09 : f32
    %92 = vector.broadcast %cst_51 : f32 to vector<8x8xf32>
    %93 = arith.select %91, %89, %92 : vector<8x8xi1>, vector<8x8xf32>
    %cst_52 = arith.constant dense<0xFF800000> : vector<8xf32>
    %94 = vector.multi_reduction <maximumf>, %93, %cst_52 [1] : vector<8x8xf32> to vector<8xf32>
    %95 = vector.shape_cast %94 : vector<8xf32> to vector<8x1xf32>
    %96 = vector.broadcast %95 : vector<8x1xf32> to vector<8x8xf32>
    %97 = arith.subf %93, %96 : vector<8x8xf32>
    %98 = math.exp %97 : vector<8x8xf32>
    %cst_53 = arith.constant dense<0.000000e+00> : vector<8xf32>
    %99 = vector.multi_reduction <add>, %98, %cst_53 [1] : vector<8x8xf32> to vector<8xf32>
    %100 = vector.shape_cast %99 : vector<8xf32> to vector<8x1xf32>
    %101 = tpu.reciprocal %100 {approx = true} : vector<8x1xf32> -> vector<8x1xf32>
    %102 = vector.broadcast %101 : vector<8x1xf32> to vector<8x8xf32>
    %103 = arith.mulf %98, %102 : vector<8x8xf32>
    %104 = tpu.transpose %103, [1, 0] : vector<8x8xf32> -> vector<8x8xf32>
    %105 = vector.shape_cast %104 : vector<8x8xf32> to vector<8x8x1xf32>
    %106 = vector.broadcast %105 : vector<8x8x1xf32> to vector<8x8x32xf32>
    %107 = arith.mulf %106, %1 : vector<8x8x32xf32>
    %cst_54 = arith.constant dense<0.000000e+00> : vector<8x32xf32>
    %108 = vector.multi_reduction <add>, %107, %cst_54 [0] : vector<8x8x32xf32> to vector<8x32xf32>
    %c0_55 = arith.constant 0 : index
    %c0_56 = arith.constant 0 : index
    %109 = vector.load %arg9[%c0_55, %c0_56] : memref<8x32xf32, #tpu.memory_space<vmem>>, vector<8x32xf32>
    tpu.vector_store %arg9[%c0_55, %c0_56], %108 {strides = array<i32>} : memref<8x32xf32, #tpu.memory_space<vmem>>, vector<8x32xf32>,
    return
  }
  func.func @transform_0(%arg0: i32) -> (i32, i32, i32) {
    %c0_i32 = arith.constant 0 : i32
    %c0_i32_0 = arith.constant 0 : i32
    %c0_i32_1 = arith.constant 0 : i32
    return %c0_i32, %arg0, %c0_i32_0 : i32, i32, i32
  }
  func.func @transform_1(%arg0: i32) -> (i32, i32) {
    %c0_i32 = arith.constant 0 : i32
    %c0_i32_0 = arith.constant 0 : i32
    return %arg0, %c0_i32 : i32, i32
  }
  func.func @transform_2(%arg0: i32) -> (i32, i32, i32, i32) {
    %c0_i32 = arith.constant 0 : i32
    %c0_i32_0 = arith.constant 0 : i32
    %c0_i32_1 = arith.constant 0 : i32
    %c0_i32_2 = arith.constant 0 : i32
    return %c0_i32, %c0_i32_0, %arg0, %c0_i32_1 : i32, i32, i32, i32
  }
  func.func @transform_3(%arg0: i32) -> (i32, i32, i32) {
    %c0_i32 = arith.constant 0 : i32
    %c0_i32_0 = arith.constant 0 : i32
    %c0_i32_1 = arith.constant 0 : i32
    return %c0_i32, %arg0, %c0_i32_0 : i32, i32, i32
  }
  func.func @transform_4(%arg0: i32) -> (i32, i32, i32) {
    %c0_i32 = arith.constant 0 : i32
    %c0_i32_0 = arith.constant 0 : i32
    %c0_i32_1 = arith.constant 0 : i32
    %c0_i32_2 = arith.constant 0 : i32
    return %c0_i32, %c0_i32_0, %c0_i32_1 : i32, i32, i32
  }
  func.func @transform_5(%arg0: i32) -> (i32, i32) {
    %c0_i32 = arith.constant 0 : i32
    %c0_i32_0 = arith.constant 0 : i32
    %c0_i32_1 = arith.constant 0 : i32
    return %c0_i32, %c0_i32_0 : i32, i32
  }
  func.func @transform_6(%arg0: i32) -> (i32, i32) {
    %c0_i32 = arith.constant 0 : i32
    %c0_i32_0 = arith.constant 0 : i32
    return %arg0, %c0_i32 : i32, i32
  }
  func.func @transform_7(%arg0: i32) -> (i32, i32) {
    %c0_i32 = arith.constant 0 : i32
    %c0_i32_0 = arith.constant 0 : i32
    return %arg0, %c0_i32 : i32, i32
  }
  func.func @transform_8(%arg0: i32) -> (i32, i32) {
    %c0_i32 = arith.constant 0 : i32
    %c0_i32_0 = arith.constant 0 : i32
    return %arg0, %c0_i32 : i32, i32
  }
}

</mosaic_0001>

<llo_original>
// kernel: repeatnet_forward.5
$region0: #{repeatnet_forward.5}
  #allocation0 [shape = 'u32[]', space=smem, size = 0x4, offset = 0x4, fixed_abs, tag = 'smem constant byte address 0x4 - core index']
  #allocation1 [shape = 'u32[144,128]{1,0:T(1,128)}', space=vmem, size = 0x12000, scoped, tag = 'internal scratch']
  %s0 = inlined_call_operand.vmem [shape: s32[8,8], index: 0, kind: input, shape index: {}]
  %s1 = inlined_call_operand.vmem [shape: f32[8,8], index: 1, kind: input, shape index: {}]
  %s2 = inlined_call_operand.vmem [shape: bf16[8,64], index: 2, kind: input, shape index: {}]
  %s3 = inlined_call_operand.vmem [shape: bf16[64,128], index: 3, kind: input, shape index: {}]
  %s4 = inlined_call_operand.vmem [shape: f32[8,128], index: 4, kind: output, shape index: {0}]
  %s5 = inlined_call_operand.vmem [shape: f32[8,128], index: 5, kind: output, shape index: {1}]
  %6 = xla_tuple %s4, %s5
  %s7 = sld [smem:[#allocation0]]
  $region34: #{repeatnet_forward.5} parent=0
    _
  %s9 = ssub.s32 1, %s7
  %s10 = scalar_select 0, %s9, %s7
  // Predicated region
  $region2: #{repeatnet_forward.5} parent=0 // pred_check
    _
  $region3: #{repeatnet_forward.5} parent=0 // pred_check_branch
    %12 = sbr.rel (0) target = $region5
  $region4: #{repeatnet_forward.5} parent=0 // pred_region
    _
  $region5: #{repeatnet_forward.5} parent=0 // pred_fallthru
    _
  // Predicated region
  $region6: #{repeatnet_forward.5} parent=0 // pred_check
    _
  $region7: #{repeatnet_forward.5} parent=0 // pred_check_branch
    %14 = sbr.rel (0) target = $region9
  $region8: #{repeatnet_forward.5} parent=0 // pred_region
    _
  $region9: #{repeatnet_forward.5} parent=0 // pred_fallthru
    _
  // Predicated region
  $region10: #{repeatnet_forward.5} parent=0 // pred_check
    _
  $region11: #{repeatnet_forward.5} parent=0 // pred_check_branch
    %16 = sbr.rel (0) target = $region13
  $region12: #{repeatnet_forward.5} parent=0 // pred_region
    _
  $region13: #{repeatnet_forward.5} parent=0 // pred_fallthru
    _
  // Predicated region
  $region14: #{repeatnet_forward.5} parent=0 // pred_check
    _
  $region15: #{repeatnet_forward.5} parent=0 // pred_check_branch
    %18 = sbr.rel (0) target = $region17
  $region16: #{repeatnet_forward.5} parent=0 // pred_region
    _
  $region17: #{repeatnet_forward.5} parent=0 // pred_fallthru
    _
  %s20 = smul.u32 0, 128
  %v21 = vlaneseq
  %v22 = vand.u32 %v21, 127
  %v23 = vstv %s20
  %v24 = vadd.s32 %v22, %v23
  %v25 = vld [vmem:[%s2] sm:$0xf]
  %v26 = vld [vmem:[%s3] sm:$0xf]
  %v27 = vld [vmem:[%s3 + $0x4] sm:$0xf]
  %v28 = vld [vmem:[%s3 + $0x8] sm:$0xf]
  %v29 = vld [vmem:[%s3 + $0xc] sm:$0xf]
  %v30 = vld [vmem:[%s3 + $0x10] sm:$0xf]
  %v31 = vld [vmem:[%s3 + $0x14] sm:$0xf]
  %v32 = vld [vmem:[%s3 + $0x18] sm:$0xf]
  %v33 = vld [vmem:[%s3 + $0x1c] sm:$0xf]
  %v42 = vunpack.c.l.b16 %v26
  %v43 = vunpack.c.l.b16 %v27
  %v44 = vunpack.c.l.b16 %v28
  %v45 = vunpack.c.l.b16 %v29
  %v46 = vunpack.c.l.b16 %v30
  %v47 = vunpack.c.l.b16 %v31
  %v48 = vunpack.c.l.b16 %v32
  %v49 = vunpack.c.l.b16 %v33
  %v50 = vpack.c.b16 %v43, %v42
  %v51 = vpack.c.b16 %v45, %v44
  %v52 = vpack.c.b16 %v47, %v46
  %v53 = vpack.c.b16 %v49, %v48
  %vm58 = vcmask 523264
  %v60 = vsel %vm58, %v25, 0
  %62 = vmatprep.subr.bf16.mxu0 0
  %63 = vmatpush1.bf16.msra.mxu0 %v50
  %64 = vmatprep.subr.bf16.mxu0 0
  %65 = vmatpush1.bf16.msra.mxu0 %v51
  %66 = vmatprep.subr.bf16.mxu0 0
  %67 = vmatpush1.bf16.msra.mxu0 %v52
  %68 = vmatprep.subr.bf16.mxu0 0
  %69 = vmatpush1.bf16.msra.mxu0 %v53
  %70 = vmatprep.subr.bf16.mxu0 0
  %71 = vmatpush1.bf16.msra.mxu0 0
  %72 = vmatprep.subr.bf16.mxu0 0
  %73 = vmatpush1.bf16.msra.mxu0 0
  %74 = vmatprep.subr.bf16.mxu0 0
  %75 = vmatpush1.bf16.msra.mxu0 0
  %76 = vmatprep.subr.bf16.mxu0 0
  %77 = vmatpush1.bf16.msra.mxu0 0
  %78 = vmatprep.subr.bf16.mxu0 0
  %79 = vmatpush1.bf16.msra.mxu0 0
  %80 = vmatprep.subr.bf16.mxu0 0
  %81 = vmatpush1.bf16.msra.mxu0 0
  %82 = vmatprep.subr.bf16.mxu0 0
  %83 = vmatpush1.bf16.msra.mxu0 0
  %84 = vmatprep.subr.bf16.mxu0 0
  %85 = vmatpush1.bf16.msra.mxu0 0
  %86 = vmatprep.subr.bf16.mxu0 0
  %87 = vmatpush1.bf16.msra.mxu0 0
  %88 = vmatprep.subr.bf16.mxu0 0
  %89 = vmatpush1.bf16.msra.mxu0 0
  %90 = vmatprep.subr.bf16.mxu0 0
  %91 = vmatpush1.bf16.msra.mxu0 0
  %92 = vmatprep.subr.bf16.mxu0 0
  %93 = vmatpush1.bf16.msra.mxu0 0
  %94 = vmatprep.mubr.bf16.mxu0 0
  %95 = vmatmul.mubr.bf16.gmra.mrb[0].mxu0 %v60
  %v96 = vpop.f32.mrb[0].mxu0
  %v97 = vadd.f32 0.0, %v96
  %v98 = vpop.f32.mrb[0].mxu0
  %v99 = vpop.f32.mrb[0].mxu0
  %v100 = vpop.f32.mrb[0].mxu0
  %101 = vdwg.mxu0
  %v102 = vld [vmem:[%s0] sm:$0xff]
  %v103 = vld [vmem:[%s1] sm:$0xff]
  %104 = vset.pattern.permute.xlu0 0
  %105 = vperm.xlu0 %104, %v102
  %v106 = vpop.permute.xlu0 %105
  %vm107 = vcmp.eq.s32.totalorder %v106, %v24
  %109 = vset.pattern.permute.xlu0 0
  %110 = vperm.xlu0 %109, %v103
  %v111 = vpop.permute.xlu0 %110
  %v113 = vsel %vm107, %v111, 0.0
  %v114 = vadd.f32 %v113, 0.0
  %115 = vset.pattern.permute.xlu0 1
  %116 = vperm.xlu0 %115, %v102
  %v117 = vpop.permute.xlu0 %116
  %vm118 = vcmp.eq.s32.totalorder %v117, %v24
  %119 = vset.pattern.permute.xlu0 1
  %120 = vperm.xlu0 %119, %v103
  %v121 = vpop.permute.xlu0 %120
  %v123 = vsel %vm118, %v121, 0.0
  %v124 = vadd.f32 %v114, %v123
  %vm125 = vmor %vm107, %vm118
  %126 = vset.pattern.permute.xlu0 2
  %127 = vperm.xlu0 %126, %v102
  %v128 = vpop.permute.xlu0 %127
  %vm129 = vcmp.eq.s32.totalorder %v128, %v24
  %130 = vset.pattern.permute.xlu0 2
  %131 = vperm.xlu0 %130, %v103
  %v132 = vpop.permute.xlu0 %131
  %v134 = vsel %vm129, %v132, 0.0
  %v135 = vadd.f32 %v124, %v134
  %vm136 = vmor %vm125, %vm129
  %137 = vset.pattern.permute.xlu0 3
  %138 = vperm.xlu0 %137, %v102
  %v139 = vpop.permute.xlu0 %138
  %vm140 = vcmp.eq.s32.totalorder %v139, %v24
  %141 = vset.pattern.permute.xlu0 3
  %142 = vperm.xlu0 %141, %v103
  %v143 = vpop.permute.xlu0 %142
  %v145 = vsel %vm140, %v143, 0.0
  %v146 = vadd.f32 %v135, %v145
  %vm147 = vmor %vm136, %vm140
  %148 = vset.pattern.permute.xlu0 4
  %149 = vperm.xlu0 %148, %v102
  %v150 = vpop.permute.xlu0 %149
  %vm151 = vcmp.eq.s32.totalorder %v150, %v24
  %152 = vset.pattern.permute.xlu0 4
  %153 = vperm.xlu0 %152, %v103
  %v154 = vpop.permute.xlu0 %153
  %v156 = vsel %vm151, %v154, 0.0
  %v157 = vadd.f32 %v146, %v156
  %vm158 = vmor %vm147, %vm151
  %159 = vset.pattern.permute.xlu0 5
  %160 = vperm.xlu0 %159, %v102
  %v161 = vpop.permute.xlu0 %160
  %vm162 = vcmp.eq.s32.totalorder %v161, %v24
  %163 = vset.pattern.permute.xlu0 5
  %164 = vperm.xlu0 %163, %v103
  %v165 = vpop.permute.xlu0 %164
  %v167 = vsel %vm162, %v165, 0.0
  %v168 = vadd.f32 %v157, %v167
  %vm169 = vmor %vm158, %vm162
  %170 = vset.pattern.permute.xlu0 6
  %171 = vperm.xlu0 %170, %v102
  %v172 = vpop.permute.xlu0 %171
  %vm173 = vcmp.eq.s32.totalorder %v172, %v24
  %174 = vset.pattern.permute.xlu0 6
  %175 = vperm.xlu0 %174, %v103
  %v176 = vpop.permute.xlu0 %175
  %v178 = vsel %vm173, %v176, 0.0
  %v179 = vadd.f32 %v168, %v178
  %vm180 = vmor %vm169, %vm173
  %181 = vset.pattern.permute.xlu0 7
  %182 = vperm.xlu0 %181, %v102
  %v183 = vpop.permute.xlu0 %182
  %vm184 = vcmp.eq.s32.totalorder %v183, %v24
  %185 = vset.pattern.permute.xlu0 7
  %186 = vperm.xlu0 %185, %v103
  %v187 = vpop.permute.xlu0 %186
  %v189 = vsel %vm184, %v187, 0.0
  %v190 = vadd.f32 %v179, %v189
  %vm191 = vmor %vm180, %vm184
  %192 = vst [vmem:[%s4] sm:$0xff] %v190
  %v193 = vsel %vm191, -1e+09, %v97
  %194 = vst [vmem:[%s5] sm:$0xff] %v193
  // Predicated region
  $region18: #{repeatnet_forward.5} parent=0 // pred_check
    _
  $region19: #{repeatnet_forward.5} parent=0 // pred_check_branch
    %196 = sbr.rel (0) target = $region21
  $region20: #{repeatnet_forward.5} parent=0 // pred_region
    _
  $region21: #{repeatnet_forward.5} parent=0 // pred_fallthru
    _
  // Predicated region
  $region22: #{repeatnet_forward.5} parent=0 // pred_check
    _
  $region23: #{repeatnet_forward.5} parent=0 // pred_check_branch
    %198 = sbr.rel (0) target = $region25
  $region24: #{repeatnet_forward.5} parent=0 // pred_region
    _
  $region25: #{repeatnet_forward.5} parent=0 // pred_fallthru
    _
  // Predicated region
  $region26: #{repeatnet_forward.5} parent=0 // pred_check
    _
  $region27: #{repeatnet_forward.5} parent=0 // pred_check_branch
    %200 = sbr.rel (0) target = $region29
  $region28: #{repeatnet_forward.5} parent=0 // pred_region
    _
  $region29: #{repeatnet_forward.5} parent=0 // pred_fallthru
    _
  // Predicated region
  $region30: #{repeatnet_forward.5} parent=0 // pred_check
    _
  $region31: #{repeatnet_forward.5} parent=0 // pred_check_branch
    %202 = sbr.rel (0) target = $region33
  $region32: #{repeatnet_forward.5} parent=0 // pred_region
    _
  $region33: #{repeatnet_forward.5} parent=0 // pred_fallthru
    _

// kernel: repeatnet_forward.4
$region0: #{repeatnet_forward.4}
  #allocation0 [shape = 'u32[]', space=smem, size = 0x4, offset = 0x4, fixed_abs, tag = 'smem constant byte address 0x4 - core index']
  #allocation1 [shape = 'u32[144,128]{1,0:T(1,128)}', space=vmem, size = 0x12000, scoped, tag = 'internal scratch']
  %s0 = inlined_call_operand.vmem [shape: bf16[8,8,32], index: 0, kind: input, shape index: {}]
  %s1 = inlined_call_operand.vmem [shape: f32[8,8], index: 1, kind: input, shape index: {}]
  %s2 = inlined_call_operand.vmem [shape: f32[3,8,8,32], index: 2, kind: input, shape index: {}]
  %s3 = inlined_call_operand.vmem [shape: f32[3,8,32], index: 3, kind: input, shape index: {}]
  %s4 = inlined_call_operand.vmem [shape: f32[3,1,32], index: 4, kind: input, shape index: {}]
  %s5 = inlined_call_operand.vmem [shape: f32[32,2], index: 5, kind: input, shape index: {}]
  %s6 = inlined_call_operand.vmem [shape: f32[8,2], index: 6, kind: output, shape index: {0}]
  %s7 = inlined_call_operand.vmem [shape: f32[8,8], index: 7, kind: output, shape index: {1}]
  %s8 = inlined_call_operand.vmem [shape: f32[8,32], index: 8, kind: output, shape index: {2}]
  %9 = xla_tuple %s6, %s7, %s8
  %s10 = sld [smem:[#allocation0]]
  $region50: #{repeatnet_forward.4} parent=0
    _
  %s12 = ssub.s32 1, %s10
  %s13 = scalar_select 0, %s12, %s10
  // Predicated region
  $region2: #{repeatnet_forward.4} parent=0 // pred_check
    _
  $region3: #{repeatnet_forward.4} parent=0 // pred_check_branch
    %15 = sbr.rel (0) target = $region5
  $region4: #{repeatnet_forward.4} parent=0 // pred_region
    _
  $region5: #{repeatnet_forward.4} parent=0 // pred_fallthru
    _
  // Predicated region
  $region6: #{repeatnet_forward.4} parent=0 // pred_check
    _
  $region7: #{repeatnet_forward.4} parent=0 // pred_check_branch
    %17 = sbr.rel (0) target = $region9
  $region8: #{repeatnet_forward.4} parent=0 // pred_region
    _
  $region9: #{repeatnet_forward.4} parent=0 // pred_fallthru
    _
  // Predicated region
  $region10: #{repeatnet_forward.4} parent=0 // pred_check
    _
  $region11: #{repeatnet_forward.4} parent=0 // pred_check_branch
    %19 = sbr.rel (0) target = $region13
  $region12: #{repeatnet_forward.4} parent=0 // pred_region
    _
  $region13: #{repeatnet_forward.4} parent=0 // pred_fallthru
    _
  // Predicated region
  $region14: #{repeatnet_forward.4} parent=0 // pred_check
    _
  $region15: #{repeatnet_forward.4} parent=0 // pred_check_branch
    %21 = sbr.rel (0) target = $region17
  $region16: #{repeatnet_forward.4} parent=0 // pred_region
    _
  $region17: #{repeatnet_forward.4} parent=0 // pred_fallthru
    _
  // Predicated region
  $region18: #{repeatnet_forward.4} parent=0 // pred_check
    _
  $region19: #{repeatnet_forward.4} parent=0 // pred_check_branch
    %23 = sbr.rel (0) target = $region21
  $region20: #{repeatnet_forward.4} parent=0 // pred_region
    _
  $region21: #{repeatnet_forward.4} parent=0 // pred_fallthru
    _
  // Predicated region
  $region22: #{repeatnet_forward.4} parent=0 // pred_check
    _
  $region23: #{repeatnet_forward.4} parent=0 // pred_check_branch
    %25 = sbr.rel (0) target = $region25
  $region24: #{repeatnet_forward.4} parent=0 // pred_region
    _
  $region25: #{repeatnet_forward.4} parent=0 // pred_fallthru
    _
  %v26 = vld [vmem:[%s0] sm:$0xf]
  %v27 = vld [vmem:[%s0 + $0x4] sm:$0xf]
  %v28 = vld [vmem:[%s0 + $0x8] sm:$0xf]
  %v29 = vld [vmem:[%s0 + $0xc] sm:$0xf]
  %v30 = vld [vmem:[%s0 + $0x10] sm:$0xf]
  %v31 = vld [vmem:[%s0 + $0x14] sm:$0xf]
  %v32 = vld [vmem:[%s0 + $0x18] sm:$0xf]
  %v33 = vld [vmem:[%s0 + $0x1c] sm:$0xf]
  %v34 = vunpack.c.l.bf16 %v26
  %v35 = vunpack.c.l.bf16 %v27
  %v36 = vunpack.c.l.bf16 %v28
  %v37 = vunpack.c.l.bf16 %v29
  %v38 = vunpack.c.l.bf16 %v30
  %v39 = vunpack.c.l.bf16 %v31
  %v40 = vunpack.c.l.bf16 %v32
  %v41 = vunpack.c.l.bf16 %v33
  %v42 = vld [vmem:[%s1] sm:$0xff]
  %v43 = vld [vmem:[%s2] sm:$0xff]
  %v44 = vld [vmem:[%s2 + $0x8] sm:$0xff]
  %v45 = vld [vmem:[%s2 + $0x10] sm:$0xff]
  %v46 = vld [vmem:[%s2 + $0x18] sm:$0xff]
  %v47 = vld [vmem:[%s2 + $0x20] sm:$0xff]
  %v48 = vld [vmem:[%s2 + $0x28] sm:$0xff]
  %v49 = vld [vmem:[%s2 + $0x30] sm:$0xff]
  %v50 = vld [vmem:[%s2 + $0x38] sm:$0xff]
  %v51 = vld [vmem:[%s3] sm:$0xff]
  %v52 = vadd.f32 %v43, %v51
  %v53 = vadd.f32 %v44, %v51
  %v54 = vadd.f32 %v45, %v51
  %v55 = vadd.f32 %v46, %v51
  %v56 = vadd.f32 %v47, %v51
  %v57 = vadd.f32 %v48, %v51
  %v58 = vadd.f32 %v49, %v51
  %v59 = vadd.f32 %v50, %v51
  %v60 = vtanh.pop %v52
  %v61 = vtanh.pop %v53
  %v62 = vtanh.pop %v54
  %v63 = vtanh.pop %v55
  %v64 = vtanh.pop %v56
  %v65 = vtanh.pop %v57
  %v66 = vtanh.pop %v58
  %v67 = vtanh.pop %v59
  %v68 = vld [vmem:[%s4] sm:$0x1]
  %v70 = vlaneseq
  %v71 = vshrl.u32 %v70, 7
  %v72 = vsub.s32 0, %v71
  %v73 = vrot.slane %v68, %v72
  %v75 = vmul.f32 %v60, %v73
  %v76 = vmul.f32 %v61, %v73
  %v77 = vmul.f32 %v62, %v73
  %v78 = vmul.f32 %v63, %v73
  %v79 = vmul.f32 %v64, %v73
  %v80 = vmul.f32 %v65, %v73
  %v81 = vmul.f32 %v66, %v73
  %v82 = vmul.f32 %v67, %v73
  %vm83 = vcmask 261120
  %v84 = vsel %vm83, %v75, 0.0
  %85 = vadd.xlane.f32.xlu0 %v84
  %v86 = vpop.xlane.xlu0 %85
  %v87 = vsel %vm83, %v76, 0.0
  %88 = vadd.xlane.f32.xlu0 %v87
  %v89 = vpop.xlane.xlu0 %88
  %v90 = vsel %vm83, %v77, 0.0
  %91 = vadd.xlane.f32.xlu0 %v90
  %v92 = vpop.xlane.xlu0 %91
  %v93 = vsel %vm83, %v78, 0.0
  %94 = vadd.xlane.f32.xlu0 %v93
  %v95 = vpop.xlane.xlu0 %94
  %v96 = vsel %vm83, %v79, 0.0
  %97 = vadd.xlane.f32.xlu0 %v96
  %v98 = vpop.xlane.xlu0 %97
  %v99 = vsel %vm83, %v80, 0.0
  %100 = vadd.xlane.f32.xlu0 %v99
  %v101 = vpop.xlane.xlu0 %100
  %v102 = vsel %vm83, %v81, 0.0
  %103 = vadd.xlane.f32.xlu0 %v102
  %v104 = vpop.xlane.xlu0 %103
  %v105 = vsel %vm83, %v82, 0.0
  %106 = vadd.xlane.f32.xlu0 %v105
  %v107 = vpop.xlane.xlu0 %106
  %v116 = vlaneseq
  %v117 = vand.u32 %v116, 127
  %v118 = vlaneseq
  %v119 = vshrl.u32 %v118, 7
  %v120 = vsub.s32 %v117, %v119
  %v121 = vrot.slane %v86, %v120
  %v122 = vlaneseq
  %v123 = vshrl.u32 %v122, 7
  %v124 = vsub.s32 %v117, %v123
  %v125 = vrot.slane %v89, %v124
  %v126 = vlaneseq
  %v127 = vshrl.u32 %v126, 7
  %v128 = vsub.s32 %v117, %v127
  %v129 = vrot.slane %v92, %v128
  %v130 = vlaneseq
  %v131 = vshrl.u32 %v130, 7
  %v132 = vsub.s32 %v117, %v131
  %v133 = vrot.slane %v95, %v132
  %v134 = vlaneseq
  %v135 = vshrl.u32 %v134, 7
  %v136 = vsub.s32 %v117, %v135
  %v137 = vrot.slane %v98, %v136
  %v138 = vlaneseq
  %v139 = vshrl.u32 %v138, 7
  %v140 = vsub.s32 %v117, %v139
  %v141 = vrot.slane %v101, %v140
  %v142 = vlaneseq
  %v143 = vshrl.u32 %v142, 7
  %v144 = vsub.s32 %v117, %v143
  %v145 = vrot.slane %v104, %v144
  %v146 = vlaneseq
  %v147 = vshrl.u32 %v146, 7
  %v148 = vsub.s32 %v117, %v147
  %v149 = vrot.slane %v107, %v148
  %vm150 = vcmask 1041409
  %v151 = vsel %vm150, %v125, %v121
  %vm152 = vcmask 1042434
  %v153 = vsel %vm152, %v129, %v151
  %vm154 = vcmask 1043459
  %v155 = vsel %vm154, %v133, %v153
  %vm156 = vcmask 1044484
  %v157 = vsel %vm156, %v137, %v155
  %vm158 = vcmask 1045509
  %v159 = vsel %vm158, %v141, %v157
  %vm160 = vcmask 1046534
  %v161 = vsel %vm160, %v145, %v159
  %vm162 = vcmask 1047559
  %v163 = vsel %vm162, %v149, %v161
  %165 = vxpose.xlu0.b32.start [1/16] %v163, 128
  %166 = vxpose.xlu0.b32.cont [2/16] 0.0, 128
  %167 = vxpose.xlu0.b32.cont [3/16] 0.0, 128
  %168 = vxpose.xlu0.b32.cont [4/16] 0.0, 128
  %169 = vxpose.xlu0.b32.cont [5/16] 0.0, 128
  %170 = vxpose.xlu0.b32.cont [6/16] 0.0, 128
  %171 = vxpose.xlu0.b32.cont [7/16] 0.0, 128
  %172 = vxpose.xlu0.b32.cont [8/16] 0.0, 128
  %173 = vxpose.xlu0.b32.cont [9/16] 0.0, 128
  %174 = vxpose.xlu0.b32.cont [10/16] 0.0, 128
  %175 = vxpose.xlu0.b32.cont [11/16] 0.0, 128
  %176 = vxpose.xlu0.b32.cont [12/16] 0.0, 128
  %177 = vxpose.xlu0.b32.cont [13/16] 0.0, 128
  %178 = vxpose.xlu0.b32.cont [14/16] 0.0, 128
  %179 = vxpose.xlu0.b32.cont [15/16] 0.0, 128
  %180 = vxpose.xlu0.b32.end [16/16] 0.0, 128
  %v181 = vpop.trf.xlu0
  %v182 = vpop.trf.xlu0
  %v183 = vpop.trf.xlu0
  %v184 = vpop.trf.xlu0
  %v185 = vpop.trf.xlu0
  %v186 = vpop.trf.xlu0
  %v187 = vpop.trf.xlu0
  %v188 = vpop.trf.xlu0
  %v189 = vpop.trf.xlu0
  %v190 = vpop.trf.xlu0
  %v191 = vpop.trf.xlu0
  %v192 = vpop.trf.xlu0
  %v193 = vpop.trf.xlu0
  %v194 = vpop.trf.xlu0
  %v195 = vpop.trf.xlu0
  %v196 = vpop.trf.xlu0
  %vm197 = vcmask 64512
  %v198 = vsel %vm197, %v181, -inf
  %199 = vmax.xlane.f32.xlu0 %v198
  %v200 = vpop.xlane.xlu0 %199
  %v201 = vsub.f32 %v181, %v200
  %v202 = vmul.f32 %v201, 1.442695
  %v203 = vpow.pop %v202
  %v204 = vsel %vm197, %v203, 0.0
  %205 = vadd.xlane.f32.xlu0 %v204
  %v206 = vpop.xlane.xlu0 %205
  %v207 = vrcp.pop %v206
  %v208 = vmul.f32 %v203, %v207
  %209 = vxpose.xlu0.b32.start [1/16] %v208, 128
  %210 = vxpose.xlu0.b32.cont [2/16] 0.0, 128
  %211 = vxpose.xlu0.b32.cont [3/16] 0.0, 128
  %212 = vxpose.xlu0.b32.cont [4/16] 0.0, 128
  %213 = vxpose.xlu0.b32.cont [5/16] 0.0, 128
  %214 = vxpose.xlu0.b32.cont [6/16] 0.0, 128
  %215 = vxpose.xlu0.b32.cont [7/16] 0.0, 128
  %216 = vxpose.xlu0.b32.cont [8/16] 0.0, 128
  %217 = vxpose.xlu0.b32.cont [9/16] 0.0, 128
  %218 = vxpose.xlu0.b32.cont [10/16] 0.0, 128
  %219 = vxpose.xlu0.b32.cont [11/16] 0.0, 128
  %220 = vxpose.xlu0.b32.cont [12/16] 0.0, 128
  %221 = vxpose.xlu0.b32.cont [13/16] 0.0, 128
  %222 = vxpose.xlu0.b32.cont [14/16] 0.0, 128
  %223 = vxpose.xlu0.b32.cont [15/16] 0.0, 128
  %224 = vxpose.xlu0.b32.end [16/16] 0.0, 128
  %v225 = vpop.trf.xlu0
  %v226 = vpop.trf.xlu0
  %v227 = vpop.trf.xlu0
  %v228 = vpop.trf.xlu0
  %v229 = vpop.trf.xlu0
  %v230 = vpop.trf.xlu0
  %v231 = vpop.trf.xlu0
  %v232 = vpop.trf.xlu0
  %v233 = vpop.trf.xlu0
  %v234 = vpop.trf.xlu0
  %v235 = vpop.trf.xlu0
  %v236 = vpop.trf.xlu0
  %v237 = vpop.trf.xlu0
  %v238 = vpop.trf.xlu0
  %v239 = vpop.trf.xlu0
  %v240 = vpop.trf.xlu0
  %v241 = vlaneseq
  %v242 = vshrl.u32 %v241, 7
  %v243 = vsub.s32 0, %v242
  %v244 = vrot.slane %v225, %v243
  %246 = vbcast.lane.b32.xlu0 %v244, 256
  %v247 = vpop.permute.xlu0 %246
  %v248 = vlaneseq
  %v249 = vshrl.u32 %v248, 7
  %v250 = vsub.s32 1, %v249
  %v251 = vrot.slane %v225, %v250
  %253 = vbcast.lane.b32.xlu0 %v251, 256
  %v254 = vpop.permute.xlu0 %253
  %v255 = vlaneseq
  %v256 = vshrl.u32 %v255, 7
  %v257 = vsub.s32 2, %v256
  %v258 = vrot.slane %v225, %v257
  %260 = vbcast.lane.b32.xlu0 %v258, 256
  %v261 = vpop.permute.xlu0 %260
  %v262 = vlaneseq
  %v263 = vshrl.u32 %v262, 7
  %v264 = vsub.s32 3, %v263
  %v265 = vrot.slane %v225, %v264
  %267 = vbcast.lane.b32.xlu0 %v265, 256
  %v268 = vpop.permute.xlu0 %267
  %v269 = vlaneseq
  %v270 = vshrl.u32 %v269, 7
  %v271 = vsub.s32 4, %v270
  %v272 = vrot.slane %v225, %v271
  %274 = vbcast.lane.b32.xlu0 %v272, 256
  %v275 = vpop.permute.xlu0 %274
  %v276 = vlaneseq
  %v277 = vshrl.u32 %v276, 7
  %v278 = vsub.s32 5, %v277
  %v279 = vrot.slane %v225, %v278
  %281 = vbcast.lane.b32.xlu0 %v279, 256
  %v282 = vpop.permute.xlu0 %281
  %v283 = vlaneseq
  %v284 = vshrl.u32 %v283, 7
  %v285 = vsub.s32 6, %v284
  %v286 = vrot.slane %v225, %v285
  %288 = vbcast.lane.b32.xlu0 %v286, 256
  %v289 = vpop.permute.xlu0 %288
  %v290 = vlaneseq
  %v291 = vshrl.u32 %v290, 7
  %v292 = vsub.s32 7, %v291
  %v293 = vrot.slane %v225, %v292
  %295 = vbcast.lane.b32.xlu0 %v293, 256
  %v296 = vpop.permute.xlu0 %295
  %v297 = vmul.f32 %v247, %v34
  %v298 = vmul.f32 %v254, %v35
  %v299 = vmul.f32 %v261, %v36
  %v300 = vmul.f32 %v268, %v37
  %v301 = vmul.f32 %v275, %v38
  %v302 = vmul.f32 %v282, %v39
  %v303 = vmul.f32 %v289, %v40
  %v304 = vmul.f32 %v296, %v41
  %v305 = vsel %vm83, %v297, 0.0
  %v306 = vsel %vm83, %v298, 0.0
  %v307 = vadd.f32 %v305, %v306
  %v308 = vsel %vm83, %v299, 0.0
  %v309 = vadd.f32 %v307, %v308
  %v310 = vsel %vm83, %v300, 0.0
  %v311 = vadd.f32 %v309, %v310
  %v312 = vsel %vm83, %v301, 0.0
  %v313 = vadd.f32 %v311, %v312
  %v314 = vsel %vm83, %v302, 0.0
  %v315 = vadd.f32 %v313, %v314
  %v316 = vsel %vm83, %v303, 0.0
  %v317 = vadd.f32 %v315, %v316
  %v318 = vsel %vm83, %v304, 0.0
  %v319 = vadd.f32 %v317, %v318
  %v320 = vld [vmem:[%s5] sm:$0xff]
  %v321 = vld [vmem:[%s5 + $0x8] sm:$0xff]
  %v322 = vld [vmem:[%s5 + $0x10] sm:$0xff]
  %v323 = vld [vmem:[%s5 + $0x18] sm:$0xff]
  %v325 = vsel %vm83, %v319, 0
  %327 = vmatprep.subr.mxu0 0.0
  %328 = vmatpush1.msra.mxu0 %v320
  %329 = vmatprep.subr.mxu0 0.0
  %330 = vmatpush1.msra.mxu0 %v321
  %331 = vmatprep.subr.mxu0 0.0
  %332 = vmatpush1.msra.mxu0 %v322
  %333 = vmatprep.subr.mxu0 0.0
  %334 = vmatpush1.msra.mxu0 %v323
  %335 = vmatprep.subr.mxu0 0.0
  %336 = vmatpush1.msra.mxu0 0.0
  %337 = vmatprep.subr.mxu0 0.0
  %338 = vmatpush1.msra.mxu0 0.0
  %339 = vmatprep.subr.mxu0 0.0
  %340 = vmatpush1.msra.mxu0 0.0
  %341 = vmatprep.subr.mxu0 0.0
  %342 = vmatpush1.msra.mxu0 0.0
  %343 = vmatprep.subr.mxu0 0.0
  %344 = vmatpush1.msra.mxu0 0.0
  %345 = vmatprep.subr.mxu0 0.0
  %346 = vmatpush1.msra.mxu0 0.0
  %347 = vmatprep.subr.mxu0 0.0
  %348 = vmatpush1.msra.mxu0 0.0
  %349 = vmatprep.subr.mxu0 0.0
  %350 = vmatpush1.msra.mxu0 0.0
  %351 = vmatprep.subr.mxu0 0.0
  %352 = vmatpush1.msra.mxu0 0.0
  %353 = vmatprep.subr.mxu0 0.0
  %354 = vmatpush1.msra.mxu0 0.0
  %355 = vmatprep.subr.mxu0 0.0
  %356 = vmatpush1.msra.mxu0 0.0
  %357 = vmatprep.subr.mxu0 0.0
  %358 = vmatpush1.msra.mxu0 0.0
  %359 = vmatprep.subr.mxu0 0.0
  %360 = vmatpush1.msra.mxu0 0.0
  %361 = vmatprep.subr.mxu0 0.0
  %362 = vmatpush1.msra.mxu0 0.0
  %363 = vmatprep.subr.mxu0 0.0
  %364 = vmatpush1.msra.mxu0 0.0
  %365 = vmatprep.subr.mxu0 0.0
  %366 = vmatpush1.msra.mxu0 0.0
  %367 = vmatprep.subr.mxu0 0.0
  %368 = vmatpush1.msra.mxu0 0.0
  %369 = vmatprep.subr.mxu0 0.0
  %370 = vmatpush1.msra.mxu0 0.0
  %371 = vmatprep.subr.mxu0 0.0
  %372 = vmatpush1.msra.mxu0 0.0
  %373 = vmatprep.subr.mxu0 0.0
  %374 = vmatpush1.msra.mxu0 0.0
  %375 = vmatprep.subr.mxu0 0.0
  %376 = vmatpush1.msra.mxu0 0.0
  %377 = vmatprep.subr.mxu0 0.0
  %378 = vmatpush1.msra.mxu0 0.0
  %379 = vmatprep.subr.mxu0 0.0
  %380 = vmatpush1.msra.mxu0 0.0
  %381 = vmatprep.subr.mxu0 0.0
  %382 = vmatpush1.msra.mxu0 0.0
  %383 = vmatprep.subr.mxu0 0.0
  %384 = vmatpush1.msra.mxu0 0.0
  %385 = vmatprep.subr.mxu0 0.0
  %386 = vmatpush1.msra.mxu0 0.0
  %387 = vmatprep.subr.mxu0 0.0
  %388 = vmatpush1.msra.mxu0 0.0
  %389 = vmatprep.subr.mxu0 0.0
  %390 = vmatpush1.msra.mxu0 0.0
  %391 = vmatprep.mubr.f32.mxu0 0.0
  %392 = vmatmul.mubr.f32.gmra.mrb[0].mxu0 %v325
  %v393 = vpop.f32.mrb[0].mxu0
  %v394 = vadd.f32 0.0, %v393
  %v395 = vpop.f32.mrb[0].mxu0
  %396 = vdwg.mxu0
  %vm397 = vcmask 15360
  %v398 = vsel %vm397, %v394, -inf
  %399 = vmax.xlane.f32.xlu0 %v398
  %v400 = vpop.xlane.xlu0 %399
  %v401 = vsub.f32 %v394, %v400
  %v402 = vmul.f32 %v401, 1.442695
  %v403 = vpow.pop %v402
  %v404 = vsel %vm397, %v403, 0.0
  %405 = vadd.xlane.f32.xlu0 %v404
  %v406 = vpop.xlane.xlu0 %405
  %v407 = vrcp.pop %v406
  %v408 = vmul.f32 %v403, %v407
  %409 = vst.msk [vmem:[%s6] sm:$0xff] %vm397, %v408
  %s410 = scalar_lea.vmem %s2, 64
  %v411 = vld [vmem:[%s410] sm:$0xff]
  %v412 = vld [vmem:[%s410 + $0x8] sm:$0xff]
  %v413 = vld [vmem:[%s410 + $0x10] sm:$0xff]
  %v414 = vld [vmem:[%s410 + $0x18] sm:$0xff]
  %v415 = vld [vmem:[%s410 + $0x20] sm:$0xff]
  %v416 = vld [vmem:[%s410 + $0x28] sm:$0xff]
  %v417 = vld [vmem:[%s410 + $0x30] sm:$0xff]
  %v418 = vld [vmem:[%s410 + $0x38] sm:$0xff]
  %s419 = scalar_lea.vmem %s3, 8
  %v420 = vld [vmem:[%s419] sm:$0xff]
  %v421 = vadd.f32 %v411, %v420
  %v422 = vadd.f32 %v412, %v420
  %v423 = vadd.f32 %v413, %v420
  %v424 = vadd.f32 %v414, %v420
  %v425 = vadd.f32 %v415, %v420
  %v426 = vadd.f32 %v416, %v420
  %v427 = vadd.f32 %v417, %v420
  %v428 = vadd.f32 %v418, %v420
  %v429 = vtanh.pop %v421
  %v430 = vtanh.pop %v422
  %v431 = vtanh.pop %v423
  %v432 = vtanh.pop %v424
  %v433 = vtanh.pop %v425
  %v434 = vtanh.pop %v426
  %v435 = vtanh.pop %v427
  %v436 = vtanh.pop %v428
  %s437 = scalar_lea.vmem %s4, 1
  %v438 = vld [vmem:[%s437] sm:$0x1]
  %v440 = vlaneseq
  %v441 = vshrl.u32 %v440, 7
  %v442 = vsub.s32 0, %v441
  %v443 = vrot.slane %v438, %v442
  %v445 = vmul.f32 %v429, %v443
  %v446 = vmul.f32 %v430, %v443
  %v447 = vmul.f32 %v431, %v443
  %v448 = vmul.f32 %v432, %v443
  %v449 = vmul.f32 %v433, %v443
  %v450 = vmul.f32 %v434, %v443
  %v451 = vmul.f32 %v435, %v443
  %v452 = vmul.f32 %v436, %v443
  %v453 = vsel %vm83, %v445, 0.0
  %454 = vadd.xlane.f32.xlu0 %v453
  %v455 = vpop.xlane.xlu0 %454
  %v456 = vsel %vm83, %v446, 0.0
  %457 = vadd.xlane.f32.xlu0 %v456
  %v458 = vpop.xlane.xlu0 %457
  %v459 = vsel %vm83, %v447, 0.0
  %460 = vadd.xlane.f32.xlu0 %v459
  %v461 = vpop.xlane.xlu0 %460
  %v462 = vsel %vm83, %v448, 0.0
  %463 = vadd.xlane.f32.xlu0 %v462
  %v464 = vpop.xlane.xlu0 %463
  %v465 = vsel %vm83, %v449, 0.0
  %466 = vadd.xlane.f32.xlu0 %v465
  %v467 = vpop.xlane.xlu0 %466
  %v468 = vsel %vm83, %v450, 0.0
  %469 = vadd.xlane.f32.xlu0 %v468
  %v470 = vpop.xlane.xlu0 %469
  %v471 = vsel %vm83, %v451, 0.0
  %472 = vadd.xlane.f32.xlu0 %v471
  %v473 = vpop.xlane.xlu0 %472
  %v474 = vsel %vm83, %v452, 0.0
  %475 = vadd.xlane.f32.xlu0 %v474
  %v476 = vpop.xlane.xlu0 %475
  %v485 = vlaneseq
  %v486 = vshrl.u32 %v485, 7
  %v487 = vsub.s32 %v117, %v486
  %v488 = vrot.slane %v455, %v487
  %v489 = vlaneseq
  %v490 = vshrl.u32 %v489, 7
  %v491 = vsub.s32 %v117, %v490
  %v492 = vrot.slane %v458, %v491
  %v493 = vlaneseq
  %v494 = vshrl.u32 %v493, 7
  %v495 = vsub.s32 %v117, %v494
  %v496 = vrot.slane %v461, %v495
  %v497 = vlaneseq
  %v498 = vshrl.u32 %v497, 7
  %v499 = vsub.s32 %v117, %v498
  %v500 = vrot.slane %v464, %v499
  %v501 = vlaneseq
  %v502 = vshrl.u32 %v501, 7
  %v503 = vsub.s32 %v117, %v502
  %v504 = vrot.slane %v467, %v503
  %v505 = vlaneseq
  %v506 = vshrl.u32 %v505, 7
  %v507 = vsub.s32 %v117, %v506
  %v508 = vrot.slane %v470, %v507
  %v509 = vlaneseq
  %v510 = vshrl.u32 %v509, 7
  %v511 = vsub.s32 %v117, %v510
  %v512 = vrot.slane %v473, %v511
  %v513 = vlaneseq
  %v514 = vshrl.u32 %v513, 7
  %v515 = vsub.s32 %v117, %v514
  %v516 = vrot.slane %v476, %v515
  %v517 = vsel %vm150, %v492, %v488
  %v518 = vsel %vm152, %v496, %v517
  %v519 = vsel %vm154, %v500, %v518
  %v520 = vsel %vm156, %v504, %v519
  %v521 = vsel %vm158, %v508, %v520
  %v522 = vsel %vm160, %v512, %v521
  %v523 = vsel %vm162, %v516, %v522
  %525 = vxpose.xlu0.b32.start [1/16] %v523, 128
  %526 = vxpose.xlu0.b32.cont [2/16] 0.0, 128
  %527 = vxpose.xlu0.b32.cont [3/16] 0.0, 128
  %528 = vxpose.xlu0.b32.cont [4/16] 0.0, 128
  %529 = vxpose.xlu0.b32.cont [5/16] 0.0, 128
  %530 = vxpose.xlu0.b32.cont [6/16] 0.0, 128
  %531 = vxpose.xlu0.b32.cont [7/16] 0.0, 128
  %532 = vxpose.xlu0.b32.cont [8/16] 0.0, 128
  %533 = vxpose.xlu0.b32.cont [9/16] 0.0, 128
  %534 = vxpose.xlu0.b32.cont [10/16] 0.0, 128
  %535 = vxpose.xlu0.b32.cont [11/16] 0.0, 128
  %536 = vxpose.xlu0.b32.cont [12/16] 0.0, 128
  %537 = vxpose.xlu0.b32.cont [13/16] 0.0, 128
  %538 = vxpose.xlu0.b32.cont [14/16] 0.0, 128
  %539 = vxpose.xlu0.b32.cont [15/16] 0.0, 128
  %540 = vxpose.xlu0.b32.end [16/16] 0.0, 128
  %v541 = vpop.trf.xlu0
  %v542 = vpop.trf.xlu0
  %v543 = vpop.trf.xlu0
  %v544 = vpop.trf.xlu0
  %v545 = vpop.trf.xlu0
  %v546 = vpop.trf.xlu0
  %v547 = vpop.trf.xlu0
  %v548 = vpop.trf.xlu0
  %v549 = vpop.trf.xlu0
  %v550 = vpop.trf.xlu0
  %v551 = vpop.trf.xlu0
  %v552 = vpop.trf.xlu0
  %v553 = vpop.trf.xlu0
  %v554 = vpop.trf.xlu0
  %v555 = vpop.trf.xlu0
  %v556 = vpop.trf.xlu0
  %vm557 = vcmp.gt.f32.partialorder %v42, 0.5
  %v558 = vsel %vm557, %v541, -1e+09
  %v559 = vsel %vm197, %v558, -inf
  %560 = vmax.xlane.f32.xlu0 %v559
  %v561 = vpop.xlane.xlu0 %560
  %v562 = vsub.f32 %v558, %v561
  %v563 = vmul.f32 %v562, 1.442695
  %v564 = vpow.pop %v563
  %v565 = vsel %vm197, %v564, 0.0
  %566 = vadd.xlane.f32.xlu0 %v565
  %v567 = vpop.xlane.xlu0 %566
  %v568 = vrcp.pop %v567
  %v569 = vmul.f32 %v564, %v568
  %570 = vst.msk [vmem:[%s7] sm:$0xff] %vm197, %v569
  %s571 = scalar_lea.vmem %s2, 128
  %v572 = vld [vmem:[%s571] sm:$0xff]
  %v573 = vld [vmem:[%s571 + $0x8] sm:$0xff]
  %v574 = vld [vmem:[%s571 + $0x10] sm:$0xff]
  %v575 = vld [vmem:[%s571 + $0x18] sm:$0xff]
  %v576 = vld [vmem:[%s571 + $0x20] sm:$0xff]
  %v577 = vld [vmem:[%s571 + $0x28] sm:$0xff]
  %v578 = vld [vmem:[%s571 + $0x30] sm:$0xff]
  %v579 = vld [vmem:[%s571 + $0x38] sm:$0xff]
  %s580 = scalar_lea.vmem %s3, 16
  %v581 = vld [vmem:[%s580] sm:$0xff]
  %v582 = vadd.f32 %v572, %v581
  %v583 = vadd.f32 %v573, %v581
  %v584 = vadd.f32 %v574, %v581
  %v585 = vadd.f32 %v575, %v581
  %v586 = vadd.f32 %v576, %v581
  %v587 = vadd.f32 %v577, %v581
  %v588 = vadd.f32 %v578, %v581
  %v589 = vadd.f32 %v579, %v581
  %v590 = vtanh.pop %v582
  %v591 = vtanh.pop %v583
  %v592 = vtanh.pop %v584
  %v593 = vtanh.pop %v585
  %v594 = vtanh.pop %v586
  %v595 = vtanh.pop %v587
  %v596 = vtanh.pop %v588
  %v597 = vtanh.pop %v589
  %s598 = scalar_lea.vmem %s4, 2
  %v599 = vld [vmem:[%s598] sm:$0x1]
  %v601 = vlaneseq
  %v602 = vshrl.u32 %v601, 7
  %v603 = vsub.s32 0, %v602
  %v604 = vrot.slane %v599, %v603
  %v606 = vmul.f32 %v590, %v604
  %v607 = vmul.f32 %v591, %v604
  %v608 = vmul.f32 %v592, %v604
  %v609 = vmul.f32 %v593, %v604
  %v610 = vmul.f32 %v594, %v604
  %v611 = vmul.f32 %v595, %v604
  %v612 = vmul.f32 %v596, %v604
  %v613 = vmul.f32 %v597, %v604
  %v614 = vsel %vm83, %v606, 0.0
  %615 = vadd.xlane.f32.xlu0 %v614
  %v616 = vpop.xlane.xlu0 %615
  %v617 = vsel %vm83, %v607, 0.0
  %618 = vadd.xlane.f32.xlu0 %v617
  %v619 = vpop.xlane.xlu0 %618
  %v620 = vsel %vm83, %v608, 0.0
  %621 = vadd.xlane.f32.xlu0 %v620
  %v622 = vpop.xlane.xlu0 %621
  %v623 = vsel %vm83, %v609, 0.0
  %624 = vadd.xlane.f32.xlu0 %v623
  %v625 = vpop.xlane.xlu0 %624
  %v626 = vsel %vm83, %v610, 0.0
  %627 = vadd.xlane.f32.xlu0 %v626
  %v628 = vpop.xlane.xlu0 %627
  %v629 = vsel %vm83, %v611, 0.0
  %630 = vadd.xlane.f32.xlu0 %v629
  %v631 = vpop.xlane.xlu0 %630
  %v632 = vsel %vm83, %v612, 0.0
  %633 = vadd.xlane.f32.xlu0 %v632
  %v634 = vpop.xlane.xlu0 %633
  %v635 = vsel %vm83, %v613, 0.0
  %636 = vadd.xlane.f32.xlu0 %v635
  %v637 = vpop.xlane.xlu0 %636
  %v646 = vlaneseq
  %v647 = vshrl.u32 %v646, 7
  %v648 = vsub.s32 %v117, %v647
  %v649 = vrot.slane %v616, %v648
  %v650 = vlaneseq
  %v651 = vshrl.u32 %v650, 7
  %v652 = vsub.s32 %v117, %v651
  %v653 = vrot.slane %v619, %v652
  %v654 = vlaneseq
  %v655 = vshrl.u32 %v654, 7
  %v656 = vsub.s32 %v117, %v655
  %v657 = vrot.slane %v622, %v656
  %v658 = vlaneseq
  %v659 = vshrl.u32 %v658, 7
  %v660 = vsub.s32 %v117, %v659
  %v661 = vrot.slane %v625, %v660
  %v662 = vlaneseq
  %v663 = vshrl.u32 %v662, 7
  %v664 = vsub.s32 %v117, %v663
  %v665 = vrot.slane %v628, %v664
  %v666 = vlaneseq
  %v667 = vshrl.u32 %v666, 7
  %v668 = vsub.s32 %v117, %v667
  %v669 = vrot.slane %v631, %v668
  %v670 = vlaneseq
  %v671 = vshrl.u32 %v670, 7
  %v672 = vsub.s32 %v117, %v671
  %v673 = vrot.slane %v634, %v672
  %v674 = vlaneseq
  %v675 = vshrl.u32 %v674, 7
  %v676 = vsub.s32 %v117, %v675
  %v677 = vrot.slane %v637, %v676
  %v678 = vsel %vm150, %v653, %v649
  %v679 = vsel %vm152, %v657, %v678
  %v680 = vsel %vm154, %v661, %v679
  %v681 = vsel %vm156, %v665, %v680
  %v682 = vsel %vm158, %v669, %v681
  %v683 = vsel %vm160, %v673, %v682
  %v684 = vsel %vm162, %v677, %v683
  %686 = vxpose.xlu0.b32.start [1/16] %v684, 128
  %687 = vxpose.xlu0.b32.cont [2/16] 0.0, 128
  %688 = vxpose.xlu0.b32.cont [3/16] 0.0, 128
  %689 = vxpose.xlu0.b32.cont [4/16] 0.0, 128
  %690 = vxpose.xlu0.b32.cont [5/16] 0.0, 128
  %691 = vxpose.xlu0.b32.cont [6/16] 0.0, 128
  %692 = vxpose.xlu0.b32.cont [7/16] 0.0, 128
  %693 = vxpose.xlu0.b32.cont [8/16] 0.0, 128
  %694 = vxpose.xlu0.b32.cont [9/16] 0.0, 128
  %695 = vxpose.xlu0.b32.cont [10/16] 0.0, 128
  %696 = vxpose.xlu0.b32.cont [11/16] 0.0, 128
  %697 = vxpose.xlu0.b32.cont [12/16] 0.0, 128
  %698 = vxpose.xlu0.b32.cont [13/16] 0.0, 128
  %699 = vxpose.xlu0.b32.cont [14/16] 0.0, 128
  %700 = vxpose.xlu0.b32.cont [15/16] 0.0, 128
  %701 = vxpose.xlu0.b32.end [16/16] 0.0, 128
  %v702 = vpop.trf.xlu0
  %v703 = vpop.trf.xlu0
  %v704 = vpop.trf.xlu0
  %v705 = vpop.trf.xlu0
  %v706 = vpop.trf.xlu0
  %v707 = vpop.trf.xlu0
  %v708 = vpop.trf.xlu0
  %v709 = vpop.trf.xlu0
  %v710 = vpop.trf.xlu0
  %v711 = vpop.trf.xlu0
  %v712 = vpop.trf.xlu0
  %v713 = vpop.trf.xlu0
  %v714 = vpop.trf.xlu0
  %v715 = vpop.trf.xlu0
  %v716 = vpop.trf.xlu0
  %v717 = vpop.trf.xlu0
  %v718 = vsel %vm557, %v702, -1e+09
  %v719 = vsel %vm197, %v718, -inf
  %720 = vmax.xlane.f32.xlu0 %v719
  %v721 = vpop.xlane.xlu0 %720
  %v722 = vsub.f32 %v718, %v721
  %v723 = vmul.f32 %v722, 1.442695
  %v724 = vpow.pop %v723
  %v725 = vsel %vm197, %v724, 0.0
  %726 = vadd.xlane.f32.xlu0 %v725
  %v727 = vpop.xlane.xlu0 %726
  %v728 = vrcp.pop %v727
  %v729 = vmul.f32 %v724, %v728
  %730 = vxpose.xlu0.b32.start [1/16] %v729, 128
  %731 = vxpose.xlu0.b32.cont [2/16] 0.0, 128
  %732 = vxpose.xlu0.b32.cont [3/16] 0.0, 128
  %733 = vxpose.xlu0.b32.cont [4/16] 0.0, 128
  %734 = vxpose.xlu0.b32.cont [5/16] 0.0, 128
  %735 = vxpose.xlu0.b32.cont [6/16] 0.0, 128
  %736 = vxpose.xlu0.b32.cont [7/16] 0.0, 128
  %737 = vxpose.xlu0.b32.cont [8/16] 0.0, 128
  %738 = vxpose.xlu0.b32.cont [9/16] 0.0, 128
  %739 = vxpose.xlu0.b32.cont [10/16] 0.0, 128
  %740 = vxpose.xlu0.b32.cont [11/16] 0.0, 128
  %741 = vxpose.xlu0.b32.cont [12/16] 0.0, 128
  %742 = vxpose.xlu0.b32.cont [13/16] 0.0, 128
  %743 = vxpose.xlu0.b32.cont [14/16] 0.0, 128
  %744 = vxpose.xlu0.b32.cont [15/16] 0.0, 128
  %745 = vxpose.xlu0.b32.end [16/16] 0.0, 128
  %v746 = vpop.trf.xlu0
  %v747 = vpop.trf.xlu0
  %v748 = vpop.trf.xlu0
  %v749 = vpop.trf.xlu0
  %v750 = vpop.trf.xlu0
  %v751 = vpop.trf.xlu0
  %v752 = vpop.trf.xlu0
  %v753 = vpop.trf.xlu0
  %v754 = vpop.trf.xlu0
  %v755 = vpop.trf.xlu0
  %v756 = vpop.trf.xlu0
  %v757 = vpop.trf.xlu0
  %v758 = vpop.trf.xlu0
  %v759 = vpop.trf.xlu0
  %v760 = vpop.trf.xlu0
  %v761 = vpop.trf.xlu0
  %v762 = vlaneseq
  %v763 = vshrl.u32 %v762, 7
  %v764 = vsub.s32 0, %v763
  %v765 = vrot.slane %v746, %v764
  %767 = vbcast.lane.b32.xlu0 %v765, 256
  %v768 = vpop.permute.xlu0 %767
  %v769 = vlaneseq
  %v770 = vshrl.u32 %v769, 7
  %v771 = vsub.s32 1, %v770
  %v772 = vrot.slane %v746, %v771
  %774 = vbcast.lane.b32.xlu0 %v772, 256
  %v775 = vpop.permute.xlu0 %774
  %v776 = vlaneseq
  %v777 = vshrl.u32 %v776, 7
  %v778 = vsub.s32 2, %v777
  %v779 = vrot.slane %v746, %v778
  %781 = vbcast.lane.b32.xlu0 %v779, 256
  %v782 = vpop.permute.xlu0 %781
  %v783 = vlaneseq
  %v784 = vshrl.u32 %v783, 7
  %v785 = vsub.s32 3, %v784
  %v786 = vrot.slane %v746, %v785
  %788 = vbcast.lane.b32.xlu0 %v786, 256
  %v789 = vpop.permute.xlu0 %788
  %v790 = vlaneseq
  %v791 = vshrl.u32 %v790, 7
  %v792 = vsub.s32 4, %v791
  %v793 = vrot.slane %v746, %v792
  %795 = vbcast.lane.b32.xlu0 %v793, 256
  %v796 = vpop.permute.xlu0 %795
  %v797 = vlaneseq
  %v798 = vshrl.u32 %v797, 7
  %v799 = vsub.s32 5, %v798
  %v800 = vrot.slane %v746, %v799
  %802 = vbcast.lane.b32.xlu0 %v800, 256
  %v803 = vpop.permute.xlu0 %802
  %v804 = vlaneseq
  %v805 = vshrl.u32 %v804, 7
  %v806 = vsub.s32 6, %v805
  %v807 = vrot.slane %v746, %v806
  %809 = vbcast.lane.b32.xlu0 %v807, 256
  %v810 = vpop.permute.xlu0 %809
  %v811 = vlaneseq
  %v812 = vshrl.u32 %v811, 7
  %v813 = vsub.s32 7, %v812
  %v814 = vrot.slane %v746, %v813
  %816 = vbcast.lane.b32.xlu0 %v814, 256
  %v817 = vpop.permute.xlu0 %816
  %v818 = vmul.f32 %v768, %v34
  %v819 = vmul.f32 %v775, %v35
  %v820 = vmul.f32 %v782, %v36
  %v821 = vmul.f32 %v789, %v37
  %v822 = vmul.f32 %v796, %v38
  %v823 = vmul.f32 %v803, %v39
  %v824 = vmul.f32 %v810, %v40
  %v825 = vmul.f32 %v817, %v41
  %v826 = vsel %vm83, %v818, 0.0
  %v827 = vsel %vm83, %v819, 0.0
  %v828 = vadd.f32 %v826, %v827
  %v829 = vsel %vm83, %v820, 0.0
  %v830 = vadd.f32 %v828, %v829
  %v831 = vsel %vm83, %v821, 0.0
  %v832 = vadd.f32 %v830, %v831
  %v833 = vsel %vm83, %v822, 0.0
  %v834 = vadd.f32 %v832, %v833
  %v835 = vsel %vm83, %v823, 0.0
  %v836 = vadd.f32 %v834, %v835
  %v837 = vsel %vm83, %v824, 0.0
  %v838 = vadd.f32 %v836, %v837
  %v839 = vsel %vm83, %v825, 0.0
  %v840 = vadd.f32 %v838, %v839
  %841 = vst.msk [vmem:[%s8] sm:$0xff] %vm83, %v840
  // Predicated region
  $region26: #{repeatnet_forward.4} parent=0 // pred_check
    _
  $region27: #{repeatnet_forward.4} parent=0 // pred_check_branch
    %843 = sbr.rel (0) target = $region29
  $region28: #{repeatnet_forward.4} parent=0 // pred_region
    _
  $region29: #{repeatnet_forward.4} parent=0 // pred_fallthru
    _
  // Predicated region
  $region30: #{repeatnet_forward.4} parent=0 // pred_check
    _
  $region31: #{repeatnet_forward.4} parent=0 // pred_check_branch
    %845 = sbr.rel (0) target = $region33
  $region32: #{repeatnet_forward.4} parent=0 // pred_region
    _
  $region33: #{repeatnet_forward.4} parent=0 // pred_fallthru
    _
  // Predicated region
  $region34: #{repeatnet_forward.4} parent=0 // pred_check
    _
  $region35: #{repeatnet_forward.4} parent=0 // pred_check_branch
    %847 = sbr.rel (0) target = $region37
  $region36: #{repeatnet_forward.4} parent=0 // pred_region
    _
  $region37: #{repeatnet_forward.4} parent=0 // pred_fallthru
    _
  // Predicated region
  $region38: #{repeatnet_forward.4} parent=0 // pred_check
    _
  $region39: #{repeatnet_forward.4} parent=0 // pred_check_branch
    %849 = sbr.rel (0) target = $region41
  $region40: #{repeatnet_forward.4} parent=0 // pred_region
    _
  $region41: #{repeatnet_forward.4} parent=0 // pred_fallthru
    _
  // Predicated region
  $region42: #{repeatnet_forward.4} parent=0 // pred_check
    _
  $region43: #{repeatnet_forward.4} parent=0 // pred_check_branch
    %851 = sbr.rel (0) target = $region45
  $region44: #{repeatnet_forward.4} parent=0 // pred_region
    _
  $region45: #{repeatnet_forward.4} parent=0 // pred_fallthru
    _
  // Predicated region
  $region46: #{repeatnet_forward.4} parent=0 // pred_check
    _
  $region47: #{repeatnet_forward.4} parent=0 // pred_check_branch
    %853 = sbr.rel (0) target = $region49
  $region48: #{repeatnet_forward.4} parent=0 // pred_region
    _
  $region49: #{repeatnet_forward.4} parent=0 // pred_fallthru
    _

// kernel: repeatnet_forward.3
$region0: #{repeatnet_forward.3}
  #allocation0 [shape = 'u32[]', space=smem, size = 0x4, offset = 0x4, fixed_abs, tag = 'smem constant byte address 0x4 - core index']
  #allocation1 [shape = 'u32[144,128]{1,0:T(1,128)}', space=vmem, size = 0x12000, scoped, tag = 'internal scratch']
  #allocation2 [shape = 'f32[8,32]{1,0:T(8,128)}', space=vmem, size = 0x1000, scoped, tag = 'scratch operand']
  %s0 = inlined_call_operand.vmem [shape: f32[8,3,8,32], index: 0, kind: input, shape index: {}]
  %s1 = inlined_call_operand.vmem [shape: bf16[3,32,32], index: 1, kind: input, shape index: {}]
  %s2 = inlined_call_operand.vmem [shape: f32[1,32], index: 2, kind: input, shape index: {}]
  %s3 = inlined_call_operand.vmem [shape: bf16[8,8,32], index: 3, kind: output, shape index: {0}]
  %s4 = inlined_call_operand.vmem [shape: f32[8,32], index: 4, kind: output, shape index: {1}]
  %5 = xla_tuple %s3, %s4
  %s6 = sld [smem:[#allocation0]]
  $region34: #{repeatnet_forward.3} parent=0
    _
  %s8 = ssub.s32 1, %s6
  %s9 = scalar_select 0, %s8, %s6
  // Predicated region
  $region2: #{repeatnet_forward.3} parent=0 // pred_check
    _
  $region3: #{repeatnet_forward.3} parent=0 // pred_check_branch
    %11 = sbr.rel (0) target = $region5
  $region4: #{repeatnet_forward.3} parent=0 // pred_region
    _
  $region5: #{repeatnet_forward.3} parent=0 // pred_fallthru
    _
  // Predicated region
  $region6: #{repeatnet_forward.3} parent=0 // pred_check
    _
  $region7: #{repeatnet_forward.3} parent=0 // pred_check_branch
    %13 = sbr.rel (0) target = $region9
  $region8: #{repeatnet_forward.3} parent=0 // pred_region
    _
  $region9: #{repeatnet_forward.3} parent=0 // pred_fallthru
    _
  // Predicated region
  $region10: #{repeatnet_forward.3} parent=0 // pred_check
    _
  $region11: #{repeatnet_forward.3} parent=0 // pred_check_branch
    %15 = sbr.rel (0) target = $region13
  $region12: #{repeatnet_forward.3} parent=0 // pred_region
    _
  $region13: #{repeatnet_forward.3} parent=0 // pred_fallthru
    _
  %p17 = scmp.eq.s32.totalorder 0, 0
  // Predicated region
  $region14: #{repeatnet_forward.3} parent=0 // pred_check
    %p18 = pneg %p17
  $region15: #{repeatnet_forward.3} parent=0 // pred_check_branch
    %20 = sbr.rel (%p18) target = $region17
  $region16: #{repeatnet_forward.3} parent=0 // pred_region
    %vm21 = vcmask 261120
    %22 = vst.msk [vmem:[#allocation2] sm:$0xff] %vm21, 0.0
  $region17: #{repeatnet_forward.3} parent=0 // pred_fallthru
    _
  %v23 = vld [vmem:[%s1] sm:$0xf]
  %v24 = vld [vmem:[%s1 + $0x4] sm:$0xf]
  %v25 = vld [vmem:[%s1 + $0x8] sm:$0xf]
  %v26 = vld [vmem:[%s1 + $0xc] sm:$0xf]
  %s27 = scalar_lea.vmem %s1, 16
  %v28 = vld [vmem:[%s27] sm:$0xf]
  %v29 = vld [vmem:[%s27 + $0x4] sm:$0xf]
  %v30 = vld [vmem:[%s27 + $0x8] sm:$0xf]
  %v31 = vld [vmem:[%s27 + $0xc] sm:$0xf]
  %s32 = scalar_lea.vmem %s1, 32
  %v33 = vld [vmem:[%s32] sm:$0xf]
  %v34 = vld [vmem:[%s32 + $0x4] sm:$0xf]
  %v35 = vld [vmem:[%s32 + $0x8] sm:$0xf]
  %v36 = vld [vmem:[%s32 + $0xc] sm:$0xf]
  %v37 = vld [vmem:[%s2] sm:$0x1]
  %v38 = vld [vmem:[#allocation2] sm:$0xff]
  %v39 = vpack.c.bf16 %v38, %v38
  %v44 = vunpack.c.l.b16 %v23
  %v45 = vunpack.c.l.b16 %v24
  %v46 = vunpack.c.l.b16 %v25
  %v47 = vunpack.c.l.b16 %v26
  %v48 = vpack.c.b16 %v45, %v44
  %v49 = vpack.c.b16 %v47, %v46
  %vm52 = vcmask 261120
  %v54 = vsel %vm52, %v39, 0
  %56 = vmatprep.subr.bf16.mxu0 0
  %57 = vmatpush1.bf16.msra.mxu0 %v48
  %58 = vmatprep.subr.bf16.mxu0 0
  %59 = vmatpush1.bf16.msra.mxu0 %v49
  %60 = vmatprep.subr.bf16.mxu0 0
  %61 = vmatpush1.bf16.msra.mxu0 0
  %62 = vmatprep.subr.bf16.mxu0 0
  %63 = vmatpush1.bf16.msra.mxu0 0
  %64 = vmatprep.subr.bf16.mxu0 0
  %65 = vmatpush1.bf16.msra.mxu0 0
  %66 = vmatprep.subr.bf16.mxu0 0
  %67 = vmatpush1.bf16.msra.mxu0 0
  %68 = vmatprep.subr.bf16.mxu0 0
  %69 = vmatpush1.bf16.msra.mxu0 0
  %70 = vmatprep.subr.bf16.mxu0 0
  %71 = vmatpush1.bf16.msra.mxu0 0
  %72 = vmatprep.subr.bf16.mxu0 0
  %73 = vmatpush1.bf16.msra.mxu0 0
  %74 = vmatprep.subr.bf16.mxu0 0
  %75 = vmatpush1.bf16.msra.mxu0 0
  %76 = vmatprep.subr.bf16.mxu0 0
  %77 = vmatpush1.bf16.msra.mxu0 0
  %78 = vmatprep.subr.bf16.mxu0 0
  %79 = vmatpush1.bf16.msra.mxu0 0
  %80 = vmatprep.subr.bf16.mxu0 0
  %81 = vmatpush1.bf16.msra.mxu0 0
  %82 = vmatprep.subr.bf16.mxu0 0
  %83 = vmatpush1.bf16.msra.mxu0 0
  %84 = vmatprep.subr.bf16.mxu0 0
  %85 = vmatpush1.bf16.msra.mxu0 0
  %86 = vmatprep.subr.bf16.mxu0 0
  %87 = vmatpush1.bf16.msra.mxu0 0
  %88 = vmatprep.mubr.bf16.mxu0 0
  %89 = vmatmul.mubr.bf16.gmra.mrb[0].mxu0 %v54
  %v90 = vpop.f32.mrb[0].mxu0
  %v91 = vadd.f32 0.0, %v90
  %v92 = vpop.f32.mrb[0].mxu0
  %v93 = vpop.f32.mrb[0].mxu0
  %v94 = vpop.f32.mrb[0].mxu0
  %95 = vdwg.mxu0
  %v100 = vunpack.c.l.b16 %v28
  %v101 = vunpack.c.l.b16 %v29
  %v102 = vunpack.c.l.b16 %v30
  %v103 = vunpack.c.l.b16 %v31
  %v104 = vpack.c.b16 %v101, %v100
  %v105 = vpack.c.b16 %v103, %v102
  %108 = vmatprep.subr.bf16.mxu0 0
  %109 = vmatpush1.bf16.msra.mxu0 %v104
  %110 = vmatprep.subr.bf16.mxu0 0
  %111 = vmatpush1.bf16.msra.mxu0 %v105
  %112 = vmatprep.subr.bf16.mxu0 0
  %113 = vmatpush1.bf16.msra.mxu0 0
  %114 = vmatprep.subr.bf16.mxu0 0
  %115 = vmatpush1.bf16.msra.mxu0 0
  %116 = vmatprep.subr.bf16.mxu0 0
  %117 = vmatpush1.bf16.msra.mxu0 0
  %118 = vmatprep.subr.bf16.mxu0 0
  %119 = vmatpush1.bf16.msra.mxu0 0
  %120 = vmatprep.subr.bf16.mxu0 0
  %121 = vmatpush1.bf16.msra.mxu0 0
  %122 = vmatprep.subr.bf16.mxu0 0
  %123 = vmatpush1.bf16.msra.mxu0 0
  %124 = vmatprep.subr.bf16.mxu0 0
  %125 = vmatpush1.bf16.msra.mxu0 0
  %126 = vmatprep.subr.bf16.mxu0 0
  %127 = vmatpush1.bf16.msra.mxu0 0
  %128 = vmatprep.subr.bf16.mxu0 0
  %129 = vmatpush1.bf16.msra.mxu0 0
  %130 = vmatprep.subr.bf16.mxu0 0
  %131 = vmatpush1.bf16.msra.mxu0 0
  %132 = vmatprep.subr.bf16.mxu0 0
  %133 = vmatpush1.bf16.msra.mxu0 0
  %134 = vmatprep.subr.bf16.mxu0 0
  %135 = vmatpush1.bf16.msra.mxu0 0
  %136 = vmatprep.subr.bf16.mxu0 0
  %137 = vmatpush1.bf16.msra.mxu0 0
  %138 = vmatprep.subr.bf16.mxu0 0
  %139 = vmatpush1.bf16.msra.mxu0 0
  %140 = vmatprep.mubr.bf16.mxu0 0
  %141 = vmatmul.mubr.bf16.gmra.mrb[0].mxu0 %v54
  %v142 = vpop.f32.mrb[0].mxu0
  %v143 = vadd.f32 0.0, %v142
  %v144 = vpop.f32.mrb[0].mxu0
  %v145 = vpop.f32.mrb[0].mxu0
  %v146 = vpop.f32.mrb[0].mxu0
  %147 = vdwg.mxu0
  %v149 = vlaneseq
  %v150 = vshrl.u32 %v149, 7
  %v151 = vsub.s32 0, %v150
  %v152 = vrot.slane %v37, %v151
  %v158 = vunpack.c.l.b16 %v33
  %v159 = vunpack.c.l.b16 %v34
  %v160 = vunpack.c.l.b16 %v35
  %v161 = vunpack.c.l.b16 %v36
  %v162 = vpack.c.b16 %v159, %v158
  %v163 = vpack.c.b16 %v161, %v160
  %166 = vmatprep.subr.bf16.mxu0 0
  %167 = vmatpush1.bf16.msra.mxu0 %v162
  %168 = vmatprep.subr.bf16.mxu0 0
  %169 = vmatpush1.bf16.msra.mxu0 %v163
  %170 = vmatprep.subr.bf16.mxu0 0
  %171 = vmatpush1.bf16.msra.mxu0 0
  %172 = vmatprep.subr.bf16.mxu0 0
  %173 = vmatpush1.bf16.msra.mxu0 0
  %174 = vmatprep.subr.bf16.mxu0 0
  %175 = vmatpush1.bf16.msra.mxu0 0
  %176 = vmatprep.subr.bf16.mxu0 0
  %177 = vmatpush1.bf16.msra.mxu0 0
  %178 = vmatprep.subr.bf16.mxu0 0
  %179 = vmatpush1.bf16.msra.mxu0 0
  %180 = vmatprep.subr.bf16.mxu0 0
  %181 = vmatpush1.bf16.msra.mxu0 0
  %182 = vmatprep.subr.bf16.mxu0 0
  %183 = vmatpush1.bf16.msra.mxu0 0
  %184 = vmatprep.subr.bf16.mxu0 0
  %185 = vmatpush1.bf16.msra.mxu0 0
  %186 = vmatprep.subr.bf16.mxu0 0
  %187 = vmatpush1.bf16.msra.mxu0 0
  %188 = vmatprep.subr.bf16.mxu0 0
  %189 = vmatpush1.bf16.msra.mxu0 0
  %190 = vmatprep.subr.bf16.mxu0 0
  %191 = vmatpush1.bf16.msra.mxu0 0
  %192 = vmatprep.subr.bf16.mxu0 0
  %193 = vmatpush1.bf16.msra.mxu0 0
  %194 = vmatprep.subr.bf16.mxu0 0
  %195 = vmatpush1.bf16.msra.mxu0 0
  %196 = vmatprep.subr.bf16.mxu0 0
  %197 = vmatpush1.bf16.msra.mxu0 0
  %198 = vmatprep.mubr.bf16.mxu0 0
  %199 = vmatmul.mubr.bf16.gmra.mrb[0].mxu0 %v54
  %v200 = vpop.f32.mrb[0].mxu0
  %v201 = vadd.f32 %v152, %v200
  %v202 = vpop.f32.mrb[0].mxu0
  %v203 = vpop.f32.mrb[0].mxu0
  %v204 = vpop.f32.mrb[0].mxu0
  %205 = vdwg.mxu0
  %v206 = vld [vmem:[%s0] sm:$0xff]
  %v207 = vld [vmem:[%s0 + $0x8] sm:$0xff]
  %v208 = vld [vmem:[%s0 + $0x10] sm:$0xff]
  %v209 = vadd.f32 %v206, %v91
  %v210 = vmul.f32 %v209, 0.5
  %v211 = vtanh.pop %v210
  %v212 = vmul.f32 %v211, 0.5
  %v213 = vadd.f32 %v212, 0.5
  %v214 = vadd.f32 %v207, %v143
  %v215 = vmul.f32 %v214, 0.5
  %v216 = vtanh.pop %v215
  %v217 = vmul.f32 %v216, 0.5
  %v218 = vadd.f32 %v217, 0.5
  %v219 = vmul.f32 %v213, %v201
  %v220 = vadd.f32 %v208, %v219
  %v221 = vtanh.pop %v220
  %v222 = vsub.f32 1.0, %v218
  %v223 = vmul.f32 %v222, %v221
  %v224 = vmul.f32 %v218, %v38
  %v225 = vadd.f32 %v223, %v224
  %v226 = vpack.c.bf16 %v225, %v225
  %vm227 = vcmask 257024
  %228 = vst.msk [vmem:[%s3] sm:$0xf] %vm227, %v226
  %v230 = vsel %vm52, %v226, 0
  %232 = vmatprep.subr.bf16.mxu0 0
  %233 = vmatpush1.bf16.msra.mxu0 %v48
  %234 = vmatprep.subr.bf16.mxu0 0
  %235 = vmatpush1.bf16.msra.mxu0 %v49
  %236 = vmatprep.subr.bf16.mxu0 0
  %237 = vmatpush1.bf16.msra.mxu0 0
  %238 = vmatprep.subr.bf16.mxu0 0
  %239 = vmatpush1.bf16.msra.mxu0 0
  %240 = vmatprep.subr.bf16.mxu0 0
  %241 = vmatpush1.bf16.msra.mxu0 0
  %242 = vmatprep.subr.bf16.mxu0 0
  %243 = vmatpush1.bf16.msra.mxu0 0
  %244 = vmatprep.subr.bf16.mxu0 0
  %245 = vmatpush1.bf16.msra.mxu0 0
  %246 = vmatprep.subr.bf16.mxu0 0
  %247 = vmatpush1.bf16.msra.mxu0 0
  %248 = vmatprep.subr.bf16.mxu0 0
  %249 = vmatpush1.bf16.msra.mxu0 0
  %250 = vmatprep.subr.bf16.mxu0 0
  %251 = vmatpush1.bf16.msra.mxu0 0
  %252 = vmatprep.subr.bf16.mxu0 0
  %253 = vmatpush1.bf16.msra.mxu0 0
  %254 = vmatprep.subr.bf16.mxu0 0
  %255 = vmatpush1.bf16.msra.mxu0 0
  %256 = vmatprep.subr.bf16.mxu0 0
  %257 = vmatpush1.bf16.msra.mxu0 0
  %258 = vmatprep.subr.bf16.mxu0 0
  %259 = vmatpush1.bf16.msra.mxu0 0
  %260 = vmatprep.subr.bf16.mxu0 0
  %261 = vmatpush1.bf16.msra.mxu0 0
  %262 = vmatprep.subr.bf16.mxu0 0
  %263 = vmatpush1.bf16.msra.mxu0 0
  %264 = vmatprep.mubr.bf16.mxu0 0
  %265 = vmatmul.mubr.bf16.gmra.mrb[0].mxu0 %v230
  %v266 = vpop.f32.mrb[0].mxu0
  %v267 = vadd.f32 0.0, %v266
  %v268 = vpop.f32.mrb[0].mxu0
  %v269 = vpop.f32.mrb[0].mxu0
  %v270 = vpop.f32.mrb[0].mxu0
  %271 = vdwg.mxu0
  %272 = vmatprep.subr.bf16.mxu0 0
  %273 = vmatpush1.bf16.msra.mxu0 %v104
  %274 = vmatprep.subr.bf16.mxu0 0
  %275 = vmatpush1.bf16.msra.mxu0 %v105
  %276 = vmatprep.subr.bf16.mxu0 0
  %277 = vmatpush1.bf16.msra.mxu0 0
  %278 = vmatprep.subr.bf16.mxu0 0
  %279 = vmatpush1.bf16.msra.mxu0 0
  %280 = vmatprep.subr.bf16.mxu0 0
  %281 = vmatpush1.bf16.msra.mxu0 0
  %282 = vmatprep.subr.bf16.mxu0 0
  %283 = vmatpush1.bf16.msra.mxu0 0
  %284 = vmatprep.subr.bf16.mxu0 0
  %285 = vmatpush1.bf16.msra.mxu0 0
  %286 = vmatprep.subr.bf16.mxu0 0
  %287 = vmatpush1.bf16.msra.mxu0 0
  %288 = vmatprep.subr.bf16.mxu0 0
  %289 = vmatpush1.bf16.msra.mxu0 0
  %290 = vmatprep.subr.bf16.mxu0 0
  %291 = vmatpush1.bf16.msra.mxu0 0
  %292 = vmatprep.subr.bf16.mxu0 0
  %293 = vmatpush1.bf16.msra.mxu0 0
  %294 = vmatprep.subr.bf16.mxu0 0
  %295 = vmatpush1.bf16.msra.mxu0 0
  %296 = vmatprep.subr.bf16.mxu0 0
  %297 = vmatpush1.bf16.msra.mxu0 0
  %298 = vmatprep.subr.bf16.mxu0 0
  %299 = vmatpush1.bf16.msra.mxu0 0
  %300 = vmatprep.subr.bf16.mxu0 0
  %301 = vmatpush1.bf16.msra.mxu0 0
  %302 = vmatprep.subr.bf16.mxu0 0
  %303 = vmatpush1.bf16.msra.mxu0 0
  %304 = vmatprep.mubr.bf16.mxu0 0
  %305 = vmatmul.mubr.bf16.gmra.mrb[0].mxu0 %v230
  %v306 = vpop.f32.mrb[0].mxu0
  %v307 = vadd.f32 0.0, %v306
  %v308 = vpop.f32.mrb[0].mxu0
  %v309 = vpop.f32.mrb[0].mxu0
  %v310 = vpop.f32.mrb[0].mxu0
  %311 = vdwg.mxu0
  %312 = vmatprep.subr.bf16.mxu0 0
  %313 = vmatpush1.bf16.msra.mxu0 %v162
  %314 = vmatprep.subr.bf16.mxu0 0
  %315 = vmatpush1.bf16.msra.mxu0 %v163
  %316 = vmatprep.subr.bf16.mxu0 0
  %317 = vmatpush1.bf16.msra.mxu0 0
  %318 = vmatprep.subr.bf16.mxu0 0
  %319 = vmatpush1.bf16.msra.mxu0 0
  %320 = vmatprep.subr.bf16.mxu0 0
  %321 = vmatpush1.bf16.msra.mxu0 0
  %322 = vmatprep.subr.bf16.mxu0 0
  %323 = vmatpush1.bf16.msra.mxu0 0
  %324 = vmatprep.subr.bf16.mxu0 0
  %325 = vmatpush1.bf16.msra.mxu0 0
  %326 = vmatprep.subr.bf16.mxu0 0
  %327 = vmatpush1.bf16.msra.mxu0 0
  %328 = vmatprep.subr.bf16.mxu0 0
  %329 = vmatpush1.bf16.msra.mxu0 0
  %330 = vmatprep.subr.bf16.mxu0 0
  %331 = vmatpush1.bf16.msra.mxu0 0
  %332 = vmatprep.subr.bf16.mxu0 0
  %333 = vmatpush1.bf16.msra.mxu0 0
  %334 = vmatprep.subr.bf16.mxu0 0
  %335 = vmatpush1.bf16.msra.mxu0 0
  %336 = vmatprep.subr.bf16.mxu0 0
  %337 = vmatpush1.bf16.msra.mxu0 0
  %338 = vmatprep.subr.bf16.mxu0 0
  %339 = vmatpush1.bf16.msra.mxu0 0
  %340 = vmatprep.subr.bf16.mxu0 0
  %341 = vmatpush1.bf16.msra.mxu0 0
  %342 = vmatprep.subr.bf16.mxu0 0
  %343 = vmatpush1.bf16.msra.mxu0 0
  %344 = vmatprep.mubr.bf16.mxu0 0
  %345 = vmatmul.mubr.bf16.gmra.mrb[0].mxu0 %v230
  %v346 = vpop.f32.mrb[0].mxu0
  %v347 = vadd.f32 %v152, %v346
  %v348 = vpop.f32.mrb[0].mxu0
  %v349 = vpop.f32.mrb[0].mxu0
  %v350 = vpop.f32.mrb[0].mxu0
  %351 = vdwg.mxu0
  %s352 = scalar_lea.vmem %s0, 24
  %v353 = vld [vmem:[%s352] sm:$0xff]
  %v354 = vld [vmem:[%s352 + $0x8] sm:$0xff]
  %v355 = vld [vmem:[%s352 + $0x10] sm:$0xff]
  %v356 = vadd.f32 %v353, %v267
  %v357 = vmul.f32 %v356, 0.5
  %v358 = vtanh.pop %v357
  %v359 = vmul.f32 %v358, 0.5
  %v360 = vadd.f32 %v359, 0.5
  %v361 = vadd.f32 %v354, %v307
  %v362 = vmul.f32 %v361, 0.5
  %v363 = vtanh.pop %v362
  %v364 = vmul.f32 %v363, 0.5
  %v365 = vadd.f32 %v364, 0.5
  %v366 = vmul.f32 %v360, %v347
  %v367 = vadd.f32 %v355, %v366
  %v368 = vtanh.pop %v367
  %v369 = vsub.f32 1.0, %v365
  %v370 = vmul.f32 %v369, %v368
  %v371 = vmul.f32 %v365, %v225
  %v372 = vadd.f32 %v370, %v371
  %v373 = vpack.c.bf16 %v372, %v372
  %s374 = scalar_lea.vmem %s3, 4
  %375 = vst.msk [vmem:[%s374] sm:$0xf] %vm227, %v373
  %v377 = vsel %vm52, %v373, 0
  %379 = vmatprep.subr.bf16.mxu0 0
  %380 = vmatpush1.bf16.msra.mxu0 %v48
  %381 = vmatprep.subr.bf16.mxu0 0
  %382 = vmatpush1.bf16.msra.mxu0 %v49
  %383 = vmatprep.subr.bf16.mxu0 0
  %384 = vmatpush1.bf16.msra.mxu0 0
  %385 = vmatprep.subr.bf16.mxu0 0
  %386 = vmatpush1.bf16.msra.mxu0 0
  %387 = vmatprep.subr.bf16.mxu0 0
  %388 = vmatpush1.bf16.msra.mxu0 0
  %389 = vmatprep.subr.bf16.mxu0 0
  %390 = vmatpush1.bf16.msra.mxu0 0
  %391 = vmatprep.subr.bf16.mxu0 0
  %392 = vmatpush1.bf16.msra.mxu0 0
  %393 = vmatprep.subr.bf16.mxu0 0
  %394 = vmatpush1.bf16.msra.mxu0 0
  %395 = vmatprep.subr.bf16.mxu0 0
  %396 = vmatpush1.bf16.msra.mxu0 0
  %397 = vmatprep.subr.bf16.mxu0 0
  %398 = vmatpush1.bf16.msra.mxu0 0
  %399 = vmatprep.subr.bf16.mxu0 0
  %400 = vmatpush1.bf16.msra.mxu0 0
  %401 = vmatprep.subr.bf16.mxu0 0
  %402 = vmatpush1.bf16.msra.mxu0 0
  %403 = vmatprep.subr.bf16.mxu0 0
  %404 = vmatpush1.bf16.msra.mxu0 0
  %405 = vmatprep.subr.bf16.mxu0 0
  %406 = vmatpush1.bf16.msra.mxu0 0
  %407 = vmatprep.subr.bf16.mxu0 0
  %408 = vmatpush1.bf16.msra.mxu0 0
  %409 = vmatprep.subr.bf16.mxu0 0
  %410 = vmatpush1.bf16.msra.mxu0 0
  %411 = vmatprep.mubr.bf16.mxu0 0
  %412 = vmatmul.mubr.bf16.gmra.mrb[0].mxu0 %v377
  %v413 = vpop.f32.mrb[0].mxu0
  %v414 = vadd.f32 0.0, %v413
  %v415 = vpop.f32.mrb[0].mxu0
  %v416 = vpop.f32.mrb[0].mxu0
  %v417 = vpop.f32.mrb[0].mxu0
  %418 = vdwg.mxu0
  %419 = vmatprep.subr.bf16.mxu0 0
  %420 = vmatpush1.bf16.msra.mxu0 %v104
  %421 = vmatprep.subr.bf16.mxu0 0
  %422 = vmatpush1.bf16.msra.mxu0 %v105
  %423 = vmatprep.subr.bf16.mxu0 0
  %424 = vmatpush1.bf16.msra.mxu0 0
  %425 = vmatprep.subr.bf16.mxu0 0
  %426 = vmatpush1.bf16.msra.mxu0 0
  %427 = vmatprep.subr.bf16.mxu0 0
  %428 = vmatpush1.bf16.msra.mxu0 0
  %429 = vmatprep.subr.bf16.mxu0 0
  %430 = vmatpush1.bf16.msra.mxu0 0
  %431 = vmatprep.subr.bf16.mxu0 0
  %432 = vmatpush1.bf16.msra.mxu0 0
  %433 = vmatprep.subr.bf16.mxu0 0
  %434 = vmatpush1.bf16.msra.mxu0 0
  %435 = vmatprep.subr.bf16.mxu0 0
  %436 = vmatpush1.bf16.msra.mxu0 0
  %437 = vmatprep.subr.bf16.mxu0 0
  %438 = vmatpush1.bf16.msra.mxu0 0
  %439 = vmatprep.subr.bf16.mxu0 0
  %440 = vmatpush1.bf16.msra.mxu0 0
  %441 = vmatprep.subr.bf16.mxu0 0
  %442 = vmatpush1.bf16.msra.mxu0 0
  %443 = vmatprep.subr.bf16.mxu0 0
  %444 = vmatpush1.bf16.msra.mxu0 0
  %445 = vmatprep.subr.bf16.mxu0 0
  %446 = vmatpush1.bf16.msra.mxu0 0
  %447 = vmatprep.subr.bf16.mxu0 0
  %448 = vmatpush1.bf16.msra.mxu0 0
  %449 = vmatprep.subr.bf16.mxu0 0
  %450 = vmatpush1.bf16.msra.mxu0 0
  %451 = vmatprep.mubr.bf16.mxu0 0
  %452 = vmatmul.mubr.bf16.gmra.mrb[0].mxu0 %v377
  %v453 = vpop.f32.mrb[0].mxu0
  %v454 = vadd.f32 0.0, %v453
  %v455 = vpop.f32.mrb[0].mxu0
  %v456 = vpop.f32.mrb[0].mxu0
  %v457 = vpop.f32.mrb[0].mxu0
  %458 = vdwg.mxu0
  %459 = vmatprep.subr.bf16.mxu0 0
  %460 = vmatpush1.bf16.msra.mxu0 %v162
  %461 = vmatprep.subr.bf16.mxu0 0
  %462 = vmatpush1.bf16.msra.mxu0 %v163
  %463 = vmatprep.subr.bf16.mxu0 0
  %464 = vmatpush1.bf16.msra.mxu0 0
  %465 = vmatprep.subr.bf16.mxu0 0
  %466 = vmatpush1.bf16.msra.mxu0 0
  %467 = vmatprep.subr.bf16.mxu0 0
  %468 = vmatpush1.bf16.msra.mxu0 0
  %469 = vmatprep.subr.bf16.mxu0 0
  %470 = vmatpush1.bf16.msra.mxu0 0
  %471 = vmatprep.subr.bf16.mxu0 0
  %472 = vmatpush1.bf16.msra.mxu0 0
  %473 = vmatprep.subr.bf16.mxu0 0
  %474 = vmatpush1.bf16.msra.mxu0 0
  %475 = vmatprep.subr.bf16.mxu0 0
  %476 = vmatpush1.bf16.msra.mxu0 0
  %477 = vmatprep.subr.bf16.mxu0 0
  %478 = vmatpush1.bf16.msra.mxu0 0
  %479 = vmatprep.subr.bf16.mxu0 0
  %480 = vmatpush1.bf16.msra.mxu0 0
  %481 = vmatprep.subr.bf16.mxu0 0
  %482 = vmatpush1.bf16.msra.mxu0 0
  %483 = vmatprep.subr.bf16.mxu0 0
  %484 = vmatpush1.bf16.msra.mxu0 0
  %485 = vmatprep.subr.bf16.mxu0 0
  %486 = vmatpush1.bf16.msra.mxu0 0
  %487 = vmatprep.subr.bf16.mxu0 0
  %488 = vmatpush1.bf16.msra.mxu0 0
  %489 = vmatprep.subr.bf16.mxu0 0
  %490 = vmatpush1.bf16.msra.mxu0 0
  %491 = vmatprep.mubr.bf16.mxu0 0
  %492 = vmatmul.mubr.bf16.gmra.mrb[0].mxu0 %v377
  %v493 = vpop.f32.mrb[0].mxu0
  %v494 = vadd.f32 %v152, %v493
  %v495 = vpop.f32.mrb[0].mxu0
  %v496 = vpop.f32.mrb[0].mxu0
  %v497 = vpop.f32.mrb[0].mxu0
  %498 = vdwg.mxu0
  %s499 = scalar_lea.vmem %s0, 48
  %v500 = vld [vmem:[%s499] sm:$0xff]
  %v501 = vld [vmem:[%s499 + $0x8] sm:$0xff]
  %v502 = vld [vmem:[%s499 + $0x10] sm:$0xff]
  %v503 = vadd.f32 %v500, %v414
  %v504 = vmul.f32 %v503, 0.5
  %v505 = vtanh.pop %v504
  %v506 = vmul.f32 %v505, 0.5
  %v507 = vadd.f32 %v506, 0.5
  %v508 = vadd.f32 %v501, %v454
  %v509 = vmul.f32 %v508, 0.5
  %v510 = vtanh.pop %v509
  %v511 = vmul.f32 %v510, 0.5
  %v512 = vadd.f32 %v511, 0.5
  %v513 = vmul.f32 %v507, %v494
  %v514 = vadd.f32 %v502, %v513
  %v515 = vtanh.pop %v514
  %v516 = vsub.f32 1.0, %v512
  %v517 = vmul.f32 %v516, %v515
  %v518 = vmul.f32 %v512, %v372
  %v519 = vadd.f32 %v517, %v518
  %v520 = vpack.c.bf16 %v519, %v519
  %s521 = scalar_lea.vmem %s3, 8
  %522 = vst.msk [vmem:[%s521] sm:$0xf] %vm227, %v520
  %v524 = vsel %vm52, %v520, 0
  %526 = vmatprep.subr.bf16.mxu0 0
  %527 = vmatpush1.bf16.msra.mxu0 %v48
  %528 = vmatprep.subr.bf16.mxu0 0
  %529 = vmatpush1.bf16.msra.mxu0 %v49
  %530 = vmatprep.subr.bf16.mxu0 0
  %531 = vmatpush1.bf16.msra.mxu0 0
  %532 = vmatprep.subr.bf16.mxu0 0
  %533 = vmatpush1.bf16.msra.mxu0 0
  %534 = vmatprep.subr.bf16.mxu0 0
  %535 = vmatpush1.bf16.msra.mxu0 0
  %536 = vmatprep.subr.bf16.mxu0 0
  %537 = vmatpush1.bf16.msra.mxu0 0
  %538 = vmatprep.subr.bf16.mxu0 0
  %539 = vmatpush1.bf16.msra.mxu0 0
  %540 = vmatprep.subr.bf16.mxu0 0
  %541 = vmatpush1.bf16.msra.mxu0 0
  %542 = vmatprep.subr.bf16.mxu0 0
  %543 = vmatpush1.bf16.msra.mxu0 0
  %544 = vmatprep.subr.bf16.mxu0 0
  %545 = vmatpush1.bf16.msra.mxu0 0
  %546 = vmatprep.subr.bf16.mxu0 0
  %547 = vmatpush1.bf16.msra.mxu0 0
  %548 = vmatprep.subr.bf16.mxu0 0
  %549 = vmatpush1.bf16.msra.mxu0 0
  %550 = vmatprep.subr.bf16.mxu0 0
  %551 = vmatpush1.bf16.msra.mxu0 0
  %552 = vmatprep.subr.bf16.mxu0 0
  %553 = vmatpush1.bf16.msra.mxu0 0
  %554 = vmatprep.subr.bf16.mxu0 0
  %555 = vmatpush1.bf16.msra.mxu0 0
  %556 = vmatprep.subr.bf16.mxu0 0
  %557 = vmatpush1.bf16.msra.mxu0 0
  %558 = vmatprep.mubr.bf16.mxu0 0
  %559 = vmatmul.mubr.bf16.gmra.mrb[0].mxu0 %v524
  %v560 = vpop.f32.mrb[0].mxu0
  %v561 = vadd.f32 0.0, %v560
  %v562 = vpop.f32.mrb[0].mxu0
  %v563 = vpop.f32.mrb[0].mxu0
  %v564 = vpop.f32.mrb[0].mxu0
  %565 = vdwg.mxu0
  %566 = vmatprep.subr.bf16.mxu0 0
  %567 = vmatpush1.bf16.msra.mxu0 %v104
  %568 = vmatprep.subr.bf16.mxu0 0
  %569 = vmatpush1.bf16.msra.mxu0 %v105
  %570 = vmatprep.subr.bf16.mxu0 0
  %571 = vmatpush1.bf16.msra.mxu0 0
  %572 = vmatprep.subr.bf16.mxu0 0
  %573 = vmatpush1.bf16.msra.mxu0 0
  %574 = vmatprep.subr.bf16.mxu0 0
  %575 = vmatpush1.bf16.msra.mxu0 0
  %576 = vmatprep.subr.bf16.mxu0 0
  %577 = vmatpush1.bf16.msra.mxu0 0
  %578 = vmatprep.subr.bf16.mxu0 0
  %579 = vmatpush1.bf16.msra.mxu0 0
  %580 = vmatprep.subr.bf16.mxu0 0
  %581 = vmatpush1.bf16.msra.mxu0 0
  %582 = vmatprep.subr.bf16.mxu0 0
  %583 = vmatpush1.bf16.msra.mxu0 0
  %584 = vmatprep.subr.bf16.mxu0 0
  %585 = vmatpush1.bf16.msra.mxu0 0
  %586 = vmatprep.subr.bf16.mxu0 0
  %587 = vmatpush1.bf16.msra.mxu0 0
  %588 = vmatprep.subr.bf16.mxu0 0
  %589 = vmatpush1.bf16.msra.mxu0 0
  %590 = vmatprep.subr.bf16.mxu0 0
  %591 = vmatpush1.bf16.msra.mxu0 0
  %592 = vmatprep.subr.bf16.mxu0 0
  %593 = vmatpush1.bf16.msra.mxu0 0
  %594 = vmatprep.subr.bf16.mxu0 0
  %595 = vmatpush1.bf16.msra.mxu0 0
  %596 = vmatprep.subr.bf16.mxu0 0
  %597 = vmatpush1.bf16.msra.mxu0 0
  %598 = vmatprep.mubr.bf16.mxu0 0
  %599 = vmatmul.mubr.bf16.gmra.mrb[0].mxu0 %v524
  %v600 = vpop.f32.mrb[0].mxu0
  %v601 = vadd.f32 0.0, %v600
  %v602 = vpop.f32.mrb[0].mxu0
  %v603 = vpop.f32.mrb[0].mxu0
  %v604 = vpop.f32.mrb[0].mxu0
  %605 = vdwg.mxu0
  %606 = vmatprep.subr.bf16.mxu0 0
  %607 = vmatpush1.bf16.msra.mxu0 %v162
  %608 = vmatprep.subr.bf16.mxu0 0
  %609 = vmatpush1.bf16.msra.mxu0 %v163
  %610 = vmatprep.subr.bf16.mxu0 0
  %611 = vmatpush1.bf16.msra.mxu0 0
  %612 = vmatprep.subr.bf16.mxu0 0
  %613 = vmatpush1.bf16.msra.mxu0 0
  %614 = vmatprep.subr.bf16.mxu0 0
  %615 = vmatpush1.bf16.msra.mxu0 0
  %616 = vmatprep.subr.bf16.mxu0 0
  %617 = vmatpush1.bf16.msra.mxu0 0
  %618 = vmatprep.subr.bf16.mxu0 0
  %619 = vmatpush1.bf16.msra.mxu0 0
  %620 = vmatprep.subr.bf16.mxu0 0
  %621 = vmatpush1.bf16.msra.mxu0 0
  %622 = vmatprep.subr.bf16.mxu0 0
  %623 = vmatpush1.bf16.msra.mxu0 0
  %624 = vmatprep.subr.bf16.mxu0 0
  %625 = vmatpush1.bf16.msra.mxu0 0
  %626 = vmatprep.subr.bf16.mxu0 0
  %627 = vmatpush1.bf16.msra.mxu0 0
  %628 = vmatprep.subr.bf16.mxu0 0
  %629 = vmatpush1.bf16.msra.mxu0 0
  %630 = vmatprep.subr.bf16.mxu0 0
  %631 = vmatpush1.bf16.msra.mxu0 0
  %632 = vmatprep.subr.bf16.mxu0 0
  %633 = vmatpush1.bf16.msra.mxu0 0
  %634 = vmatprep.subr.bf16.mxu0 0
  %635 = vmatpush1.bf16.msra.mxu0 0
  %636 = vmatprep.subr.bf16.mxu0 0
  %637 = vmatpush1.bf16.msra.mxu0 0
  %638 = vmatprep.mubr.bf16.mxu0 0
  %639 = vmatmul.mubr.bf16.gmra.mrb[0].mxu0 %v524
  %v640 = vpop.f32.mrb[0].mxu0
  %v641 = vadd.f32 %v152, %v640
  %v642 = vpop.f32.mrb[0].mxu0
  %v643 = vpop.f32.mrb[0].mxu0
  %v644 = vpop.f32.mrb[0].mxu0
  %645 = vdwg.mxu0
  %s646 = scalar_lea.vmem %s0, 72
  %v647 = vld [vmem:[%s646] sm:$0xff]
  %v648 = vld [vmem:[%s646 + $0x8] sm:$0xff]
  %v649 = vld [vmem:[%s646 + $0x10] sm:$0xff]
  %v650 = vadd.f32 %v647, %v561
  %v651 = vmul.f32 %v650, 0.5
  %v652 = vtanh.pop %v651
  %v653 = vmul.f32 %v652, 0.5
  %v654 = vadd.f32 %v653, 0.5
  %v655 = vadd.f32 %v648, %v601
  %v656 = vmul.f32 %v655, 0.5
  %v657 = vtanh.pop %v656
  %v658 = vmul.f32 %v657, 0.5
  %v659 = vadd.f32 %v658, 0.5
  %v660 = vmul.f32 %v654, %v641
  %v661 = vadd.f32 %v649, %v660
  %v662 = vtanh.pop %v661
  %v663 = vsub.f32 1.0, %v659
  %v664 = vmul.f32 %v663, %v662
  %v665 = vmul.f32 %v659, %v519
  %v666 = vadd.f32 %v664, %v665
  %v667 = vpack.c.bf16 %v666, %v666
  %s668 = scalar_lea.vmem %s3, 12
  %669 = vst.msk [vmem:[%s668] sm:$0xf] %vm227, %v667
  %v671 = vsel %vm52, %v667, 0
  %673 = vmatprep.subr.bf16.mxu0 0
  %674 = vmatpush1.bf16.msra.mxu0 %v48
  %675 = vmatprep.subr.bf16.mxu0 0
  %676 = vmatpush1.bf16.msra.mxu0 %v49
  %677 = vmatprep.subr.bf16.mxu0 0
  %678 = vmatpush1.bf16.msra.mxu0 0
  %679 = vmatprep.subr.bf16.mxu0 0
  %680 = vmatpush1.bf16.msra.mxu0 0
  %681 = vmatprep.subr.bf16.mxu0 0
  %682 = vmatpush1.bf16.msra.mxu0 0
  %683 = vmatprep.subr.bf16.mxu0 0
  %684 = vmatpush1.bf16.msra.mxu0 0
  %685 = vmatprep.subr.bf16.mxu0 0
  %686 = vmatpush1.bf16.msra.mxu0 0
  %687 = vmatprep.subr.bf16.mxu0 0
  %688 = vmatpush1.bf16.msra.mxu0 0
  %689 = vmatprep.subr.bf16.mxu0 0
  %690 = vmatpush1.bf16.msra.mxu0 0
  %691 = vmatprep.subr.bf16.mxu0 0
  %692 = vmatpush1.bf16.msra.mxu0 0
  %693 = vmatprep.subr.bf16.mxu0 0
  %694 = vmatpush1.bf16.msra.mxu0 0
  %695 = vmatprep.subr.bf16.mxu0 0
  %696 = vmatpush1.bf16.msra.mxu0 0
  %697 = vmatprep.subr.bf16.mxu0 0
  %698 = vmatpush1.bf16.msra.mxu0 0
  %699 = vmatprep.subr.bf16.mxu0 0
  %700 = vmatpush1.bf16.msra.mxu0 0
  %701 = vmatprep.subr.bf16.mxu0 0
  %702 = vmatpush1.bf16.msra.mxu0 0
  %703 = vmatprep.subr.bf16.mxu0 0
  %704 = vmatpush1.bf16.msra.mxu0 0
  %705 = vmatprep.mubr.bf16.mxu0 0
  %706 = vmatmul.mubr.bf16.gmra.mrb[0].mxu0 %v671
  %v707 = vpop.f32.mrb[0].mxu0
  %v708 = vadd.f32 0.0, %v707
  %v709 = vpop.f32.mrb[0].mxu0
  %v710 = vpop.f32.mrb[0].mxu0
  %v711 = vpop.f32.mrb[0].mxu0
  %712 = vdwg.mxu0
  %713 = vmatprep.subr.bf16.mxu0 0
  %714 = vmatpush1.bf16.msra.mxu0 %v104
  %715 = vmatprep.subr.bf16.mxu0 0
  %716 = vmatpush1.bf16.msra.mxu0 %v105
  %717 = vmatprep.subr.bf16.mxu0 0
  %718 = vmatpush1.bf16.msra.mxu0 0
  %719 = vmatprep.subr.bf16.mxu0 0
  %720 = vmatpush1.bf16.msra.mxu0 0
  %721 = vmatprep.subr.bf16.mxu0 0
  %722 = vmatpush1.bf16.msra.mxu0 0
  %723 = vmatprep.subr.bf16.mxu0 0
  %724 = vmatpush1.bf16.msra.mxu0 0
  %725 = vmatprep.subr.bf16.mxu0 0
  %726 = vmatpush1.bf16.msra.mxu0 0
  %727 = vmatprep.subr.bf16.mxu0 0
  %728 = vmatpush1.bf16.msra.mxu0 0
  %729 = vmatprep.subr.bf16.mxu0 0
  %730 = vmatpush1.bf16.msra.mxu0 0
  %731 = vmatprep.subr.bf16.mxu0 0
  %732 = vmatpush1.bf16.msra.mxu0 0
  %733 = vmatprep.subr.bf16.mxu0 0
  %734 = vmatpush1.bf16.msra.mxu0 0
  %735 = vmatprep.subr.bf16.mxu0 0
  %736 = vmatpush1.bf16.msra.mxu0 0
  %737 = vmatprep.subr.bf16.mxu0 0
  %738 = vmatpush1.bf16.msra.mxu0 0
  %739 = vmatprep.subr.bf16.mxu0 0
  %740 = vmatpush1.bf16.msra.mxu0 0
  %741 = vmatprep.subr.bf16.mxu0 0
  %742 = vmatpush1.bf16.msra.mxu0 0
  %743 = vmatprep.subr.bf16.mxu0 0
  %744 = vmatpush1.bf16.msra.mxu0 0
  %745 = vmatprep.mubr.bf16.mxu0 0
  %746 = vmatmul.mubr.bf16.gmra.mrb[0].mxu0 %v671
  %v747 = vpop.f32.mrb[0].mxu0
  %v748 = vadd.f32 0.0, %v747
  %v749 = vpop.f32.mrb[0].mxu0
  %v750 = vpop.f32.mrb[0].mxu0
  %v751 = vpop.f32.mrb[0].mxu0
  %752 = vdwg.mxu0
  %753 = vmatprep.subr.bf16.mxu0 0
  %754 = vmatpush1.bf16.msra.mxu0 %v162
  %755 = vmatprep.subr.bf16.mxu0 0
  %756 = vmatpush1.bf16.msra.mxu0 %v163
  %757 = vmatprep.subr.bf16.mxu0 0
  %758 = vmatpush1.bf16.msra.mxu0 0
  %759 = vmatprep.subr.bf16.mxu0 0
  %760 = vmatpush1.bf16.msra.mxu0 0
  %761 = vmatprep.subr.bf16.mxu0 0
  %762 = vmatpush1.bf16.msra.mxu0 0
  %763 = vmatprep.subr.bf16.mxu0 0
  %764 = vmatpush1.bf16.msra.mxu0 0
  %765 = vmatprep.subr.bf16.mxu0 0
  %766 = vmatpush1.bf16.msra.mxu0 0
  %767 = vmatprep.subr.bf16.mxu0 0
  %768 = vmatpush1.bf16.msra.mxu0 0
  %769 = vmatprep.subr.bf16.mxu0 0
  %770 = vmatpush1.bf16.msra.mxu0 0
  %771 = vmatprep.subr.bf16.mxu0 0
  %772 = vmatpush1.bf16.msra.mxu0 0
  %773 = vmatprep.subr.bf16.mxu0 0
  %774 = vmatpush1.bf16.msra.mxu0 0
  %775 = vmatprep.subr.bf16.mxu0 0
  %776 = vmatpush1.bf16.msra.mxu0 0
  %777 = vmatprep.subr.bf16.mxu0 0
  %778 = vmatpush1.bf16.msra.mxu0 0
  %779 = vmatprep.subr.bf16.mxu0 0
  %780 = vmatpush1.bf16.msra.mxu0 0
  %781 = vmatprep.subr.bf16.mxu0 0
  %782 = vmatpush1.bf16.msra.mxu0 0
  %783 = vmatprep.subr.bf16.mxu0 0
  %784 = vmatpush1.bf16.msra.mxu0 0
  %785 = vmatprep.mubr.bf16.mxu0 0
  %786 = vmatmul.mubr.bf16.gmra.mrb[0].mxu0 %v671
  %v787 = vpop.f32.mrb[0].mxu0
  %v788 = vadd.f32 %v152, %v787
  %v789 = vpop.f32.mrb[0].mxu0
  %v790 = vpop.f32.mrb[0].mxu0
  %v791 = vpop.f32.mrb[0].mxu0
  %792 = vdwg.mxu0
  %s793 = scalar_lea.vmem %s0, 96
  %v794 = vld [vmem:[%s793] sm:$0xff]
  %v795 = vld [vmem:[%s793 + $0x8] sm:$0xff]
  %v796 = vld [vmem:[%s793 + $0x10] sm:$0xff]
  %v797 = vadd.f32 %v794, %v708
  %v798 = vmul.f32 %v797, 0.5
  %v799 = vtanh.pop %v798
  %v800 = vmul.f32 %v799, 0.5
  %v801 = vadd.f32 %v800, 0.5
  %v802 = vadd.f32 %v795, %v748
  %v803 = vmul.f32 %v802, 0.5
  %v804 = vtanh.pop %v803
  %v805 = vmul.f32 %v804, 0.5
  %v806 = vadd.f32 %v805, 0.5
  %v807 = vmul.f32 %v801, %v788
  %v808 = vadd.f32 %v796, %v807
  %v809 = vtanh.pop %v808
  %v810 = vsub.f32 1.0, %v806
  %v811 = vmul.f32 %v810, %v809
  %v812 = vmul.f32 %v806, %v666
  %v813 = vadd.f32 %v811, %v812
  %v814 = vpack.c.bf16 %v813, %v813
  %s815 = scalar_lea.vmem %s3, 16
  %816 = vst.msk [vmem:[%s815] sm:$0xf] %vm227, %v814
  %v818 = vsel %vm52, %v814, 0
  %820 = vmatprep.subr.bf16.mxu0 0
  %821 = vmatpush1.bf16.msra.mxu0 %v48
  %822 = vmatprep.subr.bf16.mxu0 0
  %823 = vmatpush1.bf16.msra.mxu0 %v49
  %824 = vmatprep.subr.bf16.mxu0 0
  %825 = vmatpush1.bf16.msra.mxu0 0
  %826 = vmatprep.subr.bf16.mxu0 0
  %827 = vmatpush1.bf16.msra.mxu0 0
  %828 = vmatprep.subr.bf16.mxu0 0
  %829 = vmatpush1.bf16.msra.mxu0 0
  %830 = vmatprep.subr.bf16.mxu0 0
  %831 = vmatpush1.bf16.msra.mxu0 0
  %832 = vmatprep.subr.bf16.mxu0 0
  %833 = vmatpush1.bf16.msra.mxu0 0
  %834 = vmatprep.subr.bf16.mxu0 0
  %835 = vmatpush1.bf16.msra.mxu0 0
  %836 = vmatprep.subr.bf16.mxu0 0
  %837 = vmatpush1.bf16.msra.mxu0 0
  %838 = vmatprep.subr.bf16.mxu0 0
  %839 = vmatpush1.bf16.msra.mxu0 0
  %840 = vmatprep.subr.bf16.mxu0 0
  %841 = vmatpush1.bf16.msra.mxu0 0
  %842 = vmatprep.subr.bf16.mxu0 0
  %843 = vmatpush1.bf16.msra.mxu0 0
  %844 = vmatprep.subr.bf16.mxu0 0
  %845 = vmatpush1.bf16.msra.mxu0 0
  %846 = vmatprep.subr.bf16.mxu0 0
  %847 = vmatpush1.bf16.msra.mxu0 0
  %848 = vmatprep.subr.bf16.mxu0 0
  %849 = vmatpush1.bf16.msra.mxu0 0
  %850 = vmatprep.subr.bf16.mxu0 0
  %851 = vmatpush1.bf16.msra.mxu0 0
  %852 = vmatprep.mubr.bf16.mxu0 0
  %853 = vmatmul.mubr.bf16.gmra.mrb[0].mxu0 %v818
  %v854 = vpop.f32.mrb[0].mxu0
  %v855 = vadd.f32 0.0, %v854
  %v856 = vpop.f32.mrb[0].mxu0
  %v857 = vpop.f32.mrb[0].mxu0
  %v858 = vpop.f32.mrb[0].mxu0
  %859 = vdwg.mxu0
  %860 = vmatprep.subr.bf16.mxu0 0
  %861 = vmatpush1.bf16.msra.mxu0 %v104
  %862 = vmatprep.subr.bf16.mxu0 0
  %863 = vmatpush1.bf16.msra.mxu0 %v105
  %864 = vmatprep.subr.bf16.mxu0 0
  %865 = vmatpush1.bf16.msra.mxu0 0
  %866 = vmatprep.subr.bf16.mxu0 0
  %867 = vmatpush1.bf16.msra.mxu0 0
  %868 = vmatprep.subr.bf16.mxu0 0
  %869 = vmatpush1.bf16.msra.mxu0 0
  %870 = vmatprep.subr.bf16.mxu0 0
  %871 = vmatpush1.bf16.msra.mxu0 0
  %872 = vmatprep.subr.bf16.mxu0 0
  %873 = vmatpush1.bf16.msra.mxu0 0
  %874 = vmatprep.subr.bf16.mxu0 0
  %875 = vmatpush1.bf16.msra.mxu0 0
  %876 = vmatprep.subr.bf16.mxu0 0
  %877 = vmatpush1.bf16.msra.mxu0 0
  %878 = vmatprep.subr.bf16.mxu0 0
  %879 = vmatpush1.bf16.msra.mxu0 0
  %880 = vmatprep.subr.bf16.mxu0 0
  %881 = vmatpush1.bf16.msra.mxu0 0
  %882 = vmatprep.subr.bf16.mxu0 0
  %883 = vmatpush1.bf16.msra.mxu0 0
  %884 = vmatprep.subr.bf16.mxu0 0
  %885 = vmatpush1.bf16.msra.mxu0 0
  %886 = vmatprep.subr.bf16.mxu0 0
  %887 = vmatpush1.bf16.msra.mxu0 0
  %888 = vmatprep.subr.bf16.mxu0 0
  %889 = vmatpush1.bf16.msra.mxu0 0
  %890 = vmatprep.subr.bf16.mxu0 0
  %891 = vmatpush1.bf16.msra.mxu0 0
  %892 = vmatprep.mubr.bf16.mxu0 0
  %893 = vmatmul.mubr.bf16.gmra.mrb[0].mxu0 %v818
  %v894 = vpop.f32.mrb[0].mxu0
  %v895 = vadd.f32 0.0, %v894
  %v896 = vpop.f32.mrb[0].mxu0
  %v897 = vpop.f32.mrb[0].mxu0
  %v898 = vpop.f32.mrb[0].mxu0
  %899 = vdwg.mxu0
  %900 = vmatprep.subr.bf16.mxu0 0
  %901 = vmatpush1.bf16.msra.mxu0 %v162
  %902 = vmatprep.subr.bf16.mxu0 0
  %903 = vmatpush1.bf16.msra.mxu0 %v163
  %904 = vmatprep.subr.bf16.mxu0 0
  %905 = vmatpush1.bf16.msra.mxu0 0
  %906 = vmatprep.subr.bf16.mxu0 0
  %907 = vmatpush1.bf16.msra.mxu0 0
  %908 = vmatprep.subr.bf16.mxu0 0
  %909 = vmatpush1.bf16.msra.mxu0 0
  %910 = vmatprep.subr.bf16.mxu0 0
  %911 = vmatpush1.bf16.msra.mxu0 0
  %912 = vmatprep.subr.bf16.mxu0 0
  %913 = vmatpush1.bf16.msra.mxu0 0
  %914 = vmatprep.subr.bf16.mxu0 0
  %915 = vmatpush1.bf16.msra.mxu0 0
  %916 = vmatprep.subr.bf16.mxu0 0
  %917 = vmatpush1.bf16.msra.mxu0 0
  %918 = vmatprep.subr.bf16.mxu0 0
  %919 = vmatpush1.bf16.msra.mxu0 0
  %920 = vmatprep.subr.bf16.mxu0 0
  %921 = vmatpush1.bf16.msra.mxu0 0
  %922 = vmatprep.subr.bf16.mxu0 0
  %923 = vmatpush1.bf16.msra.mxu0 0
  %924 = vmatprep.subr.bf16.mxu0 0
  %925 = vmatpush1.bf16.msra.mxu0 0
  %926 = vmatprep.subr.bf16.mxu0 0
  %927 = vmatpush1.bf16.msra.mxu0 0
  %928 = vmatprep.subr.bf16.mxu0 0
  %929 = vmatpush1.bf16.msra.mxu0 0
  %930 = vmatprep.subr.bf16.mxu0 0
  %931 = vmatpush1.bf16.msra.mxu0 0
  %932 = vmatprep.mubr.bf16.mxu0 0
  %933 = vmatmul.mubr.bf16.gmra.mrb[0].mxu0 %v818
  %v934 = vpop.f32.mrb[0].mxu0
  %v935 = vadd.f32 %v152, %v934
  %v936 = vpop.f32.mrb[0].mxu0
  %v937 = vpop.f32.mrb[0].mxu0
  %v938 = vpop.f32.mrb[0].mxu0
  %939 = vdwg.mxu0
  %s940 = scalar_lea.vmem %s0, 120
  %v941 = vld [vmem:[%s940] sm:$0xff]
  %v942 = vld [vmem:[%s940 + $0x8] sm:$0xff]
  %v943 = vld [vmem:[%s940 + $0x10] sm:$0xff]
  %v944 = vadd.f32 %v941, %v855
  %v945 = vmul.f32 %v944, 0.5
  %v946 = vtanh.pop %v945
  %v947 = vmul.f32 %v946, 0.5
  %v948 = vadd.f32 %v947, 0.5
  %v949 = vadd.f32 %v942, %v895
  %v950 = vmul.f32 %v949, 0.5
  %v951 = vtanh.pop %v950
  %v952 = vmul.f32 %v951, 0.5
  %v953 = vadd.f32 %v952, 0.5
  %v954 = vmul.f32 %v948, %v935
  %v955 = vadd.f32 %v943, %v954
  %v956 = vtanh.pop %v955
  %v957 = vsub.f32 1.0, %v953
  %v958 = vmul.f32 %v957, %v956
  %v959 = vmul.f32 %v953, %v813
  %v960 = vadd.f32 %v958, %v959
  %v961 = vpack.c.bf16 %v960, %v960
  %s962 = scalar_lea.vmem %s3, 20
  %963 = vst.msk [vmem:[%s962] sm:$0xf] %vm227, %v961
  %v965 = vsel %vm52, %v961, 0
  %967 = vmatprep.subr.bf16.mxu0 0
  %968 = vmatpush1.bf16.msra.mxu0 %v48
  %969 = vmatprep.subr.bf16.mxu0 0
  %970 = vmatpush1.bf16.msra.mxu0 %v49
  %971 = vmatprep.subr.bf16.mxu0 0
  %972 = vmatpush1.bf16.msra.mxu0 0
  %973 = vmatprep.subr.bf16.mxu0 0
  %974 = vmatpush1.bf16.msra.mxu0 0
  %975 = vmatprep.subr.bf16.mxu0 0
  %976 = vmatpush1.bf16.msra.mxu0 0
  %977 = vmatprep.subr.bf16.mxu0 0
  %978 = vmatpush1.bf16.msra.mxu0 0
  %979 = vmatprep.subr.bf16.mxu0 0
  %980 = vmatpush1.bf16.msra.mxu0 0
  %981 = vmatprep.subr.bf16.mxu0 0
  %982 = vmatpush1.bf16.msra.mxu0 0
  %983 = vmatprep.subr.bf16.mxu0 0
  %984 = vmatpush1.bf16.msra.mxu0 0
  %985 = vmatprep.subr.bf16.mxu0 0
  %986 = vmatpush1.bf16.msra.mxu0 0
  %987 = vmatprep.subr.bf16.mxu0 0
  %988 = vmatpush1.bf16.msra.mxu0 0
  %989 = vmatprep.subr.bf16.mxu0 0
  %990 = vmatpush1.bf16.msra.mxu0 0
  %991 = vmatprep.subr.bf16.mxu0 0
  %992 = vmatpush1.bf16.msra.mxu0 0
  %993 = vmatprep.subr.bf16.mxu0 0
  %994 = vmatpush1.bf16.msra.mxu0 0
  %995 = vmatprep.subr.bf16.mxu0 0
  %996 = vmatpush1.bf16.msra.mxu0 0
  %997 = vmatprep.subr.bf16.mxu0 0
  %998 = vmatpush1.bf16.msra.mxu0 0
  %999 = vmatprep.mubr.bf16.mxu0 0
  %1000 = vmatmul.mubr.bf16.gmra.mrb[0].mxu0 %v965
  %v1001 = vpop.f32.mrb[0].mxu0
  %v1002 = vadd.f32 0.0, %v1001
  %v1003 = vpop.f32.mrb[0].mxu0
  %v1004 = vpop.f32.mrb[0].mxu0
  %v1005 = vpop.f32.mrb[0].mxu0
  %1006 = vdwg.mxu0
  %1007 = vmatprep.subr.bf16.mxu0 0
  %1008 = vmatpush1.bf16.msra.mxu0 %v104
  %1009 = vmatprep.subr.bf16.mxu0 0
  %1010 = vmatpush1.bf16.msra.mxu0 %v105
  %1011 = vmatprep.subr.bf16.mxu0 0
  %1012 = vmatpush1.bf16.msra.mxu0 0
  %1013 = vmatprep.subr.bf16.mxu0 0
  %1014 = vmatpush1.bf16.msra.mxu0 0
  %1015 = vmatprep.subr.bf16.mxu0 0
  %1016 = vmatpush1.bf16.msra.mxu0 0
  %1017 = vmatprep.subr.bf16.mxu0 0
  %1018 = vmatpush1.bf16.msra.mxu0 0
  %1019 = vmatprep.subr.bf16.mxu0 0
  %1020 = vmatpush1.bf16.msra.mxu0 0
  %1021 = vmatprep.subr.bf16.mxu0 0
  %1022 = vmatpush1.bf16.msra.mxu0 0
  %1023 = vmatprep.subr.bf16.mxu0 0
  %1024 = vmatpush1.bf16.msra.mxu0 0
  %1025 = vmatprep.subr.bf16.mxu0 0
  %1026 = vmatpush1.bf16.msra.mxu0 0
  %1027 = vmatprep.subr.bf16.mxu0 0
  %1028 = vmatpush1.bf16.msra.mxu0 0
  %1029 = vmatprep.subr.bf16.mxu0 0
  %1030 = vmatpush1.bf16.msra.mxu0 0
  %1031 = vmatprep.subr.bf16.mxu0 0
  %1032 = vmatpush1.bf16.msra.mxu0 0
  %1033 = vmatprep.subr.bf16.mxu0 0
  %1034 = vmatpush1.bf16.msra.mxu0 0
  %1035 = vmatprep.subr.bf16.mxu0 0
  %1036 = vmatpush1.bf16.msra.mxu0 0
  %1037 = vmatprep.subr.bf16.mxu0 0
  %1038 = vmatpush1.bf16.msra.mxu0 0
  %1039 = vmatprep.mubr.bf16.mxu0 0
  %1040 = vmatmul.mubr.bf16.gmra.mrb[0].mxu0 %v965
  %v1041 = vpop.f32.mrb[0].mxu0
  %v1042 = vadd.f32 0.0, %v1041
  %v1043 = vpop.f32.mrb[0].mxu0
  %v1044 = vpop.f32.mrb[0].mxu0
  %v1045 = vpop.f32.mrb[0].mxu0
  %1046 = vdwg.mxu0
  %1047 = vmatprep.subr.bf16.mxu0 0
  %1048 = vmatpush1.bf16.msra.mxu0 %v162
  %1049 = vmatprep.subr.bf16.mxu0 0
  %1050 = vmatpush1.bf16.msra.mxu0 %v163
  %1051 = vmatprep.subr.bf16.mxu0 0
  %1052 = vmatpush1.bf16.msra.mxu0 0
  %1053 = vmatprep.subr.bf16.mxu0 0
  %1054 = vmatpush1.bf16.msra.mxu0 0
  %1055 = vmatprep.subr.bf16.mxu0 0
  %1056 = vmatpush1.bf16.msra.mxu0 0
  %1057 = vmatprep.subr.bf16.mxu0 0
  %1058 = vmatpush1.bf16.msra.mxu0 0
  %1059 = vmatprep.subr.bf16.mxu0 0
  %1060 = vmatpush1.bf16.msra.mxu0 0
  %1061 = vmatprep.subr.bf16.mxu0 0
  %1062 = vmatpush1.bf16.msra.mxu0 0
  %1063 = vmatprep.subr.bf16.mxu0 0
  %1064 = vmatpush1.bf16.msra.mxu0 0
  %1065 = vmatprep.subr.bf16.mxu0 0
  %1066 = vmatpush1.bf16.msra.mxu0 0
  %1067 = vmatprep.subr.bf16.mxu0 0
  %1068 = vmatpush1.bf16.msra.mxu0 0
  %1069 = vmatprep.subr.bf16.mxu0 0
  %1070 = vmatpush1.bf16.msra.mxu0 0
  %1071 = vmatprep.subr.bf16.mxu0 0
  %1072 = vmatpush1.bf16.msra.mxu0 0
  %1073 = vmatprep.subr.bf16.mxu0 0
  %1074 = vmatpush1.bf16.msra.mxu0 0
  %1075 = vmatprep.subr.bf16.mxu0 0
  %1076 = vmatpush1.bf16.msra.mxu0 0
  %1077 = vmatprep.subr.bf16.mxu0 0
  %1078 = vmatpush1.bf16.msra.mxu0 0
  %1079 = vmatprep.mubr.bf16.mxu0 0
  %1080 = vmatmul.mubr.bf16.gmra.mrb[0].mxu0 %v965
  %v1081 = vpop.f32.mrb[0].mxu0
  %v1082 = vadd.f32 %v152, %v1081
  %v1083 = vpop.f32.mrb[0].mxu0
  %v1084 = vpop.f32.mrb[0].mxu0
  %v1085 = vpop.f32.mrb[0].mxu0
  %1086 = vdwg.mxu0
  %s1087 = scalar_lea.vmem %s0, 144
  %v1088 = vld [vmem:[%s1087] sm:$0xff]
  %v1089 = vld [vmem:[%s1087 + $0x8] sm:$0xff]
  %v1090 = vld [vmem:[%s1087 + $0x10] sm:$0xff]
  %v1091 = vadd.f32 %v1088, %v1002
  %v1092 = vmul.f32 %v1091, 0.5
  %v1093 = vtanh.pop %v1092
  %v1094 = vmul.f32 %v1093, 0.5
  %v1095 = vadd.f32 %v1094, 0.5
  %v1096 = vadd.f32 %v1089, %v1042
  %v1097 = vmul.f32 %v1096, 0.5
  %v1098 = vtanh.pop %v1097
  %v1099 = vmul.f32 %v1098, 0.5
  %v1100 = vadd.f32 %v1099, 0.5
  %v1101 = vmul.f32 %v1095, %v1082
  %v1102 = vadd.f32 %v1090, %v1101
  %v1103 = vtanh.pop %v1102
  %v1104 = vsub.f32 1.0, %v1100
  %v1105 = vmul.f32 %v1104, %v1103
  %v1106 = vmul.f32 %v1100, %v960
  %v1107 = vadd.f32 %v1105, %v1106
  %v1108 = vpack.c.bf16 %v1107, %v1107
  %s1109 = scalar_lea.vmem %s3, 24
  %1110 = vst.msk [vmem:[%s1109] sm:$0xf] %vm227, %v1108
  %v1112 = vsel %vm52, %v1108, 0
  %1114 = vmatprep.subr.bf16.mxu0 0
  %1115 = vmatpush1.bf16.msra.mxu0 %v48
  %1116 = vmatprep.subr.bf16.mxu0 0
  %1117 = vmatpush1.bf16.msra.mxu0 %v49
  %1118 = vmatprep.subr.bf16.mxu0 0
  %1119 = vmatpush1.bf16.msra.mxu0 0
  %1120 = vmatprep.subr.bf16.mxu0 0
  %1121 = vmatpush1.bf16.msra.mxu0 0
  %1122 = vmatprep.subr.bf16.mxu0 0
  %1123 = vmatpush1.bf16.msra.mxu0 0
  %1124 = vmatprep.subr.bf16.mxu0 0
  %1125 = vmatpush1.bf16.msra.mxu0 0
  %1126 = vmatprep.subr.bf16.mxu0 0
  %1127 = vmatpush1.bf16.msra.mxu0 0
  %1128 = vmatprep.subr.bf16.mxu0 0
  %1129 = vmatpush1.bf16.msra.mxu0 0
  %1130 = vmatprep.subr.bf16.mxu0 0
  %1131 = vmatpush1.bf16.msra.mxu0 0
  %1132 = vmatprep.subr.bf16.mxu0 0
  %1133 = vmatpush1.bf16.msra.mxu0 0
  %1134 = vmatprep.subr.bf16.mxu0 0
  %1135 = vmatpush1.bf16.msra.mxu0 0
  %1136 = vmatprep.subr.bf16.mxu0 0
  %1137 = vmatpush1.bf16.msra.mxu0 0
  %1138 = vmatprep.subr.bf16.mxu0 0
  %1139 = vmatpush1.bf16.msra.mxu0 0
  %1140 = vmatprep.subr.bf16.mxu0 0
  %1141 = vmatpush1.bf16.msra.mxu0 0
  %1142 = vmatprep.subr.bf16.mxu0 0
  %1143 = vmatpush1.bf16.msra.mxu0 0
  %1144 = vmatprep.subr.bf16.mxu0 0
  %1145 = vmatpush1.bf16.msra.mxu0 0
  %1146 = vmatprep.mubr.bf16.mxu0 0
  %1147 = vmatmul.mubr.bf16.gmra.mrb[0].mxu0 %v1112
  %v1148 = vpop.f32.mrb[0].mxu0
  %v1149 = vadd.f32 0.0, %v1148
  %v1150 = vpop.f32.mrb[0].mxu0
  %v1151 = vpop.f32.mrb[0].mxu0
  %v1152 = vpop.f32.mrb[0].mxu0
  %1153 = vdwg.mxu0
  %1154 = vmatprep.subr.bf16.mxu0 0
  %1155 = vmatpush1.bf16.msra.mxu0 %v104
  %1156 = vmatprep.subr.bf16.mxu0 0
  %1157 = vmatpush1.bf16.msra.mxu0 %v105
  %1158 = vmatprep.subr.bf16.mxu0 0
  %1159 = vmatpush1.bf16.msra.mxu0 0
  %1160 = vmatprep.subr.bf16.mxu0 0
  %1161 = vmatpush1.bf16.msra.mxu0 0
  %1162 = vmatprep.subr.bf16.mxu0 0
  %1163 = vmatpush1.bf16.msra.mxu0 0
  %1164 = vmatprep.subr.bf16.mxu0 0
  %1165 = vmatpush1.bf16.msra.mxu0 0
  %1166 = vmatprep.subr.bf16.mxu0 0
  %1167 = vmatpush1.bf16.msra.mxu0 0
  %1168 = vmatprep.subr.bf16.mxu0 0
  %1169 = vmatpush1.bf16.msra.mxu0 0
  %1170 = vmatprep.subr.bf16.mxu0 0
  %1171 = vmatpush1.bf16.msra.mxu0 0
  %1172 = vmatprep.subr.bf16.mxu0 0
  %1173 = vmatpush1.bf16.msra.mxu0 0
  %1174 = vmatprep.subr.bf16.mxu0 0
  %1175 = vmatpush1.bf16.msra.mxu0 0
  %1176 = vmatprep.subr.bf16.mxu0 0
  %1177 = vmatpush1.bf16.msra.mxu0 0
  %1178 = vmatprep.subr.bf16.mxu0 0
  %1179 = vmatpush1.bf16.msra.mxu0 0
  %1180 = vmatprep.subr.bf16.mxu0 0
  %1181 = vmatpush1.bf16.msra.mxu0 0
  %1182 = vmatprep.subr.bf16.mxu0 0
  %1183 = vmatpush1.bf16.msra.mxu0 0
  %1184 = vmatprep.subr.bf16.mxu0 0
  %1185 = vmatpush1.bf16.msra.mxu0 0
  %1186 = vmatprep.mubr.bf16.mxu0 0
  %1187 = vmatmul.mubr.bf16.gmra.mrb[0].mxu0 %v1112
  %v1188 = vpop.f32.mrb[0].mxu0
  %v1189 = vadd.f32 0.0, %v1188
  %v1190 = vpop.f32.mrb[0].mxu0
  %v1191 = vpop.f32.mrb[0].mxu0
  %v1192 = vpop.f32.mrb[0].mxu0
  %1193 = vdwg.mxu0
  %1194 = vmatprep.subr.bf16.mxu0 0
  %1195 = vmatpush1.bf16.msra.mxu0 %v162
  %1196 = vmatprep.subr.bf16.mxu0 0
  %1197 = vmatpush1.bf16.msra.mxu0 %v163
  %1198 = vmatprep.subr.bf16.mxu0 0
  %1199 = vmatpush1.bf16.msra.mxu0 0
  %1200 = vmatprep.subr.bf16.mxu0 0
  %1201 = vmatpush1.bf16.msra.mxu0 0
  %1202 = vmatprep.subr.bf16.mxu0 0
  %1203 = vmatpush1.bf16.msra.mxu0 0
  %1204 = vmatprep.subr.bf16.mxu0 0
  %1205 = vmatpush1.bf16.msra.mxu0 0
  %1206 = vmatprep.subr.bf16.mxu0 0
  %1207 = vmatpush1.bf16.msra.mxu0 0
  %1208 = vmatprep.subr.bf16.mxu0 0
  %1209 = vmatpush1.bf16.msra.mxu0 0
  %1210 = vmatprep.subr.bf16.mxu0 0
  %1211 = vmatpush1.bf16.msra.mxu0 0
  %1212 = vmatprep.subr.bf16.mxu0 0
  %1213 = vmatpush1.bf16.msra.mxu0 0
  %1214 = vmatprep.subr.bf16.mxu0 0
  %1215 = vmatpush1.bf16.msra.mxu0 0
  %1216 = vmatprep.subr.bf16.mxu0 0
  %1217 = vmatpush1.bf16.msra.mxu0 0
  %1218 = vmatprep.subr.bf16.mxu0 0
  %1219 = vmatpush1.bf16.msra.mxu0 0
  %1220 = vmatprep.subr.bf16.mxu0 0
  %1221 = vmatpush1.bf16.msra.mxu0 0
  %1222 = vmatprep.subr.bf16.mxu0 0
  %1223 = vmatpush1.bf16.msra.mxu0 0
  %1224 = vmatprep.subr.bf16.mxu0 0
  %1225 = vmatpush1.bf16.msra.mxu0 0
  %1226 = vmatprep.mubr.bf16.mxu0 0
  %1227 = vmatmul.mubr.bf16.gmra.mrb[0].mxu0 %v1112
  %v1228 = vpop.f32.mrb[0].mxu0
  %v1229 = vadd.f32 %v152, %v1228
  %v1230 = vpop.f32.mrb[0].mxu0
  %v1231 = vpop.f32.mrb[0].mxu0
  %v1232 = vpop.f32.mrb[0].mxu0
  %1233 = vdwg.mxu0
  %s1234 = scalar_lea.vmem %s0, 168
  %v1235 = vld [vmem:[%s1234] sm:$0xff]
  %v1236 = vld [vmem:[%s1234 + $0x8] sm:$0xff]
  %v1237 = vld [vmem:[%s1234 + $0x10] sm:$0xff]
  %v1238 = vadd.f32 %v1235, %v1149
  %v1239 = vmul.f32 %v1238, 0.5
  %v1240 = vtanh.pop %v1239
  %v1241 = vmul.f32 %v1240, 0.5
  %v1242 = vadd.f32 %v1241, 0.5
  %v1243 = vadd.f32 %v1236, %v1189
  %v1244 = vmul.f32 %v1243, 0.5
  %v1245 = vtanh.pop %v1244
  %v1246 = vmul.f32 %v1245, 0.5
  %v1247 = vadd.f32 %v1246, 0.5
  %v1248 = vmul.f32 %v1242, %v1229
  %v1249 = vadd.f32 %v1237, %v1248
  %v1250 = vtanh.pop %v1249
  %v1251 = vsub.f32 1.0, %v1247
  %v1252 = vmul.f32 %v1251, %v1250
  %v1253 = vmul.f32 %v1247, %v1107
  %v1254 = vadd.f32 %v1252, %v1253
  %v1255 = vpack.c.bf16 %v1254, %v1254
  %s1256 = scalar_lea.vmem %s3, 28
  %1257 = vst.msk [vmem:[%s1256] sm:$0xf] %vm227, %v1255
  %1258 = vst.msk [vmem:[#allocation2] sm:$0xff] %vm52, %v1254
  %1259 = vst.msk [vmem:[%s4] sm:$0xff] %vm52, %v1254
  // Predicated region
  $region18: #{repeatnet_forward.3} parent=0 // pred_check
    _
  $region19: #{repeatnet_forward.3} parent=0 // pred_check_branch
    %1261 = sbr.rel (0) target = $region21
  $region20: #{repeatnet_forward.3} parent=0 // pred_region
    _
  $region21: #{repeatnet_forward.3} parent=0 // pred_fallthru
    _
  // Predicated region
  $region22: #{repeatnet_forward.3} parent=0 // pred_check
    _
  $region23: #{repeatnet_forward.3} parent=0 // pred_check_branch
    %1263 = sbr.rel (0) target = $region25
  $region24: #{repeatnet_forward.3} parent=0 // pred_region
    _
  $region25: #{repeatnet_forward.3} parent=0 // pred_fallthru
    _
  // Predicated region
  $region26: #{repeatnet_forward.3} parent=0 // pred_check
    _
  $region27: #{repeatnet_forward.3} parent=0 // pred_check_branch
    %1265 = sbr.rel (0) target = $region29
  $region28: #{repeatnet_forward.3} parent=0 // pred_region
    _
  $region29: #{repeatnet_forward.3} parent=0 // pred_fallthru
    _
  // Predicated region
  $region30: #{repeatnet_forward.3} parent=0 // pred_check
    _
  $region31: #{repeatnet_forward.3} parent=0 // pred_check_branch
    %1267 = sbr.rel (0) target = $region33
  $region32: #{repeatnet_forward.3} parent=0 // pred_region
    _
  $region33: #{repeatnet_forward.3} parent=0 // pred_fallthru
    _

</llo_original>
